<compile_context>
chip_gen: v6e
topology: v6e:2x2x1
jax: 0.10.0
libtpu: 0.0.40
codegen_flags: <defaults>
</compile_context>

<pallas_src>
import jax
import jax.numpy as jnp
from jax.experimental import pallas as pl
from jax.experimental.pallas import tpu as pltpu  # noqa: F401  (TPU backend)

# ----------------------------- model config ---------------------------------
B = 2          # batch
S = 8          # sequence length
H = 32         # d_model (hidden_size)
N_HEADS = 4
D_HEAD = 8
D_INNER = N_HEADS * D_HEAD   # 32
D_FF = 64
N_LAYERS = 2
VOCAB = 64
DIM = 64       # config.dim (first head-MLP width)
NUM_BUCKETS = 32
MAX_DISTANCE = 128
SIGMOID_SCORE = True
EPS = 1e-6
HEAD_PAD = 128               # lane-dense padding for the (B, 1) score output


# --------------------------- fused forward kernel ---------------------------
def _rmsnorm(x, w):
    var = jnp.mean(x * x, axis=-1, keepdims=True)
    return x * jax.lax.rsqrt(var + EPS) * w


def t5_fused_kernel(x_ref, bias_ref,
                    ln1_ref, wqkv_ref, wo_ref, ln2_ref, wi_ref, wfo_ref,
                    fln_ref, w1_ref, b1_ref, w2_ref, b2_ref, w3_ref, b3_ref,
                    out_ref):
    """Entire T5 encoder stack + sum-pool + scoring MLP in one grid step."""
    x = x_ref[...]                            # (B*S, H) f32
    bias = bias_ref[...]                      # (B*N_HEADS, S, S) f32, loaded once

    for layer in range(N_LAYERS):             # static, unrolled (N_LAYERS == 2)
        # ------------------- self-attention sub-block -----------------------
        h = _rmsnorm(x, ln1_ref[layer])       # (B*S, H) f32
        qkv = jnp.dot(h.astype(jnp.bfloat16), wqkv_ref[layer],
                      preferred_element_type=jnp.float32)   # (B*S, 3*D_INNER)
        q = qkv[:, :D_INNER]
        k = qkv[:, D_INNER:2 * D_INNER]
        v = qkv[:, 2 * D_INNER:]

        def stack_heads(t):                   # -> (B*N_HEADS, S, D_HEAD)
            return jnp.stack(
                [t[b * S:(b + 1) * S, hd * D_HEAD:(hd + 1) * D_HEAD]
                 for b in range(B) for hd in range(N_HEADS)], axis=0)

        qs = stack_heads(q).astype(jnp.bfloat16)
        ks = stack_heads(k).astype(jnp.bfloat16)
        vs = stack_heads(v).astype(jnp.bfloat16)

        # T5: no 1/sqrt(d) scaling; bias carries rel-pos bias + padding mask.
        sc = jnp.einsum('bqd,bkd->bqk', qs, ks,
                        preferred_element_type=jnp.float32) + bias
        sc = sc - jnp.max(sc, axis=-1, keepdims=True)
        p = jnp.exp(sc)
        p = p * pl.reciprocal(jnp.sum(p, axis=-1, keepdims=True), approx=True)
        ctx = jnp.einsum('bqk,bkd->bqd', p.astype(jnp.bfloat16), vs,
                         preferred_element_type=jnp.float32)  # (B*NH, S, D_HEAD)

        # Re-assemble (B*S, D_INNER): heads along lanes, batches along sublanes.
        ctx2 = jnp.concatenate(
            [jnp.concatenate([ctx[b * N_HEADS + hd] for hd in range(N_HEADS)],
                             axis=-1)
             for b in range(B)], axis=0)
        attn = jnp.dot(ctx2.astype(jnp.bfloat16), wo_ref[layer],
                       preferred_element_type=jnp.float32)    # one full-wo dot
        x = x + attn

        # ------------------- gated-GELU FFN sub-block -----------------------
        h2 = _rmsnorm(x, ln2_ref[layer])
        gw = jnp.dot(h2.astype(jnp.bfloat16), wi_ref[layer],
                     preferred_element_type=jnp.float32)      # (B*S, 128) lane-dense
        g = jax.nn.gelu(gw[:, :D_FF], approximate=True)
        u = gw[:, D_FF:]
        ff = jnp.dot((g * u).astype(jnp.bfloat16), wfo_ref[layer],
                     preferred_element_type=jnp.float32)
        x = x + ff

    # -------------- final RMSNorm + sum over seq + scoring MLP --------------
    hfin = _rmsnorm(x, fln_ref[...])                          # (B*S, H)
    pooled = jnp.concatenate(
        [jnp.sum(hfin[b * S:(b + 1) * S], axis=0, keepdims=True)
         for b in range(B)], axis=0)                          # (B, H)

    z = jnp.dot(pooled, w1_ref[...], preferred_element_type=jnp.float32) + b1_ref[...]
    z = jnp.maximum(z, 0.0)
    z = jnp.dot(z, w2_ref[...], preferred_element_type=jnp.float32) + b2_ref[...]
    z = jnp.maximum(z, 0.0)
    z = jnp.dot(z, w3_ref[...], preferred_element_type=jnp.float32) + b3_ref[...]
    if SIGMOID_SCORE:
        z = jax.nn.sigmoid(z)
    out_ref[...] = z                          # (B, HEAD_PAD); column 0 = score


def t5_pallas_forward(x_flat, bias_bh, stacked, head):
    out = pl.pallas_call(
        t5_fused_kernel,
        out_shape=jax.ShapeDtypeStruct((B, HEAD_PAD), jnp.float32),
    )(x_flat, bias_bh,
      stacked["ln1"], stacked["wqkv"], stacked["wo"],
      stacked["ln2"], stacked["wi"], stacked["wfo"],
      head["final_ln"], head["w1"], head["b1"], head["w2"], head["b2"],
      head["w3p"], head["b3p"])
    return out[:, :1]                         # (B, 1) score


# ----------------------------- JAX glue --------------------------------------
def relative_position_bucket(relative_position, num_buckets=NUM_BUCKETS,
                             max_distance=MAX_DISTANCE):
    """T5 bidirectional relative-position bucketing."""
    relative_buckets = 0
    num_buckets //= 2
    relative_buckets += (relative_position > 0).astype(jnp.int32) * num_buckets
    relative_position = jnp.abs(relative_position)
    max_exact = num_buckets // 2
    is_small = relative_position < max_exact
    rel_if_large = max_exact + (
        jnp.log(jnp.maximum(relative_position, 1).astype(jnp.float32) / max_exact)
        / jnp.log(max_distance / max_exact) * (num_buckets - max_exact)
    ).astype(jnp.int32)
    rel_if_large = jnp.minimum(rel_if_large, num_buckets - 1)
    relative_buckets += jnp.where(is_small, relative_position, rel_if_large)
    return relative_buckets


def build_attention_bias(attention_mask, rel_emb):
    """(B,S) mask + (NUM_BUCKETS, n_heads) table -> (B*n_heads, S, S) bias."""
    pos = jnp.arange(S)
    rel = pos[None, :] - pos[:, None]                        # memory - query
    buckets = relative_position_bucket(rel)                  # (S, S)
    pos_bias = jnp.transpose(rel_emb[buckets], (2, 0, 1))    # (n_heads, S, S)
    mask_bias = jnp.where(attention_mask[:, None, None, :] > 0, 0.0, -1e9)
    bias = pos_bias[None].astype(jnp.float32) + mask_bias.astype(jnp.float32)
    return bias.reshape(B * N_HEADS, S, S)


def init_params(key):
    keys = iter(jax.random.split(key, 64))
    nrm = lambda shape, s=0.05: (jax.random.normal(next(keys), shape, jnp.float32) * s)
    params = {
        "embedding": nrm((VOCAB, H), 1.0),
        "rel_emb": nrm((NUM_BUCKETS, N_HEADS), 0.1),
        "layers": [],
        "head": {
            "final_ln": jnp.ones((1, H), jnp.float32),
            "w1": nrm((H, DIM)), "b1": jnp.zeros((1, DIM), jnp.float32),
            "w2": nrm((DIM, 32)), "b2": jnp.zeros((1, 32), jnp.float32),
            "w3": nrm((32, 1)), "b3": jnp.zeros((1, 1), jnp.float32),
        },
    }
    for _ in range(N_LAYERS):
        params["layers"].append({
            "ln1": jnp.ones((1, H), jnp.float32),
            "wq": nrm((H, D_INNER)), "wk": nrm((H, D_INNER)),
            "wv": nrm((H, D_INNER)), "wo": nrm((D_INNER, H)),
            "ln2": jnp.ones((1, H), jnp.float32),
            "wi0": nrm((H, D_FF)), "wi1": nrm((H, D_FF)), "wfo": nrm((D_FF, H)),
        })
    return params


def fuse_params(params):
    """One-time weight prep: stack layers, fuse QKV / wi0|wi1, bf16 MXU weights,
    lane-pad the scalar head output weights."""
    L = params["layers"]
    stacked = {
        "ln1": jnp.stack([l["ln1"] for l in L]),                         # (L,1,H)
        "wqkv": jnp.stack([jnp.concatenate([l["wq"], l["wk"], l["wv"]], axis=1)
                           for l in L]).astype(jnp.bfloat16),            # (L,H,96)
        "wo": jnp.stack([l["wo"] for l in L]).astype(jnp.bfloat16),      # (L,32,H)
        "ln2": jnp.stack([l["ln2"] for l in L]),                         # (L,1,H)
        "wi": jnp.stack([jnp.concatenate([l["wi0"], l["wi1"]], axis=1)
                         for l in L]).astype(jnp.bfloat16),              # (L,H,128)
        "wfo": jnp.stack([l["wfo"] for l in L]).astype(jnp.bfloat16),    # (L,64,H)
    }
    hw = params["head"]
    head = {
        "final_ln": hw["final_ln"],
        "w1": hw["w1"], "b1": hw["b1"],
        "w2": hw["w2"], "b2": hw["b2"],
        "w3p": jnp.pad(hw["w3"], ((0, 0), (0, HEAD_PAD - 1))),           # (32,128)
        "b3p": jnp.pad(hw["b3"], ((0, 0), (0, HEAD_PAD - 1))),           # (1,128)
    }
    return {"embedding": params["embedding"], "rel_emb": params["rel_emb"],
            "stacked": stacked, "head": head}


@jax.jit
def t5_model_forward(fused, input_ids, attention_mask, labels):
    # only_encoder=True path; `labels` is accepted (as in the torch module) but unused.
    del labels
    x = fused["embedding"][input_ids].astype(jnp.float32).reshape(B * S, H)
    bias = build_attention_bias(attention_mask, fused["rel_emb"])  # (B*NH, S, S)
    return t5_pallas_forward(x, bias, fused["stacked"], fused["head"])


# ----------------------------------- main ------------------------------------
if __name__ == "__main__":
    key = jax.random.PRNGKey(0)
    pkey, ikey = jax.random.split(key)
    fused = fuse_params(init_params(pkey))

    input_ids = jax.random.randint(ikey, (B, S), 0, VOCAB, dtype=jnp.int32)
    attention_mask = jnp.ones((B, S), jnp.int32).at[1, S - 2:].set(0)
    labels = jnp.zeros((B, 1), jnp.int32)   # unused in only_encoder path

    scores = t5_model_forward(fused, input_ids, attention_mask, labels)
    scores = jax.block_until_ready(scores)

    assert scores.shape == (B, 1), scores.shape
    assert bool(jnp.all(jnp.isfinite(scores)))
    assert bool(jnp.all((scores >= 0.0) & (scores <= 1.0)))  # sigmoid range
    print("KERNEL_OK")
</pallas_src>

<mosaic_0001>
module attributes {stable_mosaic.version = 11 : i64} {
  func.func @t5_fused_kernel(%arg0: memref<16x32xf32, #tpu.memory_space<vmem>>, %arg1: memref<8x8x8xf32, #tpu.memory_space<vmem>>, %arg2: memref<2x1x32xf32, #tpu.memory_space<vmem>>, %arg3: memref<2x32x96xbf16, #tpu.memory_space<vmem>>, %arg4: memref<2x32x32xbf16, #tpu.memory_space<vmem>>, %arg5: memref<2x1x32xf32, #tpu.memory_space<vmem>>, %arg6: memref<2x32x128xbf16, #tpu.memory_space<vmem>>, %arg7: memref<2x64x32xbf16, #tpu.memory_space<vmem>>, %arg8: memref<1x32xf32, #tpu.memory_space<vmem>>, %arg9: memref<32x64xf32, #tpu.memory_space<vmem>>, %arg10: memref<1x64xf32, #tpu.memory_space<vmem>>, %arg11: memref<64x32xf32, #tpu.memory_space<vmem>>, %arg12: memref<1x32xf32, #tpu.memory_space<vmem>>, %arg13: memref<32x128xf32, #tpu.memory_space<vmem>>, %arg14: memref<1x128xf32, #tpu.memory_space<vmem>>, %arg15: memref<2x128xf32, #tpu.memory_space<vmem>>) attributes {dimension_semantics = [], scalar_prefetch = 0 : i64, scratch_operands = 0 : i64, tpu.core_type = #tpu.core_type<tc>} {
    %c0 = arith.constant 0 : index
    %c0_0 = arith.constant 0 : index
    %0 = vector.load %arg0[%c0, %c0_0] : memref<16x32xf32, #tpu.memory_space<vmem>>, vector<16x32xf32>
    %c0_1 = arith.constant 0 : index
    %c0_2 = arith.constant 0 : index
    %c0_3 = arith.constant 0 : index
    %1 = vector.load %arg1[%c0_1, %c0_2, %c0_3] : memref<8x8x8xf32, #tpu.memory_space<vmem>>, vector<8x8x8xf32>
    %c0_4 = arith.constant 0 : index
    %c0_5 = arith.constant 0 : index
    %c0_6 = arith.constant 0 : index
    %2 = vector.load %arg2[%c0_4, %c0_5, %c0_6] : memref<2x1x32xf32, #tpu.memory_space<vmem>>, vector<1x1x32xf32>
    %3 = vector.shape_cast %2 : vector<1x1x32xf32> to vector<1x32xf32>
    %4 = arith.mulf %0, %0 : vector<16x32xf32>
    %cst = arith.constant dense<0.000000e+00> : vector<16xf32>
    %5 = vector.multi_reduction <add>, %4, %cst [1] : vector<16x32xf32> to vector<16xf32>
    %6 = vector.shape_cast %5 : vector<16xf32> to vector<16x1xf32>
    %cst_7 = arith.constant 3.200000e+01 : f32
    %7 = vector.broadcast %cst_7 : f32 to vector<16x1xf32>
    %8 = arith.divf %6, %7 : vector<16x1xf32>
    %cst_8 = arith.constant 9.99999997E-7 : f32
    %9 = vector.broadcast %cst_8 : f32 to vector<16x1xf32>
    %10 = arith.addf %8, %9 : vector<16x1xf32>
    %11 = math.rsqrt %10 : vector<16x1xf32>
    %12 = vector.broadcast %11 : vector<16x1xf32> to vector<16x32xf32>
    %13 = arith.mulf %0, %12 : vector<16x32xf32>
    %14 = vector.broadcast %3 : vector<1x32xf32> to vector<16x32xf32>
    %15 = arith.mulf %13, %14 : vector<16x32xf32>
    %16 = arith.truncf %15 : vector<16x32xf32> to vector<16x32xbf16>
    %c0_9 = arith.constant 0 : index
    %c0_10 = arith.constant 0 : index
    %c0_11 = arith.constant 0 : index
    %17 = vector.load %arg3[%c0_9, %c0_10, %c0_11] : memref<2x32x96xbf16, #tpu.memory_space<vmem>>, vector<1x32x96xbf16>
    %18 = vector.shape_cast %17 : vector<1x32x96xbf16> to vector<32x96xbf16>
    %cst_12 = arith.constant dense<0.000000e+00> : vector<16x96xf32>
    %19 = tpu.matmul %16, %18, %cst_12 {dimension_numbers = #tpu.dot_dimension_numbers<[1], [0], [0], [1], [0, 0, 1, 1], [], []>} : vector<16x32xbf16>, vector<32x96xbf16>, vector<16x96xf32> -> vector<16x96xf32>
    %20 = vector.extract_strided_slice %19 {offsets = [0, 0], sizes = [16, 32], strides = [1, 1]} : vector<16x96xf32> to vector<16x32xf32>
    %21 = vector.extract_strided_slice %19 {offsets = [0, 32], sizes = [16, 32], strides = [1, 1]} : vector<16x96xf32> to vector<16x32xf32>
    %22 = vector.extract_strided_slice %19 {offsets = [0, 64], sizes = [16, 32], strides = [1, 1]} : vector<16x96xf32> to vector<16x32xf32>
    %23 = vector.extract_strided_slice %20 {offsets = [0, 0], sizes = [8, 8], strides = [1, 1]} : vector<16x32xf32> to vector<8x8xf32>
    %24 = vector.extract_strided_slice %20 {offsets = [0, 8], sizes = [8, 8], strides = [1, 1]} : vector<16x32xf32> to vector<8x8xf32>
    %25 = vector.extract_strided_slice %20 {offsets = [0, 16], sizes = [8, 8], strides = [1, 1]} : vector<16x32xf32> to vector<8x8xf32>
    %26 = vector.extract_strided_slice %20 {offsets = [0, 24], sizes = [8, 8], strides = [1, 1]} : vector<16x32xf32> to vector<8x8xf32>
    %27 = vector.extract_strided_slice %20 {offsets = [8, 0], sizes = [8, 8], strides = [1, 1]} : vector<16x32xf32> to vector<8x8xf32>
    %28 = vector.extract_strided_slice %20 {offsets = [8, 8], sizes = [8, 8], strides = [1, 1]} : vector<16x32xf32> to vector<8x8xf32>
    %29 = vector.extract_strided_slice %20 {offsets = [8, 16], sizes = [8, 8], strides = [1, 1]} : vector<16x32xf32> to vector<8x8xf32>
    %30 = vector.extract_strided_slice %20 {offsets = [8, 24], sizes = [8, 8], strides = [1, 1]} : vector<16x32xf32> to vector<8x8xf32>
    %31 = vector.shape_cast %23 : vector<8x8xf32> to vector<1x8x8xf32>
    %32 = vector.shape_cast %24 : vector<8x8xf32> to vector<1x8x8xf32>
    %33 = vector.shape_cast %25 : vector<8x8xf32> to vector<1x8x8xf32>
    %34 = vector.shape_cast %26 : vector<8x8xf32> to vector<1x8x8xf32>
    %35 = vector.shape_cast %27 : vector<8x8xf32> to vector<1x8x8xf32>
    %36 = vector.shape_cast %28 : vector<8x8xf32> to vector<1x8x8xf32>
    %37 = vector.shape_cast %29 : vector<8x8xf32> to vector<1x8x8xf32>
    %38 = vector.shape_cast %30 : vector<8x8xf32> to vector<1x8x8xf32>
    %39 = tpu.concatenate %31, %32, %33, %34, %35, %36, %37, %38 in 0 : vector<1x8x8xf32>, vector<1x8x8xf32>, vector<1x8x8xf32>, vector<1x8x8xf32>, vector<1x8x8xf32>, vector<1x8x8xf32>, vector<1x8x8xf32>, vector<1x8x8xf32> -> vector<8x8x8xf32>
    %40 = arith.truncf %39 : vector<8x8x8xf32> to vector<8x8x8xbf16>
    %41 = vector.extract_strided_slice %21 {offsets = [0, 0], sizes = [8, 8], strides = [1, 1]} : vector<16x32xf32> to vector<8x8xf32>
    %42 = vector.extract_strided_slice %21 {offsets = [0, 8], sizes = [8, 8], strides = [1, 1]} : vector<16x32xf32> to vector<8x8xf32>
    %43 = vector.extract_strided_slice %21 {offsets = [0, 16], sizes = [8, 8], strides = [1, 1]} : vector<16x32xf32> to vector<8x8xf32>
    %44 = vector.extract_strided_slice %21 {offsets = [0, 24], sizes = [8, 8], strides = [1, 1]} : vector<16x32xf32> to vector<8x8xf32>
    %45 = vector.extract_strided_slice %21 {offsets = [8, 0], sizes = [8, 8], strides = [1, 1]} : vector<16x32xf32> to vector<8x8xf32>
    %46 = vector.extract_strided_slice %21 {offsets = [8, 8], sizes = [8, 8], strides = [1, 1]} : vector<16x32xf32> to vector<8x8xf32>
    %47 = vector.extract_strided_slice %21 {offsets = [8, 16], sizes = [8, 8], strides = [1, 1]} : vector<16x32xf32> to vector<8x8xf32>
    %48 = vector.extract_strided_slice %21 {offsets = [8, 24], sizes = [8, 8], strides = [1, 1]} : vector<16x32xf32> to vector<8x8xf32>
    %49 = vector.shape_cast %41 : vector<8x8xf32> to vector<1x8x8xf32>
    %50 = vector.shape_cast %42 : vector<8x8xf32> to vector<1x8x8xf32>
    %51 = vector.shape_cast %43 : vector<8x8xf32> to vector<1x8x8xf32>
    %52 = vector.shape_cast %44 : vector<8x8xf32> to vector<1x8x8xf32>
    %53 = vector.shape_cast %45 : vector<8x8xf32> to vector<1x8x8xf32>
    %54 = vector.shape_cast %46 : vector<8x8xf32> to vector<1x8x8xf32>
    %55 = vector.shape_cast %47 : vector<8x8xf32> to vector<1x8x8xf32>
    %56 = vector.shape_cast %48 : vector<8x8xf32> to vector<1x8x8xf32>
    %57 = tpu.concatenate %49, %50, %51, %52, %53, %54, %55, %56 in 0 : vector<1x8x8xf32>, vector<1x8x8xf32>, vector<1x8x8xf32>, vector<1x8x8xf32>, vector<1x8x8xf32>, vector<1x8x8xf32>, vector<1x8x8xf32>, vector<1x8x8xf32> -> vector<8x8x8xf32>
    %58 = arith.truncf %57 : vector<8x8x8xf32> to vector<8x8x8xbf16>
    %59 = vector.extract_strided_slice %22 {offsets = [0, 0], sizes = [8, 8], strides = [1, 1]} : vector<16x32xf32> to vector<8x8xf32>
    %60 = vector.extract_strided_slice %22 {offsets = [0, 8], sizes = [8, 8], strides = [1, 1]} : vector<16x32xf32> to vector<8x8xf32>
    %61 = vector.extract_strided_slice %22 {offsets = [0, 16], sizes = [8, 8], strides = [1, 1]} : vector<16x32xf32> to vector<8x8xf32>
    %62 = vector.extract_strided_slice %22 {offsets = [0, 24], sizes = [8, 8], strides = [1, 1]} : vector<16x32xf32> to vector<8x8xf32>
    %63 = vector.extract_strided_slice %22 {offsets = [8, 0], sizes = [8, 8], strides = [1, 1]} : vector<16x32xf32> to vector<8x8xf32>
    %64 = vector.extract_strided_slice %22 {offsets = [8, 8], sizes = [8, 8], strides = [1, 1]} : vector<16x32xf32> to vector<8x8xf32>
    %65 = vector.extract_strided_slice %22 {offsets = [8, 16], sizes = [8, 8], strides = [1, 1]} : vector<16x32xf32> to vector<8x8xf32>
    %66 = vector.extract_strided_slice %22 {offsets = [8, 24], sizes = [8, 8], strides = [1, 1]} : vector<16x32xf32> to vector<8x8xf32>
    %67 = vector.shape_cast %59 : vector<8x8xf32> to vector<1x8x8xf32>
    %68 = vector.shape_cast %60 : vector<8x8xf32> to vector<1x8x8xf32>
    %69 = vector.shape_cast %61 : vector<8x8xf32> to vector<1x8x8xf32>
    %70 = vector.shape_cast %62 : vector<8x8xf32> to vector<1x8x8xf32>
    %71 = vector.shape_cast %63 : vector<8x8xf32> to vector<1x8x8xf32>
    %72 = vector.shape_cast %64 : vector<8x8xf32> to vector<1x8x8xf32>
    %73 = vector.shape_cast %65 : vector<8x8xf32> to vector<1x8x8xf32>
    %74 = vector.shape_cast %66 : vector<8x8xf32> to vector<1x8x8xf32>
    %75 = tpu.concatenate %67, %68, %69, %70, %71, %72, %73, %74 in 0 : vector<1x8x8xf32>, vector<1x8x8xf32>, vector<1x8x8xf32>, vector<1x8x8xf32>, vector<1x8x8xf32>, vector<1x8x8xf32>, vector<1x8x8xf32>, vector<1x8x8xf32> -> vector<8x8x8xf32>
    %76 = arith.truncf %75 : vector<8x8x8xf32> to vector<8x8x8xbf16>
    "tpu.trace_start"() <{level = 10 : i32, message = "bqd,bkd->bqk"}> : () -> ()
    %cst_13 = arith.constant dense<0.000000e+00> : vector<8x8x8xf32>
    %77 = tpu.matmul %40, %58, %cst_13 {dimension_numbers = #tpu.dot_dimension_numbers<[2], [2], [1], [1], [0, 0, 0, 1, 1, 1], [0], [0]>} : vector<8x8x8xbf16>, vector<8x8x8xbf16>, vector<8x8x8xf32> -> vector<8x8x8xf32>
    "tpu.trace_stop"() : () -> ()
    %78 = arith.addf %77, %1 : vector<8x8x8xf32>
    %cst_14 = arith.constant dense<0xFF800000> : vector<8x8xf32>
    %79 = vector.multi_reduction <maximumf>, %78, %cst_14 [2] : vector<8x8x8xf32> to vector<8x8xf32>
    %80 = vector.shape_cast %79 : vector<8x8xf32> to vector<8x8x1xf32>
    %81 = vector.broadcast %80 : vector<8x8x1xf32> to vector<8x8x8xf32>
    %82 = arith.subf %78, %81 : vector<8x8x8xf32>
    %83 = math.exp %82 : vector<8x8x8xf32>
    %cst_15 = arith.constant dense<0.000000e+00> : vector<8x8xf32>
    %84 = vector.multi_reduction <add>, %83, %cst_15 [2] : vector<8x8x8xf32> to vector<8x8xf32>
    %85 = vector.shape_cast %84 : vector<8x8xf32> to vector<8x8x1xf32>
    %86 = tpu.reciprocal %85 {approx = true} : vector<8x8x1xf32> -> vector<8x8x1xf32>
    %87 = vector.broadcast %86 : vector<8x8x1xf32> to vector<8x8x8xf32>
    %88 = arith.mulf %83, %87 : vector<8x8x8xf32>
    %89 = arith.truncf %88 : vector<8x8x8xf32> to vector<8x8x8xbf16>
    "tpu.trace_start"() <{level = 10 : i32, message = "bqk,bkd->bqd"}> : () -> ()
    %cst_16 = arith.constant dense<0.000000e+00> : vector<8x8x8xf32>
    %90 = tpu.matmul %89, %76, %cst_16 {dimension_numbers = #tpu.dot_dimension_numbers<[2], [1], [1], [2], [0, 0, 0, 1, 1, 2], [0], [0]>} : vector<8x8x8xbf16>, vector<8x8x8xbf16>, vector<8x8x8xf32> -> vector<8x8x8xf32>
    "tpu.trace_stop"() : () -> ()
    %91 = vector.extract_strided_slice %90 {offsets = [0, 0, 0], sizes = [1, 8, 8], strides = [1, 1, 1]} : vector<8x8x8xf32> to vector<1x8x8xf32>
    %92 = vector.shape_cast %91 : vector<1x8x8xf32> to vector<8x8xf32>
    %93 = vector.extract_strided_slice %90 {offsets = [1, 0, 0], sizes = [1, 8, 8], strides = [1, 1, 1]} : vector<8x8x8xf32> to vector<1x8x8xf32>
    %94 = vector.shape_cast %93 : vector<1x8x8xf32> to vector<8x8xf32>
    %95 = vector.extract_strided_slice %90 {offsets = [2, 0, 0], sizes = [1, 8, 8], strides = [1, 1, 1]} : vector<8x8x8xf32> to vector<1x8x8xf32>
    %96 = vector.shape_cast %95 : vector<1x8x8xf32> to vector<8x8xf32>
    %97 = vector.extract_strided_slice %90 {offsets = [3, 0, 0], sizes = [1, 8, 8], strides = [1, 1, 1]} : vector<8x8x8xf32> to vector<1x8x8xf32>
    %98 = vector.shape_cast %97 : vector<1x8x8xf32> to vector<8x8xf32>
    %99 = tpu.concatenate %92, %94, %96, %98 in 1 : vector<8x8xf32>, vector<8x8xf32>, vector<8x8xf32>, vector<8x8xf32> -> vector<8x32xf32>
    %100 = vector.extract_strided_slice %90 {offsets = [4, 0, 0], sizes = [1, 8, 8], strides = [1, 1, 1]} : vector<8x8x8xf32> to vector<1x8x8xf32>
    %101 = vector.shape_cast %100 : vector<1x8x8xf32> to vector<8x8xf32>
    %102 = vector.extract_strided_slice %90 {offsets = [5, 0, 0], sizes = [1, 8, 8], strides = [1, 1, 1]} : vector<8x8x8xf32> to vector<1x8x8xf32>
    %103 = vector.shape_cast %102 : vector<1x8x8xf32> to vector<8x8xf32>
    %104 = vector.extract_strided_slice %90 {offsets = [6, 0, 0], sizes = [1, 8, 8], strides = [1, 1, 1]} : vector<8x8x8xf32> to vector<1x8x8xf32>
    %105 = vector.shape_cast %104 : vector<1x8x8xf32> to vector<8x8xf32>
    %106 = vector.extract_strided_slice %90 {offsets = [7, 0, 0], sizes = [1, 8, 8], strides = [1, 1, 1]} : vector<8x8x8xf32> to vector<1x8x8xf32>
    %107 = vector.shape_cast %106 : vector<1x8x8xf32> to vector<8x8xf32>
    %108 = tpu.concatenate %101, %103, %105, %107 in 1 : vector<8x8xf32>, vector<8x8xf32>, vector<8x8xf32>, vector<8x8xf32> -> vector<8x32xf32>
    %109 = tpu.concatenate %99, %108 in 0 : vector<8x32xf32>, vector<8x32xf32> -> vector<16x32xf32>
    %110 = arith.truncf %109 : vector<16x32xf32> to vector<16x32xbf16>
    %c0_17 = arith.constant 0 : index
    %c0_18 = arith.constant 0 : index
    %c0_19 = arith.constant 0 : index
    %111 = vector.load %arg4[%c0_17, %c0_18, %c0_19] : memref<2x32x32xbf16, #tpu.memory_space<vmem>>, vector<1x32x32xbf16>
    %112 = vector.shape_cast %111 : vector<1x32x32xbf16> to vector<32x32xbf16>
    %cst_20 = arith.constant dense<0.000000e+00> : vector<16x32xf32>
    %113 = tpu.matmul %110, %112, %cst_20 {dimension_numbers = #tpu.dot_dimension_numbers<[1], [0], [0], [1], [0, 0, 1, 1], [], []>} : vector<16x32xbf16>, vector<32x32xbf16>, vector<16x32xf32> -> vector<16x32xf32>
    %114 = arith.addf %0, %113 : vector<16x32xf32>
    %c0_21 = arith.constant 0 : index
    %c0_22 = arith.constant 0 : index
    %c0_23 = arith.constant 0 : index
    %115 = vector.load %arg5[%c0_21, %c0_22, %c0_23] : memref<2x1x32xf32, #tpu.memory_space<vmem>>, vector<1x1x32xf32>
    %116 = vector.shape_cast %115 : vector<1x1x32xf32> to vector<1x32xf32>
    %117 = arith.mulf %114, %114 : vector<16x32xf32>
    %cst_24 = arith.constant dense<0.000000e+00> : vector<16xf32>
    %118 = vector.multi_reduction <add>, %117, %cst_24 [1] : vector<16x32xf32> to vector<16xf32>
    %119 = vector.shape_cast %118 : vector<16xf32> to vector<16x1xf32>
    %cst_25 = arith.constant 3.200000e+01 : f32
    %120 = vector.broadcast %cst_25 : f32 to vector<16x1xf32>
    %121 = arith.divf %119, %120 : vector<16x1xf32>
    %cst_26 = arith.constant 9.99999997E-7 : f32
    %122 = vector.broadcast %cst_26 : f32 to vector<16x1xf32>
    %123 = arith.addf %121, %122 : vector<16x1xf32>
    %124 = math.rsqrt %123 : vector<16x1xf32>
    %125 = vector.broadcast %124 : vector<16x1xf32> to vector<16x32xf32>
    %126 = arith.mulf %114, %125 : vector<16x32xf32>
    %127 = vector.broadcast %116 : vector<1x32xf32> to vector<16x32xf32>
    %128 = arith.mulf %126, %127 : vector<16x32xf32>
    %129 = arith.truncf %128 : vector<16x32xf32> to vector<16x32xbf16>
    %c0_27 = arith.constant 0 : index
    %c0_28 = arith.constant 0 : index
    %c0_29 = arith.constant 0 : index
    %130 = vector.load %arg6[%c0_27, %c0_28, %c0_29] : memref<2x32x128xbf16, #tpu.memory_space<vmem>>, vector<1x32x128xbf16>
    %131 = vector.shape_cast %130 : vector<1x32x128xbf16> to vector<32x128xbf16>
    %cst_30 = arith.constant dense<0.000000e+00> : vector<16x128xf32>
    %132 = tpu.matmul %129, %131, %cst_30 {dimension_numbers = #tpu.dot_dimension_numbers<[1], [0], [0], [1], [0, 0, 1, 1], [], []>} : vector<16x32xbf16>, vector<32x128xbf16>, vector<16x128xf32> -> vector<16x128xf32>
    %133 = vector.extract_strided_slice %132 {offsets = [0, 0], sizes = [16, 64], strides = [1, 1]} : vector<16x128xf32> to vector<16x64xf32>
    %134 = arith.mulf %133, %133 : vector<16x64xf32>
    %135 = arith.mulf %133, %134 : vector<16x64xf32>
    %cst_31 = arith.constant 4.471500e-02 : f32
    %136 = vector.broadcast %cst_31 : f32 to vector<16x64xf32>
    %137 = arith.mulf %136, %135 : vector<16x64xf32>
    %138 = arith.addf %133, %137 : vector<16x64xf32>
    %cst_32 = arith.constant 0.797884583 : f32
    %139 = vector.broadcast %cst_32 : f32 to vector<16x64xf32>
    %140 = arith.mulf %139, %138 : vector<16x64xf32>
    %141 = math.tanh %140 : vector<16x64xf32>
    %cst_33 = arith.constant 1.000000e+00 : f32
    %142 = vector.broadcast %cst_33 : f32 to vector<16x64xf32>
    %143 = arith.addf %142, %141 : vector<16x64xf32>
    %cst_34 = arith.constant 5.000000e-01 : f32
    %144 = vector.broadcast %cst_34 : f32 to vector<16x64xf32>
    %145 = arith.mulf %144, %143 : vector<16x64xf32>
    %146 = arith.mulf %133, %145 : vector<16x64xf32>
    %147 = vector.extract_strided_slice %132 {offsets = [0, 64], sizes = [16, 64], strides = [1, 1]} : vector<16x128xf32> to vector<16x64xf32>
    %148 = arith.mulf %146, %147 : vector<16x64xf32>
    %149 = arith.truncf %148 : vector<16x64xf32> to vector<16x64xbf16>
    %c0_35 = arith.constant 0 : index
    %c0_36 = arith.constant 0 : index
    %c0_37 = arith.constant 0 : index
    %150 = vector.load %arg7[%c0_35, %c0_36, %c0_37] : memref<2x64x32xbf16, #tpu.memory_space<vmem>>, vector<1x64x32xbf16>
    %151 = vector.shape_cast %150 : vector<1x64x32xbf16> to vector<64x32xbf16>
    %cst_38 = arith.constant dense<0.000000e+00> : vector<16x32xf32>
    %152 = tpu.matmul %149, %151, %cst_38 {dimension_numbers = #tpu.dot_dimension_numbers<[1], [0], [0], [1], [0, 0, 1, 1], [], []>} : vector<16x64xbf16>, vector<64x32xbf16>, vector<16x32xf32> -> vector<16x32xf32>
    %153 = arith.addf %114, %152 : vector<16x32xf32>
    %c1 = arith.constant 1 : index
    %c0_39 = arith.constant 0 : index
    %c0_40 = arith.constant 0 : index
    %154 = vector.load %arg2[%c1, %c0_39, %c0_40] : memref<2x1x32xf32, #tpu.memory_space<vmem>>, vector<1x1x32xf32>
    %155 = vector.shape_cast %154 : vector<1x1x32xf32> to vector<1x32xf32>
    %156 = arith.mulf %153, %153 : vector<16x32xf32>
    %cst_41 = arith.constant dense<0.000000e+00> : vector<16xf32>
    %157 = vector.multi_reduction <add>, %156, %cst_41 [1] : vector<16x32xf32> to vector<16xf32>
    %158 = vector.shape_cast %157 : vector<16xf32> to vector<16x1xf32>
    %cst_42 = arith.constant 3.200000e+01 : f32
    %159 = vector.broadcast %cst_42 : f32 to vector<16x1xf32>
    %160 = arith.divf %158, %159 : vector<16x1xf32>
    %cst_43 = arith.constant 9.99999997E-7 : f32
    %161 = vector.broadcast %cst_43 : f32 to vector<16x1xf32>
    %162 = arith.addf %160, %161 : vector<16x1xf32>
    %163 = math.rsqrt %162 : vector<16x1xf32>
    %164 = vector.broadcast %163 : vector<16x1xf32> to vector<16x32xf32>
    %165 = arith.mulf %153, %164 : vector<16x32xf32>
    %166 = vector.broadcast %155 : vector<1x32xf32> to vector<16x32xf32>
    %167 = arith.mulf %165, %166 : vector<16x32xf32>
    %168 = arith.truncf %167 : vector<16x32xf32> to vector<16x32xbf16>
    %c1_44 = arith.constant 1 : index
    %c0_45 = arith.constant 0 : index
    %c0_46 = arith.constant 0 : index
    %169 = vector.load %arg3[%c1_44, %c0_45, %c0_46] : memref<2x32x96xbf16, #tpu.memory_space<vmem>>, vector<1x32x96xbf16>
    %170 = vector.shape_cast %169 : vector<1x32x96xbf16> to vector<32x96xbf16>
    %cst_47 = arith.constant dense<0.000000e+00> : vector<16x96xf32>
    %171 = tpu.matmul %168, %170, %cst_47 {dimension_numbers = #tpu.dot_dimension_numbers<[1], [0], [0], [1], [0, 0, 1, 1], [], []>} : vector<16x32xbf16>, vector<32x96xbf16>, vector<16x96xf32> -> vector<16x96xf32>
    %172 = vector.extract_strided_slice %171 {offsets = [0, 0], sizes = [16, 32], strides = [1, 1]} : vector<16x96xf32> to vector<16x32xf32>
    %173 = vector.extract_strided_slice %171 {offsets = [0, 32], sizes = [16, 32], strides = [1, 1]} : vector<16x96xf32> to vector<16x32xf32>
    %174 = vector.extract_strided_slice %171 {offsets = [0, 64], sizes = [16, 32], strides = [1, 1]} : vector<16x96xf32> to vector<16x32xf32>
    %175 = vector.extract_strided_slice %172 {offsets = [0, 0], sizes = [8, 8], strides = [1, 1]} : vector<16x32xf32> to vector<8x8xf32>
    %176 = vector.extract_strided_slice %172 {offsets = [0, 8], sizes = [8, 8], strides = [1, 1]} : vector<16x32xf32> to vector<8x8xf32>
    %177 = vector.extract_strided_slice %172 {offsets = [0, 16], sizes = [8, 8], strides = [1, 1]} : vector<16x32xf32> to vector<8x8xf32>
    %178 = vector.extract_strided_slice %172 {offsets = [0, 24], sizes = [8, 8], strides = [1, 1]} : vector<16x32xf32> to vector<8x8xf32>
    %179 = vector.extract_strided_slice %172 {offsets = [8, 0], sizes = [8, 8], strides = [1, 1]} : vector<16x32xf32> to vector<8x8xf32>
    %180 = vector.extract_strided_slice %172 {offsets = [8, 8], sizes = [8, 8], strides = [1, 1]} : vector<16x32xf32> to vector<8x8xf32>
    %181 = vector.extract_strided_slice %172 {offsets = [8, 16], sizes = [8, 8], strides = [1, 1]} : vector<16x32xf32> to vector<8x8xf32>
    %182 = vector.extract_strided_slice %172 {offsets = [8, 24], sizes = [8, 8], strides = [1, 1]} : vector<16x32xf32> to vector<8x8xf32>
    %183 = vector.shape_cast %175 : vector<8x8xf32> to vector<1x8x8xf32>
    %184 = vector.shape_cast %176 : vector<8x8xf32> to vector<1x8x8xf32>
    %185 = vector.shape_cast %177 : vector<8x8xf32> to vector<1x8x8xf32>
    %186 = vector.shape_cast %178 : vector<8x8xf32> to vector<1x8x8xf32>
    %187 = vector.shape_cast %179 : vector<8x8xf32> to vector<1x8x8xf32>
    %188 = vector.shape_cast %180 : vector<8x8xf32> to vector<1x8x8xf32>
    %189 = vector.shape_cast %181 : vector<8x8xf32> to vector<1x8x8xf32>
    %190 = vector.shape_cast %182 : vector<8x8xf32> to vector<1x8x8xf32>
    %191 = tpu.concatenate %183, %184, %185, %186, %187, %188, %189, %190 in 0 : vector<1x8x8xf32>, vector<1x8x8xf32>, vector<1x8x8xf32>, vector<1x8x8xf32>, vector<1x8x8xf32>, vector<1x8x8xf32>, vector<1x8x8xf32>, vector<1x8x8xf32> -> vector<8x8x8xf32>
    %192 = arith.truncf %191 : vector<8x8x8xf32> to vector<8x8x8xbf16>
    %193 = vector.extract_strided_slice %173 {offsets = [0, 0], sizes = [8, 8], strides = [1, 1]} : vector<16x32xf32> to vector<8x8xf32>
    %194 = vector.extract_strided_slice %173 {offsets = [0, 8], sizes = [8, 8], strides = [1, 1]} : vector<16x32xf32> to vector<8x8xf32>
    %195 = vector.extract_strided_slice %173 {offsets = [0, 16], sizes = [8, 8], strides = [1, 1]} : vector<16x32xf32> to vector<8x8xf32>
    %196 = vector.extract_strided_slice %173 {offsets = [0, 24], sizes = [8, 8], strides = [1, 1]} : vector<16x32xf32> to vector<8x8xf32>
    %197 = vector.extract_strided_slice %173 {offsets = [8, 0], sizes = [8, 8], strides = [1, 1]} : vector<16x32xf32> to vector<8x8xf32>
    %198 = vector.extract_strided_slice %173 {offsets = [8, 8], sizes = [8, 8], strides = [1, 1]} : vector<16x32xf32> to vector<8x8xf32>
    %199 = vector.extract_strided_slice %173 {offsets = [8, 16], sizes = [8, 8], strides = [1, 1]} : vector<16x32xf32> to vector<8x8xf32>
    %200 = vector.extract_strided_slice %173 {offsets = [8, 24], sizes = [8, 8], strides = [1, 1]} : vector<16x32xf32> to vector<8x8xf32>
    %201 = vector.shape_cast %193 : vector<8x8xf32> to vector<1x8x8xf32>
    %202 = vector.shape_cast %194 : vector<8x8xf32> to vector<1x8x8xf32>
    %203 = vector.shape_cast %195 : vector<8x8xf32> to vector<1x8x8xf32>
    %204 = vector.shape_cast %196 : vector<8x8xf32> to vector<1x8x8xf32>
    %205 = vector.shape_cast %197 : vector<8x8xf32> to vector<1x8x8xf32>
    %206 = vector.shape_cast %198 : vector<8x8xf32> to vector<1x8x8xf32>
    %207 = vector.shape_cast %199 : vector<8x8xf32> to vector<1x8x8xf32>
    %208 = vector.shape_cast %200 : vector<8x8xf32> to vector<1x8x8xf32>
    %209 = tpu.concatenate %201, %202, %203, %204, %205, %206, %207, %208 in 0 : vector<1x8x8xf32>, vector<1x8x8xf32>, vector<1x8x8xf32>, vector<1x8x8xf32>, vector<1x8x8xf32>, vector<1x8x8xf32>, vector<1x8x8xf32>, vector<1x8x8xf32> -> vector<8x8x8xf32>
    %210 = arith.truncf %209 : vector<8x8x8xf32> to vector<8x8x8xbf16>
    %211 = vector.extract_strided_slice %174 {offsets = [0, 0], sizes = [8, 8], strides = [1, 1]} : vector<16x32xf32> to vector<8x8xf32>
    %212 = vector.extract_strided_slice %174 {offsets = [0, 8], sizes = [8, 8], strides = [1, 1]} : vector<16x32xf32> to vector<8x8xf32>
    %213 = vector.extract_strided_slice %174 {offsets = [0, 16], sizes = [8, 8], strides = [1, 1]} : vector<16x32xf32> to vector<8x8xf32>
    %214 = vector.extract_strided_slice %174 {offsets = [0, 24], sizes = [8, 8], strides = [1, 1]} : vector<16x32xf32> to vector<8x8xf32>
    %215 = vector.extract_strided_slice %174 {offsets = [8, 0], sizes = [8, 8], strides = [1, 1]} : vector<16x32xf32> to vector<8x8xf32>
    %216 = vector.extract_strided_slice %174 {offsets = [8, 8], sizes = [8, 8], strides = [1, 1]} : vector<16x32xf32> to vector<8x8xf32>
    %217 = vector.extract_strided_slice %174 {offsets = [8, 16], sizes = [8, 8], strides = [1, 1]} : vector<16x32xf32> to vector<8x8xf32>
    %218 = vector.extract_strided_slice %174 {offsets = [8, 24], sizes = [8, 8], strides = [1, 1]} : vector<16x32xf32> to vector<8x8xf32>
    %219 = vector.shape_cast %211 : vector<8x8xf32> to vector<1x8x8xf32>
    %220 = vector.shape_cast %212 : vector<8x8xf32> to vector<1x8x8xf32>
    %221 = vector.shape_cast %213 : vector<8x8xf32> to vector<1x8x8xf32>
    %222 = vector.shape_cast %214 : vector<8x8xf32> to vector<1x8x8xf32>
    %223 = vector.shape_cast %215 : vector<8x8xf32> to vector<1x8x8xf32>
    %224 = vector.shape_cast %216 : vector<8x8xf32> to vector<1x8x8xf32>
    %225 = vector.shape_cast %217 : vector<8x8xf32> to vector<1x8x8xf32>
    %226 = vector.shape_cast %218 : vector<8x8xf32> to vector<1x8x8xf32>
    %227 = tpu.concatenate %219, %220, %221, %222, %223, %224, %225, %226 in 0 : vector<1x8x8xf32>, vector<1x8x8xf32>, vector<1x8x8xf32>, vector<1x8x8xf32>, vector<1x8x8xf32>, vector<1x8x8xf32>, vector<1x8x8xf32>, vector<1x8x8xf32> -> vector<8x8x8xf32>
    %228 = arith.truncf %227 : vector<8x8x8xf32> to vector<8x8x8xbf16>
    "tpu.trace_start"() <{level = 10 : i32, message = "bqd,bkd->bqk"}> : () -> ()
    %cst_48 = arith.constant dense<0.000000e+00> : vector<8x8x8xf32>
    %229 = tpu.matmul %192, %210, %cst_48 {dimension_numbers = #tpu.dot_dimension_numbers<[2], [2], [1], [1], [0, 0, 0, 1, 1, 1], [0], [0]>} : vector<8x8x8xbf16>, vector<8x8x8xbf16>, vector<8x8x8xf32> -> vector<8x8x8xf32>
    "tpu.trace_stop"() : () -> ()
    %230 = arith.addf %229, %1 : vector<8x8x8xf32>
    %cst_49 = arith.constant dense<0xFF800000> : vector<8x8xf32>
    %231 = vector.multi_reduction <maximumf>, %230, %cst_49 [2] : vector<8x8x8xf32> to vector<8x8xf32>
    %232 = vector.shape_cast %231 : vector<8x8xf32> to vector<8x8x1xf32>
    %233 = vector.broadcast %232 : vector<8x8x1xf32> to vector<8x8x8xf32>
    %234 = arith.subf %230, %233 : vector<8x8x8xf32>
    %235 = math.exp %234 : vector<8x8x8xf32>
    %cst_50 = arith.constant dense<0.000000e+00> : vector<8x8xf32>
    %236 = vector.multi_reduction <add>, %235, %cst_50 [2] : vector<8x8x8xf32> to vector<8x8xf32>
    %237 = vector.shape_cast %236 : vector<8x8xf32> to vector<8x8x1xf32>
    %238 = tpu.reciprocal %237 {approx = true} : vector<8x8x1xf32> -> vector<8x8x1xf32>
    %239 = vector.broadcast %238 : vector<8x8x1xf32> to vector<8x8x8xf32>
    %240 = arith.mulf %235, %239 : vector<8x8x8xf32>
    %241 = arith.truncf %240 : vector<8x8x8xf32> to vector<8x8x8xbf16>
    "tpu.trace_start"() <{level = 10 : i32, message = "bqk,bkd->bqd"}> : () -> ()
    %cst_51 = arith.constant dense<0.000000e+00> : vector<8x8x8xf32>
    %242 = tpu.matmul %241, %228, %cst_51 {dimension_numbers = #tpu.dot_dimension_numbers<[2], [1], [1], [2], [0, 0, 0, 1, 1, 2], [0], [0]>} : vector<8x8x8xbf16>, vector<8x8x8xbf16>, vector<8x8x8xf32> -> vector<8x8x8xf32>
    "tpu.trace_stop"() : () -> ()
    %243 = vector.extract_strided_slice %242 {offsets = [0, 0, 0], sizes = [1, 8, 8], strides = [1, 1, 1]} : vector<8x8x8xf32> to vector<1x8x8xf32>
    %244 = vector.shape_cast %243 : vector<1x8x8xf32> to vector<8x8xf32>
    %245 = vector.extract_strided_slice %242 {offsets = [1, 0, 0], sizes = [1, 8, 8], strides = [1, 1, 1]} : vector<8x8x8xf32> to vector<1x8x8xf32>
    %246 = vector.shape_cast %245 : vector<1x8x8xf32> to vector<8x8xf32>
    %247 = vector.extract_strided_slice %242 {offsets = [2, 0, 0], sizes = [1, 8, 8], strides = [1, 1, 1]} : vector<8x8x8xf32> to vector<1x8x8xf32>
    %248 = vector.shape_cast %247 : vector<1x8x8xf32> to vector<8x8xf32>
    %249 = vector.extract_strided_slice %242 {offsets = [3, 0, 0], sizes = [1, 8, 8], strides = [1, 1, 1]} : vector<8x8x8xf32> to vector<1x8x8xf32>
    %250 = vector.shape_cast %249 : vector<1x8x8xf32> to vector<8x8xf32>
    %251 = tpu.concatenate %244, %246, %248, %250 in 1 : vector<8x8xf32>, vector<8x8xf32>, vector<8x8xf32>, vector<8x8xf32> -> vector<8x32xf32>
    %252 = vector.extract_strided_slice %242 {offsets = [4, 0, 0], sizes = [1, 8, 8], strides = [1, 1, 1]} : vector<8x8x8xf32> to vector<1x8x8xf32>
    %253 = vector.shape_cast %252 : vector<1x8x8xf32> to vector<8x8xf32>
    %254 = vector.extract_strided_slice %242 {offsets = [5, 0, 0], sizes = [1, 8, 8], strides = [1, 1, 1]} : vector<8x8x8xf32> to vector<1x8x8xf32>
    %255 = vector.shape_cast %254 : vector<1x8x8xf32> to vector<8x8xf32>
    %256 = vector.extract_strided_slice %242 {offsets = [6, 0, 0], sizes = [1, 8, 8], strides = [1, 1, 1]} : vector<8x8x8xf32> to vector<1x8x8xf32>
    %257 = vector.shape_cast %256 : vector<1x8x8xf32> to vector<8x8xf32>
    %258 = vector.extract_strided_slice %242 {offsets = [7, 0, 0], sizes = [1, 8, 8], strides = [1, 1, 1]} : vector<8x8x8xf32> to vector<1x8x8xf32>
    %259 = vector.shape_cast %258 : vector<1x8x8xf32> to vector<8x8xf32>
    %260 = tpu.concatenate %253, %255, %257, %259 in 1 : vector<8x8xf32>, vector<8x8xf32>, vector<8x8xf32>, vector<8x8xf32> -> vector<8x32xf32>
    %261 = tpu.concatenate %251, %260 in 0 : vector<8x32xf32>, vector<8x32xf32> -> vector<16x32xf32>
    %262 = arith.truncf %261 : vector<16x32xf32> to vector<16x32xbf16>
    %c1_52 = arith.constant 1 : index
    %c0_53 = arith.constant 0 : index
    %c0_54 = arith.constant 0 : index
    %263 = vector.load %arg4[%c1_52, %c0_53, %c0_54] : memref<2x32x32xbf16, #tpu.memory_space<vmem>>, vector<1x32x32xbf16>
    %264 = vector.shape_cast %263 : vector<1x32x32xbf16> to vector<32x32xbf16>
    %cst_55 = arith.constant dense<0.000000e+00> : vector<16x32xf32>
    %265 = tpu.matmul %262, %264, %cst_55 {dimension_numbers = #tpu.dot_dimension_numbers<[1], [0], [0], [1], [0, 0, 1, 1], [], []>} : vector<16x32xbf16>, vector<32x32xbf16>, vector<16x32xf32> -> vector<16x32xf32>
    %266 = arith.addf %153, %265 : vector<16x32xf32>
    %c1_56 = arith.constant 1 : index
    %c0_57 = arith.constant 0 : index
    %c0_58 = arith.constant 0 : index
    %267 = vector.load %arg5[%c1_56, %c0_57, %c0_58] : memref<2x1x32xf32, #tpu.memory_space<vmem>>, vector<1x1x32xf32>
    %268 = vector.shape_cast %267 : vector<1x1x32xf32> to vector<1x32xf32>
    %269 = arith.mulf %266, %266 : vector<16x32xf32>
    %cst_59 = arith.constant dense<0.000000e+00> : vector<16xf32>
    %270 = vector.multi_reduction <add>, %269, %cst_59 [1] : vector<16x32xf32> to vector<16xf32>
    %271 = vector.shape_cast %270 : vector<16xf32> to vector<16x1xf32>
    %cst_60 = arith.constant 3.200000e+01 : f32
    %272 = vector.broadcast %cst_60 : f32 to vector<16x1xf32>
    %273 = arith.divf %271, %272 : vector<16x1xf32>
    %cst_61 = arith.constant 9.99999997E-7 : f32
    %274 = vector.broadcast %cst_61 : f32 to vector<16x1xf32>
    %275 = arith.addf %273, %274 : vector<16x1xf32>
    %276 = math.rsqrt %275 : vector<16x1xf32>
    %277 = vector.broadcast %276 : vector<16x1xf32> to vector<16x32xf32>
    %278 = arith.mulf %266, %277 : vector<16x32xf32>
    %279 = vector.broadcast %268 : vector<1x32xf32> to vector<16x32xf32>
    %280 = arith.mulf %278, %279 : vector<16x32xf32>
    %281 = arith.truncf %280 : vector<16x32xf32> to vector<16x32xbf16>
    %c1_62 = arith.constant 1 : index
    %c0_63 = arith.constant 0 : index
    %c0_64 = arith.constant 0 : index
    %282 = vector.load %arg6[%c1_62, %c0_63, %c0_64] : memref<2x32x128xbf16, #tpu.memory_space<vmem>>, vector<1x32x128xbf16>
    %283 = vector.shape_cast %282 : vector<1x32x128xbf16> to vector<32x128xbf16>
    %cst_65 = arith.constant dense<0.000000e+00> : vector<16x128xf32>
    %284 = tpu.matmul %281, %283, %cst_65 {dimension_numbers = #tpu.dot_dimension_numbers<[1], [0], [0], [1], [0, 0, 1, 1], [], []>} : vector<16x32xbf16>, vector<32x128xbf16>, vector<16x128xf32> -> vector<16x128xf32>
    %285 = vector.extract_strided_slice %284 {offsets = [0, 0], sizes = [16, 64], strides = [1, 1]} : vector<16x128xf32> to vector<16x64xf32>
    %286 = arith.mulf %285, %285 : vector<16x64xf32>
    %287 = arith.mulf %285, %286 : vector<16x64xf32>
    %cst_66 = arith.constant 4.471500e-02 : f32
    %288 = vector.broadcast %cst_66 : f32 to vector<16x64xf32>
    %289 = arith.mulf %288, %287 : vector<16x64xf32>
    %290 = arith.addf %285, %289 : vector<16x64xf32>
    %cst_67 = arith.constant 0.797884583 : f32
    %291 = vector.broadcast %cst_67 : f32 to vector<16x64xf32>
    %292 = arith.mulf %291, %290 : vector<16x64xf32>
    %293 = math.tanh %292 : vector<16x64xf32>
    %cst_68 = arith.constant 1.000000e+00 : f32
    %294 = vector.broadcast %cst_68 : f32 to vector<16x64xf32>
    %295 = arith.addf %294, %293 : vector<16x64xf32>
    %cst_69 = arith.constant 5.000000e-01 : f32
    %296 = vector.broadcast %cst_69 : f32 to vector<16x64xf32>
    %297 = arith.mulf %296, %295 : vector<16x64xf32>
    %298 = arith.mulf %285, %297 : vector<16x64xf32>
    %299 = vector.extract_strided_slice %284 {offsets = [0, 64], sizes = [16, 64], strides = [1, 1]} : vector<16x128xf32> to vector<16x64xf32>
    %300 = arith.mulf %298, %299 : vector<16x64xf32>
    %301 = arith.truncf %300 : vector<16x64xf32> to vector<16x64xbf16>
    %c1_70 = arith.constant 1 : index
    %c0_71 = arith.constant 0 : index
    %c0_72 = arith.constant 0 : index
    %302 = vector.load %arg7[%c1_70, %c0_71, %c0_72] : memref<2x64x32xbf16, #tpu.memory_space<vmem>>, vector<1x64x32xbf16>
    %303 = vector.shape_cast %302 : vector<1x64x32xbf16> to vector<64x32xbf16>
    %cst_73 = arith.constant dense<0.000000e+00> : vector<16x32xf32>
    %304 = tpu.matmul %301, %303, %cst_73 {dimension_numbers = #tpu.dot_dimension_numbers<[1], [0], [0], [1], [0, 0, 1, 1], [], []>} : vector<16x64xbf16>, vector<64x32xbf16>, vector<16x32xf32> -> vector<16x32xf32>
    %305 = arith.addf %266, %304 : vector<16x32xf32>
    %c0_74 = arith.constant 0 : index
    %c0_75 = arith.constant 0 : index
    %306 = vector.load %arg8[%c0_74, %c0_75] : memref<1x32xf32, #tpu.memory_space<vmem>>, vector<1x32xf32>
    %307 = arith.mulf %305, %305 : vector<16x32xf32>
    %cst_76 = arith.constant dense<0.000000e+00> : vector<16xf32>
    %308 = vector.multi_reduction <add>, %307, %cst_76 [1] : vector<16x32xf32> to vector<16xf32>
    %309 = vector.shape_cast %308 : vector<16xf32> to vector<16x1xf32>
    %cst_77 = arith.constant 3.200000e+01 : f32
    %310 = vector.broadcast %cst_77 : f32 to vector<16x1xf32>
    %311 = arith.divf %309, %310 : vector<16x1xf32>
    %cst_78 = arith.constant 9.99999997E-7 : f32
    %312 = vector.broadcast %cst_78 : f32 to vector<16x1xf32>
    %313 = arith.addf %311, %312 : vector<16x1xf32>
    %314 = math.rsqrt %313 : vector<16x1xf32>
    %315 = vector.broadcast %314 : vector<16x1xf32> to vector<16x32xf32>
    %316 = arith.mulf %305, %315 : vector<16x32xf32>
    %317 = vector.broadcast %306 : vector<1x32xf32> to vector<16x32xf32>
    %318 = arith.mulf %316, %317 : vector<16x32xf32>
    %319 = vector.extract_strided_slice %318 {offsets = [0, 0], sizes = [8, 32], strides = [1, 1]} : vector<16x32xf32> to vector<8x32xf32>
    %cst_79 = arith.constant dense<0.000000e+00> : vector<32xf32>
    %320 = vector.multi_reduction <add>, %319, %cst_79 [0] : vector<8x32xf32> to vector<32xf32>
    %321 = vector.shape_cast %320 : vector<32xf32> to vector<1x32xf32>
    %322 = vector.extract_strided_slice %318 {offsets = [8, 0], sizes = [8, 32], strides = [1, 1]} : vector<16x32xf32> to vector<8x32xf32>
    %cst_80 = arith.constant dense<0.000000e+00> : vector<32xf32>
    %323 = vector.multi_reduction <add>, %322, %cst_80 [0] : vector<8x32xf32> to vector<32xf32>
    %324 = vector.shape_cast %323 : vector<32xf32> to vector<1x32xf32>
    %325 = tpu.concatenate %321, %324 in 0 : vector<1x32xf32>, vector<1x32xf32> -> vector<2x32xf32>
    %c0_81 = arith.constant 0 : index
    %c0_82 = arith.constant 0 : index
    %326 = vector.load %arg9[%c0_81, %c0_82] : memref<32x64xf32, #tpu.memory_space<vmem>>, vector<32x64xf32>
    %cst_83 = arith.constant dense<0.000000e+00> : vector<2x64xf32>
    %327 = tpu.matmul %325, %326, %cst_83 {dimension_numbers = #tpu.dot_dimension_numbers<[1], [0], [0], [1], [0, 0, 1, 1], [], []>} : vector<2x32xf32>, vector<32x64xf32>, vector<2x64xf32> -> vector<2x64xf32>
    %c0_84 = arith.constant 0 : index
    %c0_85 = arith.constant 0 : index
    %328 = vector.load %arg10[%c0_84, %c0_85] : memref<1x64xf32, #tpu.memory_space<vmem>>, vector<1x64xf32>
    %329 = vector.broadcast %328 : vector<1x64xf32> to vector<2x64xf32>
    %330 = arith.addf %327, %329 : vector<2x64xf32>
    %cst_86 = arith.constant 0.000000e+00 : f32
    %331 = vector.broadcast %cst_86 : f32 to vector<2x64xf32>
    %332 = arith.maximumf %330, %331 : vector<2x64xf32>
    %c0_87 = arith.constant 0 : index
    %c0_88 = arith.constant 0 : index
    %333 = vector.load %arg11[%c0_87, %c0_88] : memref<64x32xf32, #tpu.memory_space<vmem>>, vector<64x32xf32>
    %cst_89 = arith.constant dense<0.000000e+00> : vector<2x32xf32>
    %334 = tpu.matmul %332, %333, %cst_89 {dimension_numbers = #tpu.dot_dimension_numbers<[1], [0], [0], [1], [0, 0, 1, 1], [], []>} : vector<2x64xf32>, vector<64x32xf32>, vector<2x32xf32> -> vector<2x32xf32>
    %c0_90 = arith.constant 0 : index
    %c0_91 = arith.constant 0 : index
    %335 = vector.load %arg12[%c0_90, %c0_91] : memref<1x32xf32, #tpu.memory_space<vmem>>, vector<1x32xf32>
    %336 = vector.broadcast %335 : vector<1x32xf32> to vector<2x32xf32>
    %337 = arith.addf %334, %336 : vector<2x32xf32>
    %cst_92 = arith.constant 0.000000e+00 : f32
    %338 = vector.broadcast %cst_92 : f32 to vector<2x32xf32>
    %339 = arith.maximumf %337, %338 : vector<2x32xf32>
    %c0_93 = arith.constant 0 : index
    %c0_94 = arith.constant 0 : index
    %340 = vector.load %arg13[%c0_93, %c0_94] : memref<32x128xf32, #tpu.memory_space<vmem>>, vector<32x128xf32>
    %cst_95 = arith.constant dense<0.000000e+00> : vector<2x128xf32>
    %341 = tpu.matmul %339, %340, %cst_95 {dimension_numbers = #tpu.dot_dimension_numbers<[1], [0], [0], [1], [0, 0, 1, 1], [], []>} : vector<2x32xf32>, vector<32x128xf32>, vector<2x128xf32> -> vector<2x128xf32>
    %c0_96 = arith.constant 0 : index
    %c0_97 = arith.constant 0 : index
    %342 = vector.load %arg14[%c0_96, %c0_97] : memref<1x128xf32, #tpu.memory_space<vmem>>, vector<1x128xf32>
    %343 = vector.broadcast %342 : vector<1x128xf32> to vector<2x128xf32>
    %344 = arith.addf %341, %343 : vector<2x128xf32>
    %345 = arith.negf %344 : vector<2x128xf32>
    %346 = math.exp %345 : vector<2x128xf32>
    %cst_98 = arith.constant 1.000000e+00 : f32
    %347 = vector.broadcast %cst_98 : f32 to vector<2x128xf32>
    %348 = arith.addf %347, %346 : vector<2x128xf32>
    %349 = arith.divf %347, %348 : vector<2x128xf32>
    %c0_99 = arith.constant 0 : index
    %c0_100 = arith.constant 0 : index
    %350 = vector.load %arg15[%c0_99, %c0_100] : memref<2x128xf32, #tpu.memory_space<vmem>>, vector<2x128xf32>
    tpu.vector_store %arg15[%c0_99, %c0_100], %349 {strides = array<i32>} : memref<2x128xf32, #tpu.memory_space<vmem>>, vector<2x128xf32>,
    return
  }
}

</mosaic_0001>

<llo_original>
// kernel: t5_model_forward.1
$region0: #{t5_model_forward.1}
  #allocation0 [shape = 'u32[]', space=smem, size = 0x4, offset = 0x4, fixed_abs, tag = 'smem constant byte address 0x4 - core index']
  #allocation1 [shape = 'u32[144,128]{1,0:T(1,128)}', space=vmem, size = 0x12000, scoped, tag = 'internal scratch']
  %s0 = inlined_call_operand.vmem [shape: f32[16,32], index: 0, kind: input, shape index: {}]
  %s1 = inlined_call_operand.vmem [shape: f32[8,8,8], index: 1, kind: input, shape index: {}]
  %s2 = inlined_call_operand.vmem [shape: f32[2,1,32], index: 2, kind: input, shape index: {}]
  %s3 = inlined_call_operand.vmem [shape: bf16[2,32,96], index: 3, kind: input, shape index: {}]
  %s4 = inlined_call_operand.vmem [shape: bf16[2,32,32], index: 4, kind: input, shape index: {}]
  %s5 = inlined_call_operand.vmem [shape: f32[2,1,32], index: 5, kind: input, shape index: {}]
  %s6 = inlined_call_operand.vmem [shape: bf16[2,32,128], index: 6, kind: input, shape index: {}]
  %s7 = inlined_call_operand.vmem [shape: bf16[2,64,32], index: 7, kind: input, shape index: {}]
  %s8 = inlined_call_operand.vmem [shape: f32[1,32], index: 8, kind: input, shape index: {}]
  %s9 = inlined_call_operand.vmem [shape: f32[32,64], index: 9, kind: input, shape index: {}]
  %s10 = inlined_call_operand.vmem [shape: f32[1,64], index: 10, kind: input, shape index: {}]
  %s11 = inlined_call_operand.vmem [shape: f32[64,32], index: 11, kind: input, shape index: {}]
  %s12 = inlined_call_operand.vmem [shape: f32[1,32], index: 12, kind: input, shape index: {}]
  %s13 = inlined_call_operand.vmem [shape: f32[32,128], index: 13, kind: input, shape index: {}]
  %s14 = inlined_call_operand.vmem [shape: f32[1,128], index: 14, kind: input, shape index: {}]
  %s15 = inlined_call_operand.vmem [shape: f32[2,128], index: 15, kind: output, shape index: {}]
  %s16 = sld [smem:[#allocation0]]
  $region70: #{t5_model_forward.1} parent=0
    _
  %s18 = ssub.s32 1, %s16
  %s19 = scalar_select 0, %s18, %s16
  // Predicated region
  $region2: #{t5_model_forward.1} parent=0 // pred_check
    _
  $region3: #{t5_model_forward.1} parent=0 // pred_check_branch
    %21 = sbr.rel (0) target = $region5
  $region4: #{t5_model_forward.1} parent=0 // pred_region
    _
  $region5: #{t5_model_forward.1} parent=0 // pred_fallthru
    _
  // Predicated region
  $region6: #{t5_model_forward.1} parent=0 // pred_check
    _
  $region7: #{t5_model_forward.1} parent=0 // pred_check_branch
    %23 = sbr.rel (0) target = $region9
  $region8: #{t5_model_forward.1} parent=0 // pred_region
    _
  $region9: #{t5_model_forward.1} parent=0 // pred_fallthru
    _
  // Predicated region
  $region10: #{t5_model_forward.1} parent=0 // pred_check
    _
  $region11: #{t5_model_forward.1} parent=0 // pred_check_branch
    %25 = sbr.rel (0) target = $region13
  $region12: #{t5_model_forward.1} parent=0 // pred_region
    _
  $region13: #{t5_model_forward.1} parent=0 // pred_fallthru
    _
  // Predicated region
  $region14: #{t5_model_forward.1} parent=0 // pred_check
    _
  $region15: #{t5_model_forward.1} parent=0 // pred_check_branch
    %27 = sbr.rel (0) target = $region17
  $region16: #{t5_model_forward.1} parent=0 // pred_region
    _
  $region17: #{t5_model_forward.1} parent=0 // pred_fallthru
    _
  // Predicated region
  $region18: #{t5_model_forward.1} parent=0 // pred_check
    _
  $region19: #{t5_model_forward.1} parent=0 // pred_check_branch
    %29 = sbr.rel (0) target = $region21
  $region20: #{t5_model_forward.1} parent=0 // pred_region
    _
  $region21: #{t5_model_forward.1} parent=0 // pred_fallthru
    _
  // Predicated region
  $region22: #{t5_model_forward.1} parent=0 // pred_check
    _
  $region23: #{t5_model_forward.1} parent=0 // pred_check_branch
    %31 = sbr.rel (0) target = $region25
  $region24: #{t5_model_forward.1} parent=0 // pred_region
    _
  $region25: #{t5_model_forward.1} parent=0 // pred_fallthru
    _
  // Predicated region
  $region26: #{t5_model_forward.1} parent=0 // pred_check
    _
  $region27: #{t5_model_forward.1} parent=0 // pred_check_branch
    %33 = sbr.rel (0) target = $region29
  $region28: #{t5_model_forward.1} parent=0 // pred_region
    _
  $region29: #{t5_model_forward.1} parent=0 // pred_fallthru
    _
  // Predicated region
  $region30: #{t5_model_forward.1} parent=0 // pred_check
    _
  $region31: #{t5_model_forward.1} parent=0 // pred_check_branch
    %35 = sbr.rel (0) target = $region33
  $region32: #{t5_model_forward.1} parent=0 // pred_region
    _
  $region33: #{t5_model_forward.1} parent=0 // pred_fallthru
    _
  // Predicated region
  $region34: #{t5_model_forward.1} parent=0 // pred_check
    _
  $region35: #{t5_model_forward.1} parent=0 // pred_check_branch
    %37 = sbr.rel (0) target = $region37
  $region36: #{t5_model_forward.1} parent=0 // pred_region
    _
  $region37: #{t5_model_forward.1} parent=0 // pred_fallthru
    _
  // Predicated region
  $region38: #{t5_model_forward.1} parent=0 // pred_check
    _
  $region39: #{t5_model_forward.1} parent=0 // pred_check_branch
    %39 = sbr.rel (0) target = $region41
  $region40: #{t5_model_forward.1} parent=0 // pred_region
    _
  $region41: #{t5_model_forward.1} parent=0 // pred_fallthru
    _
  // Predicated region
  $region42: #{t5_model_forward.1} parent=0 // pred_check
    _
  $region43: #{t5_model_forward.1} parent=0 // pred_check_branch
    %41 = sbr.rel (0) target = $region45
  $region44: #{t5_model_forward.1} parent=0 // pred_region
    _
  $region45: #{t5_model_forward.1} parent=0 // pred_fallthru
    _
  // Predicated region
  $region46: #{t5_model_forward.1} parent=0 // pred_check
    _
  $region47: #{t5_model_forward.1} parent=0 // pred_check_branch
    %43 = sbr.rel (0) target = $region49
  $region48: #{t5_model_forward.1} parent=0 // pred_region
    _
  $region49: #{t5_model_forward.1} parent=0 // pred_fallthru
    _
  // Predicated region
  $region50: #{t5_model_forward.1} parent=0 // pred_check
    _
  $region51: #{t5_model_forward.1} parent=0 // pred_check_branch
    %45 = sbr.rel (0) target = $region53
  $region52: #{t5_model_forward.1} parent=0 // pred_region
    _
  $region53: #{t5_model_forward.1} parent=0 // pred_fallthru
    _
  // Predicated region
  $region54: #{t5_model_forward.1} parent=0 // pred_check
    _
  $region55: #{t5_model_forward.1} parent=0 // pred_check_branch
    %47 = sbr.rel (0) target = $region57
  $region56: #{t5_model_forward.1} parent=0 // pred_region
    _
  $region57: #{t5_model_forward.1} parent=0 // pred_fallthru
    _
  // Predicated region
  $region58: #{t5_model_forward.1} parent=0 // pred_check
    _
  $region59: #{t5_model_forward.1} parent=0 // pred_check_branch
    %49 = sbr.rel (0) target = $region61
  $region60: #{t5_model_forward.1} parent=0 // pred_region
    _
  $region61: #{t5_model_forward.1} parent=0 // pred_fallthru
    _
  %v51 = vld [vmem:[%s0] sm:$0xff]
  %v52 = vld [vmem:[%s0 + $0x8] sm:$0xff]
  %v53 = vld [vmem:[%s1] sm:$0xff]
  %v54 = vld [vmem:[%s1 + $0x8] sm:$0xff]
  %v55 = vld [vmem:[%s1 + $0x10] sm:$0xff]
  %v56 = vld [vmem:[%s1 + $0x18] sm:$0xff]
  %v57 = vld [vmem:[%s1 + $0x20] sm:$0xff]
  %v58 = vld [vmem:[%s1 + $0x28] sm:$0xff]
  %v59 = vld [vmem:[%s1 + $0x30] sm:$0xff]
  %v60 = vld [vmem:[%s1 + $0x38] sm:$0xff]
  %v61 = vld [vmem:[%s2] sm:$0x1]
  %v62 = vmul.f32 %v51, %v51
  %v63 = vmul.f32 %v52, %v52
  %vm64 = vcmask 261120
  %v65 = vsel %vm64, %v62, 0.0
  %66 = vadd.xlane.f32.xlu0 %v65
  %v67 = vpop.xlane.xlu0 %66
  %v68 = vsel %vm64, %v63, 0.0
  %69 = vadd.xlane.f32.xlu0 %v68
  %v70 = vpop.xlane.xlu0 %69
  %v71 = vrcp.pop 32.0
  %v72 = vmul.f32 %v67, %v71
  %v73 = vmul.f32 %v70, %v71
  %v74 = vadd.f32 %v72, 1e-06
  %v75 = vadd.f32 %v73, 1e-06
  %v76 = vrsqrt.pop %v74
  %v77 = vrsqrt.pop %v75
  %v78 = vmul.f32 %v51, %v76
  %v79 = vmul.f32 %v52, %v77
  %v81 = vlaneseq
  %v82 = vshrl.u32 %v81, 7
  %v83 = vsub.s32 0, %v82
  %v84 = vrot.slane %v61, %v83
  %v86 = vmul.f32 %v78, %v84
  %v87 = vmul.f32 %v79, %v84
  %v88 = vpack.c.bf16 %v87, %v86
  %v89 = vld [vmem:[%s3] sm:$0xf]
  %v90 = vld [vmem:[%s3 + $0x4] sm:$0xf]
  %v91 = vld [vmem:[%s3 + $0x8] sm:$0xf]
  %v92 = vld [vmem:[%s3 + $0xc] sm:$0xf]
  %v97 = vunpack.c.l.b16 %v89
  %v98 = vunpack.c.l.b16 %v90
  %v99 = vunpack.c.l.b16 %v91
  %v100 = vunpack.c.l.b16 %v92
  %v101 = vpack.c.b16 %v98, %v97
  %v102 = vpack.c.b16 %v100, %v99
  %v106 = vsel %vm64, %v88, 0
  %108 = vmatprep.subr.bf16.mxu0 0
  %109 = vmatpush1.bf16.msra.mxu0 0
  %110 = vmatprep.subr.bf16.mxu0 0
  %111 = vmatpush1.bf16.msra.mxu0 0
  %112 = vmatprep.subr.bf16.mxu0 0
  %113 = vmatpush1.bf16.msra.mxu0 0
  %114 = vmatprep.subr.bf16.mxu0 0
  %115 = vmatpush1.bf16.msra.mxu0 0
  %116 = vmatprep.subr.bf16.mxu0 0
  %117 = vmatpush1.bf16.msra.mxu0 0
  %118 = vmatprep.subr.bf16.mxu0 0
  %119 = vmatpush1.bf16.msra.mxu0 0
  %120 = vmatprep.subr.bf16.mxu0 0
  %121 = vmatpush1.bf16.msra.mxu0 %v102
  %122 = vmatprep.subr.bf16.mxu0 0
  %123 = vmatpush1.bf16.msra.mxu0 %v101
  %124 = vmatprep.subr.bf16.mxu0 0
  %125 = vmatpush2.bf16.msra.mxu0 0
  %126 = vmatprep.subr.bf16.mxu0 0
  %127 = vmatpush2.bf16.msra.mxu0 0
  %128 = vmatprep.subr.bf16.mxu0 0
  %129 = vmatpush2.bf16.msra.mxu0 0
  %130 = vmatprep.subr.bf16.mxu0 0
  %131 = vmatpush2.bf16.msra.mxu0 0
  %132 = vmatprep.subr.bf16.mxu0 0
  %133 = vmatpush2.bf16.msra.mxu0 0
  %134 = vmatprep.subr.bf16.mxu0 0
  %135 = vmatpush2.bf16.msra.mxu0 0
  %136 = vmatprep.subr.bf16.mxu0 0
  %137 = vmatpush2.bf16.msra.mxu0 0
  %138 = vmatprep.subr.bf16.mxu0 0
  %139 = vmatpush2.bf16.msra.mxu0 0
  %140 = vmatprep.mubr.bf16.mxu0 0
  %141 = vmatmul.mubr.bf16.gmra.mxu0 %v106
  %v142 = vpop.f32.mrf.mxu0
  %v143 = vadd.f32 0.0, %v142
  %v144 = vpop.f32.mrf.mxu0
  %v145 = vpop.f32.mrf.mxu0
  %v146 = vadd.f32 0.0, %v145
  %v147 = vpop.f32.mrf.mxu0
  %148 = vdwg.mxu0
  %150 = vrot.lane.b32.xlu0 %v143, 120
  %v151 = vpop.permute.xlu0 %150
  %153 = vrot.lane.b32.xlu0 %v143, 112
  %v154 = vpop.permute.xlu0 %153
  %156 = vrot.lane.b32.xlu0 %v143, 104
  %v157 = vpop.permute.xlu0 %156
  %160 = vrot.lane.b32.xlu0 %v146, 120
  %v161 = vpop.permute.xlu0 %160
  %163 = vrot.lane.b32.xlu0 %v146, 112
  %v164 = vpop.permute.xlu0 %163
  %166 = vrot.lane.b32.xlu0 %v146, 104
  %v167 = vpop.permute.xlu0 %166
  %v169 = vpack.c.bf16 %v143, %v143
  %v170 = vpack.c.bf16 %v151, %v151
  %v171 = vpack.c.bf16 %v154, %v154
  %v172 = vpack.c.bf16 %v157, %v157
  %v173 = vpack.c.bf16 %v146, %v146
  %v174 = vpack.c.bf16 %v161, %v161
  %v175 = vpack.c.bf16 %v164, %v164
  %v176 = vpack.c.bf16 %v167, %v167
  %178 = vrot.lane.b32.xlu0 %v169, 96
  %v179 = vpop.permute.xlu0 %178
  %vm180 = vcmask 64512
  %v182 = vsel %vm180, %v169, 0
  %v185 = vsel %vm180, %v179, 0
  %187 = vmatprep.subr.bf16.mxu0 0
  %188 = vmatpush1.bf16.xpose.msra.mxu0 0
  %189 = vmatprep.subr.bf16.mxu0 0
  %190 = vmatpush1.bf16.xpose.msra.mxu0 0
  %191 = vmatprep.subr.bf16.mxu0 0
  %192 = vmatpush1.bf16.xpose.msra.mxu0 0
  %193 = vmatprep.subr.bf16.mxu0 0
  %194 = vmatpush1.bf16.xpose.msra.mxu0 0
  %195 = vmatprep.subr.bf16.mxu0 0
  %196 = vmatpush1.bf16.xpose.msra.mxu0 0
  %197 = vmatprep.subr.bf16.mxu0 0
  %198 = vmatpush1.bf16.xpose.msra.mxu0 0
  %199 = vmatprep.subr.bf16.mxu0 0
  %200 = vmatpush1.bf16.xpose.msra.mxu0 0
  %201 = vmatprep.subr.bf16.mxu0 0
  %202 = vmatpush1.bf16.xpose.msra.mxu0 %v185
  %203 = vmatprep.subr.bf16.mxu0 0
  %204 = vmatpush2.bf16.xpose.msra.mxu0 0
  %205 = vmatprep.subr.bf16.mxu0 0
  %206 = vmatpush2.bf16.xpose.msra.mxu0 0
  %207 = vmatprep.subr.bf16.mxu0 0
  %208 = vmatpush2.bf16.xpose.msra.mxu0 0
  %209 = vmatprep.subr.bf16.mxu0 0
  %210 = vmatpush2.bf16.xpose.msra.mxu0 0
  %211 = vmatprep.subr.bf16.mxu0 0
  %212 = vmatpush2.bf16.xpose.msra.mxu0 0
  %213 = vmatprep.subr.bf16.mxu0 0
  %214 = vmatpush2.bf16.xpose.msra.mxu0 0
  %215 = vmatprep.subr.bf16.mxu0 0
  %216 = vmatpush2.bf16.xpose.msra.mxu0 0
  %217 = vmatprep.subr.bf16.mxu0 0
  %218 = vmatpush2.bf16.xpose.msra.mxu0 0
  %219 = vmatprep.mubr.bf16.mxu0 0
  %220 = vmatmul.mubr.bf16.gmra.mxu0 %v182
  %v221 = vpop.f32.mrf.mxu0
  %v222 = vadd.f32 %v53, %v221
  %v223 = vpop.f32.mrf.mxu0
  %v224 = vpop.f32.mrf.mxu0
  %v225 = vpop.f32.mrf.mxu0
  %226 = vdwg.mxu0
  %228 = vrot.lane.b32.xlu0 %v170, 96
  %v229 = vpop.permute.xlu0 %228
  %v231 = vsel %vm180, %v170, 0
  %v234 = vsel %vm180, %v229, 0
  %236 = vmatprep.subr.bf16.mxu0 0
  %237 = vmatpush1.bf16.xpose.msra.mxu0 0
  %238 = vmatprep.subr.bf16.mxu0 0
  %239 = vmatpush1.bf16.xpose.msra.mxu0 0
  %240 = vmatprep.subr.bf16.mxu0 0
  %241 = vmatpush1.bf16.xpose.msra.mxu0 0
  %242 = vmatprep.subr.bf16.mxu0 0
  %243 = vmatpush1.bf16.xpose.msra.mxu0 0
  %244 = vmatprep.subr.bf16.mxu0 0
  %245 = vmatpush1.bf16.xpose.msra.mxu0 0
  %246 = vmatprep.subr.bf16.mxu0 0
  %247 = vmatpush1.bf16.xpose.msra.mxu0 0
  %248 = vmatprep.subr.bf16.mxu0 0
  %249 = vmatpush1.bf16.xpose.msra.mxu0 0
  %250 = vmatprep.subr.bf16.mxu0 0
  %251 = vmatpush1.bf16.xpose.msra.mxu0 %v234
  %252 = vmatprep.subr.bf16.mxu0 0
  %253 = vmatpush2.bf16.xpose.msra.mxu0 0
  %254 = vmatprep.subr.bf16.mxu0 0
  %255 = vmatpush2.bf16.xpose.msra.mxu0 0
  %256 = vmatprep.subr.bf16.mxu0 0
  %257 = vmatpush2.bf16.xpose.msra.mxu0 0
  %258 = vmatprep.subr.bf16.mxu0 0
  %259 = vmatpush2.bf16.xpose.msra.mxu0 0
  %260 = vmatprep.subr.bf16.mxu0 0
  %261 = vmatpush2.bf16.xpose.msra.mxu0 0
  %262 = vmatprep.subr.bf16.mxu0 0
  %263 = vmatpush2.bf16.xpose.msra.mxu0 0
  %264 = vmatprep.subr.bf16.mxu0 0
  %265 = vmatpush2.bf16.xpose.msra.mxu0 0
  %266 = vmatprep.subr.bf16.mxu0 0
  %267 = vmatpush2.bf16.xpose.msra.mxu0 0
  %268 = vmatprep.mubr.bf16.mxu0 0
  %269 = vmatmul.mubr.bf16.gmra.mxu0 %v231
  %v270 = vpop.f32.mrf.mxu0
  %v271 = vadd.f32 %v54, %v270
  %v272 = vpop.f32.mrf.mxu0
  %v273 = vpop.f32.mrf.mxu0
  %v274 = vpop.f32.mrf.mxu0
  %275 = vdwg.mxu0
  %277 = vrot.lane.b32.xlu0 %v171, 96
  %v278 = vpop.permute.xlu0 %277
  %v280 = vsel %vm180, %v171, 0
  %v283 = vsel %vm180, %v278, 0
  %285 = vmatprep.subr.bf16.mxu0 0
  %286 = vmatpush1.bf16.xpose.msra.mxu0 0
  %287 = vmatprep.subr.bf16.mxu0 0
  %288 = vmatpush1.bf16.xpose.msra.mxu0 0
  %289 = vmatprep.subr.bf16.mxu0 0
  %290 = vmatpush1.bf16.xpose.msra.mxu0 0
  %291 = vmatprep.subr.bf16.mxu0 0
  %292 = vmatpush1.bf16.xpose.msra.mxu0 0
  %293 = vmatprep.subr.bf16.mxu0 0
  %294 = vmatpush1.bf16.xpose.msra.mxu0 0
  %295 = vmatprep.subr.bf16.mxu0 0
  %296 = vmatpush1.bf16.xpose.msra.mxu0 0
  %297 = vmatprep.subr.bf16.mxu0 0
  %298 = vmatpush1.bf16.xpose.msra.mxu0 0
  %299 = vmatprep.subr.bf16.mxu0 0
  %300 = vmatpush1.bf16.xpose.msra.mxu0 %v283
  %301 = vmatprep.subr.bf16.mxu0 0
  %302 = vmatpush2.bf16.xpose.msra.mxu0 0
  %303 = vmatprep.subr.bf16.mxu0 0
  %304 = vmatpush2.bf16.xpose.msra.mxu0 0
  %305 = vmatprep.subr.bf16.mxu0 0
  %306 = vmatpush2.bf16.xpose.msra.mxu0 0
  %307 = vmatprep.subr.bf16.mxu0 0
  %308 = vmatpush2.bf16.xpose.msra.mxu0 0
  %309 = vmatprep.subr.bf16.mxu0 0
  %310 = vmatpush2.bf16.xpose.msra.mxu0 0
  %311 = vmatprep.subr.bf16.mxu0 0
  %312 = vmatpush2.bf16.xpose.msra.mxu0 0
  %313 = vmatprep.subr.bf16.mxu0 0
  %314 = vmatpush2.bf16.xpose.msra.mxu0 0
  %315 = vmatprep.subr.bf16.mxu0 0
  %316 = vmatpush2.bf16.xpose.msra.mxu0 0
  %317 = vmatprep.mubr.bf16.mxu0 0
  %318 = vmatmul.mubr.bf16.gmra.mxu0 %v280
  %v319 = vpop.f32.mrf.mxu0
  %v320 = vadd.f32 %v55, %v319
  %v321 = vpop.f32.mrf.mxu0
  %v322 = vpop.f32.mrf.mxu0
  %v323 = vpop.f32.mrf.mxu0
  %324 = vdwg.mxu0
  %326 = vrot.lane.b32.xlu0 %v172, 96
  %v327 = vpop.permute.xlu0 %326
  %v329 = vsel %vm180, %v172, 0
  %v332 = vsel %vm180, %v327, 0
  %334 = vmatprep.subr.bf16.mxu0 0
  %335 = vmatpush1.bf16.xpose.msra.mxu0 0
  %336 = vmatprep.subr.bf16.mxu0 0
  %337 = vmatpush1.bf16.xpose.msra.mxu0 0
  %338 = vmatprep.subr.bf16.mxu0 0
  %339 = vmatpush1.bf16.xpose.msra.mxu0 0
  %340 = vmatprep.subr.bf16.mxu0 0
  %341 = vmatpush1.bf16.xpose.msra.mxu0 0
  %342 = vmatprep.subr.bf16.mxu0 0
  %343 = vmatpush1.bf16.xpose.msra.mxu0 0
  %344 = vmatprep.subr.bf16.mxu0 0
  %345 = vmatpush1.bf16.xpose.msra.mxu0 0
  %346 = vmatprep.subr.bf16.mxu0 0
  %347 = vmatpush1.bf16.xpose.msra.mxu0 0
  %348 = vmatprep.subr.bf16.mxu0 0
  %349 = vmatpush1.bf16.xpose.msra.mxu0 %v332
  %350 = vmatprep.subr.bf16.mxu0 0
  %351 = vmatpush2.bf16.xpose.msra.mxu0 0
  %352 = vmatprep.subr.bf16.mxu0 0
  %353 = vmatpush2.bf16.xpose.msra.mxu0 0
  %354 = vmatprep.subr.bf16.mxu0 0
  %355 = vmatpush2.bf16.xpose.msra.mxu0 0
  %356 = vmatprep.subr.bf16.mxu0 0
  %357 = vmatpush2.bf16.xpose.msra.mxu0 0
  %358 = vmatprep.subr.bf16.mxu0 0
  %359 = vmatpush2.bf16.xpose.msra.mxu0 0
  %360 = vmatprep.subr.bf16.mxu0 0
  %361 = vmatpush2.bf16.xpose.msra.mxu0 0
  %362 = vmatprep.subr.bf16.mxu0 0
  %363 = vmatpush2.bf16.xpose.msra.mxu0 0
  %364 = vmatprep.subr.bf16.mxu0 0
  %365 = vmatpush2.bf16.xpose.msra.mxu0 0
  %366 = vmatprep.mubr.bf16.mxu0 0
  %367 = vmatmul.mubr.bf16.gmra.mxu0 %v329
  %v368 = vpop.f32.mrf.mxu0
  %v369 = vadd.f32 %v56, %v368
  %v370 = vpop.f32.mrf.mxu0
  %v371 = vpop.f32.mrf.mxu0
  %v372 = vpop.f32.mrf.mxu0
  %373 = vdwg.mxu0
  %375 = vrot.lane.b32.xlu0 %v173, 96
  %v376 = vpop.permute.xlu0 %375
  %v378 = vsel %vm180, %v173, 0
  %v381 = vsel %vm180, %v376, 0
  %383 = vmatprep.subr.bf16.mxu0 0
  %384 = vmatpush1.bf16.xpose.msra.mxu0 0
  %385 = vmatprep.subr.bf16.mxu0 0
  %386 = vmatpush1.bf16.xpose.msra.mxu0 0
  %387 = vmatprep.subr.bf16.mxu0 0
  %388 = vmatpush1.bf16.xpose.msra.mxu0 0
  %389 = vmatprep.subr.bf16.mxu0 0
  %390 = vmatpush1.bf16.xpose.msra.mxu0 0
  %391 = vmatprep.subr.bf16.mxu0 0
  %392 = vmatpush1.bf16.xpose.msra.mxu0 0
  %393 = vmatprep.subr.bf16.mxu0 0
  %394 = vmatpush1.bf16.xpose.msra.mxu0 0
  %395 = vmatprep.subr.bf16.mxu0 0
  %396 = vmatpush1.bf16.xpose.msra.mxu0 0
  %397 = vmatprep.subr.bf16.mxu0 0
  %398 = vmatpush1.bf16.xpose.msra.mxu0 %v381
  %399 = vmatprep.subr.bf16.mxu0 0
  %400 = vmatpush2.bf16.xpose.msra.mxu0 0
  %401 = vmatprep.subr.bf16.mxu0 0
  %402 = vmatpush2.bf16.xpose.msra.mxu0 0
  %403 = vmatprep.subr.bf16.mxu0 0
  %404 = vmatpush2.bf16.xpose.msra.mxu0 0
  %405 = vmatprep.subr.bf16.mxu0 0
  %406 = vmatpush2.bf16.xpose.msra.mxu0 0
  %407 = vmatprep.subr.bf16.mxu0 0
  %408 = vmatpush2.bf16.xpose.msra.mxu0 0
  %409 = vmatprep.subr.bf16.mxu0 0
  %410 = vmatpush2.bf16.xpose.msra.mxu0 0
  %411 = vmatprep.subr.bf16.mxu0 0
  %412 = vmatpush2.bf16.xpose.msra.mxu0 0
  %413 = vmatprep.subr.bf16.mxu0 0
  %414 = vmatpush2.bf16.xpose.msra.mxu0 0
  %415 = vmatprep.mubr.bf16.mxu0 0
  %416 = vmatmul.mubr.bf16.gmra.mxu0 %v378
  %v417 = vpop.f32.mrf.mxu0
  %v418 = vadd.f32 %v57, %v417
  %v419 = vpop.f32.mrf.mxu0
  %v420 = vpop.f32.mrf.mxu0
  %v421 = vpop.f32.mrf.mxu0
  %422 = vdwg.mxu0
  %424 = vrot.lane.b32.xlu0 %v174, 96
  %v425 = vpop.permute.xlu0 %424
  %v427 = vsel %vm180, %v174, 0
  %v430 = vsel %vm180, %v425, 0
  %432 = vmatprep.subr.bf16.mxu0 0
  %433 = vmatpush1.bf16.xpose.msra.mxu0 0
  %434 = vmatprep.subr.bf16.mxu0 0
  %435 = vmatpush1.bf16.xpose.msra.mxu0 0
  %436 = vmatprep.subr.bf16.mxu0 0
  %437 = vmatpush1.bf16.xpose.msra.mxu0 0
  %438 = vmatprep.subr.bf16.mxu0 0
  %439 = vmatpush1.bf16.xpose.msra.mxu0 0
  %440 = vmatprep.subr.bf16.mxu0 0
  %441 = vmatpush1.bf16.xpose.msra.mxu0 0
  %442 = vmatprep.subr.bf16.mxu0 0
  %443 = vmatpush1.bf16.xpose.msra.mxu0 0
  %444 = vmatprep.subr.bf16.mxu0 0
  %445 = vmatpush1.bf16.xpose.msra.mxu0 0
  %446 = vmatprep.subr.bf16.mxu0 0
  %447 = vmatpush1.bf16.xpose.msra.mxu0 %v430
  %448 = vmatprep.subr.bf16.mxu0 0
  %449 = vmatpush2.bf16.xpose.msra.mxu0 0
  %450 = vmatprep.subr.bf16.mxu0 0
  %451 = vmatpush2.bf16.xpose.msra.mxu0 0
  %452 = vmatprep.subr.bf16.mxu0 0
  %453 = vmatpush2.bf16.xpose.msra.mxu0 0
  %454 = vmatprep.subr.bf16.mxu0 0
  %455 = vmatpush2.bf16.xpose.msra.mxu0 0
  %456 = vmatprep.subr.bf16.mxu0 0
  %457 = vmatpush2.bf16.xpose.msra.mxu0 0
  %458 = vmatprep.subr.bf16.mxu0 0
  %459 = vmatpush2.bf16.xpose.msra.mxu0 0
  %460 = vmatprep.subr.bf16.mxu0 0
  %461 = vmatpush2.bf16.xpose.msra.mxu0 0
  %462 = vmatprep.subr.bf16.mxu0 0
  %463 = vmatpush2.bf16.xpose.msra.mxu0 0
  %464 = vmatprep.mubr.bf16.mxu0 0
  %465 = vmatmul.mubr.bf16.gmra.mxu0 %v427
  %v466 = vpop.f32.mrf.mxu0
  %v467 = vadd.f32 %v58, %v466
  %v468 = vpop.f32.mrf.mxu0
  %v469 = vpop.f32.mrf.mxu0
  %v470 = vpop.f32.mrf.mxu0
  %471 = vdwg.mxu0
  %473 = vrot.lane.b32.xlu0 %v175, 96
  %v474 = vpop.permute.xlu0 %473
  %v476 = vsel %vm180, %v175, 0
  %v479 = vsel %vm180, %v474, 0
  %481 = vmatprep.subr.bf16.mxu0 0
  %482 = vmatpush1.bf16.xpose.msra.mxu0 0
  %483 = vmatprep.subr.bf16.mxu0 0
  %484 = vmatpush1.bf16.xpose.msra.mxu0 0
  %485 = vmatprep.subr.bf16.mxu0 0
  %486 = vmatpush1.bf16.xpose.msra.mxu0 0
  %487 = vmatprep.subr.bf16.mxu0 0
  %488 = vmatpush1.bf16.xpose.msra.mxu0 0
  %489 = vmatprep.subr.bf16.mxu0 0
  %490 = vmatpush1.bf16.xpose.msra.mxu0 0
  %491 = vmatprep.subr.bf16.mxu0 0
  %492 = vmatpush1.bf16.xpose.msra.mxu0 0
  %493 = vmatprep.subr.bf16.mxu0 0
  %494 = vmatpush1.bf16.xpose.msra.mxu0 0
  %495 = vmatprep.subr.bf16.mxu0 0
  %496 = vmatpush1.bf16.xpose.msra.mxu0 %v479
  %497 = vmatprep.subr.bf16.mxu0 0
  %498 = vmatpush2.bf16.xpose.msra.mxu0 0
  %499 = vmatprep.subr.bf16.mxu0 0
  %500 = vmatpush2.bf16.xpose.msra.mxu0 0
  %501 = vmatprep.subr.bf16.mxu0 0
  %502 = vmatpush2.bf16.xpose.msra.mxu0 0
  %503 = vmatprep.subr.bf16.mxu0 0
  %504 = vmatpush2.bf16.xpose.msra.mxu0 0
  %505 = vmatprep.subr.bf16.mxu0 0
  %506 = vmatpush2.bf16.xpose.msra.mxu0 0
  %507 = vmatprep.subr.bf16.mxu0 0
  %508 = vmatpush2.bf16.xpose.msra.mxu0 0
  %509 = vmatprep.subr.bf16.mxu0 0
  %510 = vmatpush2.bf16.xpose.msra.mxu0 0
  %511 = vmatprep.subr.bf16.mxu0 0
  %512 = vmatpush2.bf16.xpose.msra.mxu0 0
  %513 = vmatprep.mubr.bf16.mxu0 0
  %514 = vmatmul.mubr.bf16.gmra.mxu0 %v476
  %v515 = vpop.f32.mrf.mxu0
  %v516 = vadd.f32 %v59, %v515
  %v517 = vpop.f32.mrf.mxu0
  %v518 = vpop.f32.mrf.mxu0
  %v519 = vpop.f32.mrf.mxu0
  %520 = vdwg.mxu0
  %522 = vrot.lane.b32.xlu0 %v176, 96
  %v523 = vpop.permute.xlu0 %522
  %v525 = vsel %vm180, %v176, 0
  %v528 = vsel %vm180, %v523, 0
  %530 = vmatprep.subr.bf16.mxu0 0
  %531 = vmatpush1.bf16.xpose.msra.mxu0 0
  %532 = vmatprep.subr.bf16.mxu0 0
  %533 = vmatpush1.bf16.xpose.msra.mxu0 0
  %534 = vmatprep.subr.bf16.mxu0 0
  %535 = vmatpush1.bf16.xpose.msra.mxu0 0
  %536 = vmatprep.subr.bf16.mxu0 0
  %537 = vmatpush1.bf16.xpose.msra.mxu0 0
  %538 = vmatprep.subr.bf16.mxu0 0
  %539 = vmatpush1.bf16.xpose.msra.mxu0 0
  %540 = vmatprep.subr.bf16.mxu0 0
  %541 = vmatpush1.bf16.xpose.msra.mxu0 0
  %542 = vmatprep.subr.bf16.mxu0 0
  %543 = vmatpush1.bf16.xpose.msra.mxu0 0
  %544 = vmatprep.subr.bf16.mxu0 0
  %545 = vmatpush1.bf16.xpose.msra.mxu0 %v528
  %546 = vmatprep.subr.bf16.mxu0 0
  %547 = vmatpush2.bf16.xpose.msra.mxu0 0
  %548 = vmatprep.subr.bf16.mxu0 0
  %549 = vmatpush2.bf16.xpose.msra.mxu0 0
  %550 = vmatprep.subr.bf16.mxu0 0
  %551 = vmatpush2.bf16.xpose.msra.mxu0 0
  %552 = vmatprep.subr.bf16.mxu0 0
  %553 = vmatpush2.bf16.xpose.msra.mxu0 0
  %554 = vmatprep.subr.bf16.mxu0 0
  %555 = vmatpush2.bf16.xpose.msra.mxu0 0
  %556 = vmatprep.subr.bf16.mxu0 0
  %557 = vmatpush2.bf16.xpose.msra.mxu0 0
  %558 = vmatprep.subr.bf16.mxu0 0
  %559 = vmatpush2.bf16.xpose.msra.mxu0 0
  %560 = vmatprep.subr.bf16.mxu0 0
  %561 = vmatpush2.bf16.xpose.msra.mxu0 0
  %562 = vmatprep.mubr.bf16.mxu0 0
  %563 = vmatmul.mubr.bf16.gmra.mxu0 %v525
  %v564 = vpop.f32.mrf.mxu0
  %v565 = vadd.f32 %v60, %v564
  %v566 = vpop.f32.mrf.mxu0
  %v567 = vpop.f32.mrf.mxu0
  %v568 = vpop.f32.mrf.mxu0
  %569 = vdwg.mxu0
  %v570 = vsel %vm180, %v222, -inf
  %571 = vmax.xlane.f32.xlu0 %v570
  %v572 = vpop.xlane.xlu0 %571
  %v573 = vsel %vm180, %v271, -inf
  %574 = vmax.xlane.f32.xlu0 %v573
  %v575 = vpop.xlane.xlu0 %574
  %v576 = vsel %vm180, %v320, -inf
  %577 = vmax.xlane.f32.xlu0 %v576
  %v578 = vpop.xlane.xlu0 %577
  %v579 = vsel %vm180, %v369, -inf
  %580 = vmax.xlane.f32.xlu0 %v579
  %v581 = vpop.xlane.xlu0 %580
  %v582 = vsel %vm180, %v418, -inf
  %583 = vmax.xlane.f32.xlu0 %v582
  %v584 = vpop.xlane.xlu0 %583
  %v585 = vsel %vm180, %v467, -inf
  %586 = vmax.xlane.f32.xlu0 %v585
  %v587 = vpop.xlane.xlu0 %586
  %v588 = vsel %vm180, %v516, -inf
  %589 = vmax.xlane.f32.xlu0 %v588
  %v590 = vpop.xlane.xlu0 %589
  %v591 = vsel %vm180, %v565, -inf
  %592 = vmax.xlane.f32.xlu0 %v591
  %v593 = vpop.xlane.xlu0 %592
  %v594 = vsub.f32 %v222, %v572
  %v595 = vsub.f32 %v271, %v575
  %v596 = vsub.f32 %v320, %v578
  %v597 = vsub.f32 %v369, %v581
  %v598 = vsub.f32 %v418, %v584
  %v599 = vsub.f32 %v467, %v587
  %v600 = vsub.f32 %v516, %v590
  %v601 = vsub.f32 %v565, %v593
  %v602 = vmul.f32 %v594, 1.442695
  %v603 = vpow.pop %v602
  %v604 = vmul.f32 %v595, 1.442695
  %v605 = vpow.pop %v604
  %v606 = vmul.f32 %v596, 1.442695
  %v607 = vpow.pop %v606
  %v608 = vmul.f32 %v597, 1.442695
  %v609 = vpow.pop %v608
  %v610 = vmul.f32 %v598, 1.442695
  %v611 = vpow.pop %v610
  %v612 = vmul.f32 %v599, 1.442695
  %v613 = vpow.pop %v612
  %v614 = vmul.f32 %v600, 1.442695
  %v615 = vpow.pop %v614
  %v616 = vmul.f32 %v601, 1.442695
  %v617 = vpow.pop %v616
  %v618 = vsel %vm180, %v603, 0.0
  %619 = vadd.xlane.f32.xlu0 %v618
  %v620 = vpop.xlane.xlu0 %619
  %v621 = vsel %vm180, %v605, 0.0
  %622 = vadd.xlane.f32.xlu0 %v621
  %v623 = vpop.xlane.xlu0 %622
  %v624 = vsel %vm180, %v607, 0.0
  %625 = vadd.xlane.f32.xlu0 %v624
  %v626 = vpop.xlane.xlu0 %625
  %v627 = vsel %vm180, %v609, 0.0
  %628 = vadd.xlane.f32.xlu0 %v627
  %v629 = vpop.xlane.xlu0 %628
  %v630 = vsel %vm180, %v611, 0.0
  %631 = vadd.xlane.f32.xlu0 %v630
  %v632 = vpop.xlane.xlu0 %631
  %v633 = vsel %vm180, %v613, 0.0
  %634 = vadd.xlane.f32.xlu0 %v633
  %v635 = vpop.xlane.xlu0 %634
  %v636 = vsel %vm180, %v615, 0.0
  %637 = vadd.xlane.f32.xlu0 %v636
  %v638 = vpop.xlane.xlu0 %637
  %v639 = vsel %vm180, %v617, 0.0
  %640 = vadd.xlane.f32.xlu0 %v639
  %v641 = vpop.xlane.xlu0 %640
  %v642 = vrcp.pop %v620
  %v643 = vrcp.pop %v623
  %v644 = vrcp.pop %v626
  %v645 = vrcp.pop %v629
  %v646 = vrcp.pop %v632
  %v647 = vrcp.pop %v635
  %v648 = vrcp.pop %v638
  %v649 = vrcp.pop %v641
  %v650 = vmul.f32 %v603, %v642
  %v651 = vmul.f32 %v605, %v643
  %v652 = vmul.f32 %v607, %v644
  %v653 = vmul.f32 %v609, %v645
  %v654 = vmul.f32 %v611, %v646
  %v655 = vmul.f32 %v613, %v647
  %v656 = vmul.f32 %v615, %v648
  %v657 = vmul.f32 %v617, %v649
  %v658 = vpack.c.bf16 %v650, %v650
  %v659 = vpack.c.bf16 %v651, %v651
  %v660 = vpack.c.bf16 %v652, %v652
  %v661 = vpack.c.bf16 %v653, %v653
  %v662 = vpack.c.bf16 %v654, %v654
  %v663 = vpack.c.bf16 %v655, %v655
  %v664 = vpack.c.bf16 %v656, %v656
  %v665 = vpack.c.bf16 %v657, %v657
  %666 = vrot.lane.b32.xlu0 %v169, 64
  %v667 = vpop.permute.xlu0 %666
  %v669 = vsel %vm180, %v658, 0
  %vm671 = vcmask 1043456
  %v673 = vsel %vm671, %v667, 0
  %675 = vmatprep.subr.bf16.mxu0 0
  %676 = vmatpush1.bf16.msra.mxu0 0
  %677 = vmatprep.subr.bf16.mxu0 0
  %678 = vmatpush1.bf16.msra.mxu0 0
  %679 = vmatprep.subr.bf16.mxu0 0
  %680 = vmatpush1.bf16.msra.mxu0 0
  %681 = vmatprep.subr.bf16.mxu0 0
  %682 = vmatpush1.bf16.msra.mxu0 0
  %683 = vmatprep.subr.bf16.mxu0 0
  %684 = vmatpush1.bf16.msra.mxu0 0
  %685 = vmatprep.subr.bf16.mxu0 0
  %686 = vmatpush1.bf16.msra.mxu0 0
  %687 = vmatprep.subr.bf16.mxu0 0
  %688 = vmatpush1.bf16.msra.mxu0 0
  %689 = vmatprep.subr.bf16.mxu0 0
  %690 = vmatpush1.bf16.msra.mxu0 %v673
  %691 = vmatprep.subr.bf16.mxu0 0
  %692 = vmatpush2.bf16.msra.mxu0 0
  %693 = vmatprep.subr.bf16.mxu0 0
  %694 = vmatpush2.bf16.msra.mxu0 0
  %695 = vmatprep.subr.bf16.mxu0 0
  %696 = vmatpush2.bf16.msra.mxu0 0
  %697 = vmatprep.subr.bf16.mxu0 0
  %698 = vmatpush2.bf16.msra.mxu0 0
  %699 = vmatprep.subr.bf16.mxu0 0
  %700 = vmatpush2.bf16.msra.mxu0 0
  %701 = vmatprep.subr.bf16.mxu0 0
  %702 = vmatpush2.bf16.msra.mxu0 0
  %703 = vmatprep.subr.bf16.mxu0 0
  %704 = vmatpush2.bf16.msra.mxu0 0
  %705 = vmatprep.subr.bf16.mxu0 0
  %706 = vmatpush2.bf16.msra.mxu0 0
  %707 = vmatprep.mubr.bf16.mxu0 0
  %708 = vmatmul.mubr.bf16.gmra.mxu0 %v669
  %v709 = vpop.f32.mrf.mxu0
  %v710 = vadd.f32 0.0, %v709
  %v711 = vpop.f32.mrf.mxu0
  %v712 = vpop.f32.mrf.mxu0
  %v713 = vpop.f32.mrf.mxu0
  %714 = vdwg.mxu0
  %715 = vrot.lane.b32.xlu0 %v170, 64
  %v716 = vpop.permute.xlu0 %715
  %v718 = vsel %vm180, %v659, 0
  %v721 = vsel %vm671, %v716, 0
  %723 = vmatprep.subr.bf16.mxu0 0
  %724 = vmatpush1.bf16.msra.mxu0 0
  %725 = vmatprep.subr.bf16.mxu0 0
  %726 = vmatpush1.bf16.msra.mxu0 0
  %727 = vmatprep.subr.bf16.mxu0 0
  %728 = vmatpush1.bf16.msra.mxu0 0
  %729 = vmatprep.subr.bf16.mxu0 0
  %730 = vmatpush1.bf16.msra.mxu0 0
  %731 = vmatprep.subr.bf16.mxu0 0
  %732 = vmatpush1.bf16.msra.mxu0 0
  %733 = vmatprep.subr.bf16.mxu0 0
  %734 = vmatpush1.bf16.msra.mxu0 0
  %735 = vmatprep.subr.bf16.mxu0 0
  %736 = vmatpush1.bf16.msra.mxu0 0
  %737 = vmatprep.subr.bf16.mxu0 0
  %738 = vmatpush1.bf16.msra.mxu0 %v721
  %739 = vmatprep.subr.bf16.mxu0 0
  %740 = vmatpush2.bf16.msra.mxu0 0
  %741 = vmatprep.subr.bf16.mxu0 0
  %742 = vmatpush2.bf16.msra.mxu0 0
  %743 = vmatprep.subr.bf16.mxu0 0
  %744 = vmatpush2.bf16.msra.mxu0 0
  %745 = vmatprep.subr.bf16.mxu0 0
  %746 = vmatpush2.bf16.msra.mxu0 0
  %747 = vmatprep.subr.bf16.mxu0 0
  %748 = vmatpush2.bf16.msra.mxu0 0
  %749 = vmatprep.subr.bf16.mxu0 0
  %750 = vmatpush2.bf16.msra.mxu0 0
  %751 = vmatprep.subr.bf16.mxu0 0
  %752 = vmatpush2.bf16.msra.mxu0 0
  %753 = vmatprep.subr.bf16.mxu0 0
  %754 = vmatpush2.bf16.msra.mxu0 0
  %755 = vmatprep.mubr.bf16.mxu0 0
  %756 = vmatmul.mubr.bf16.gmra.mxu0 %v718
  %v757 = vpop.f32.mrf.mxu0
  %v758 = vadd.f32 0.0, %v757
  %v759 = vpop.f32.mrf.mxu0
  %v760 = vpop.f32.mrf.mxu0
  %v761 = vpop.f32.mrf.mxu0
  %762 = vdwg.mxu0
  %763 = vrot.lane.b32.xlu0 %v171, 64
  %v764 = vpop.permute.xlu0 %763
  %v766 = vsel %vm180, %v660, 0
  %v769 = vsel %vm671, %v764, 0
  %771 = vmatprep.subr.bf16.mxu0 0
  %772 = vmatpush1.bf16.msra.mxu0 0
  %773 = vmatprep.subr.bf16.mxu0 0
  %774 = vmatpush1.bf16.msra.mxu0 0
  %775 = vmatprep.subr.bf16.mxu0 0
  %776 = vmatpush1.bf16.msra.mxu0 0
  %777 = vmatprep.subr.bf16.mxu0 0
  %778 = vmatpush1.bf16.msra.mxu0 0
  %779 = vmatprep.subr.bf16.mxu0 0
  %780 = vmatpush1.bf16.msra.mxu0 0
  %781 = vmatprep.subr.bf16.mxu0 0
  %782 = vmatpush1.bf16.msra.mxu0 0
  %783 = vmatprep.subr.bf16.mxu0 0
  %784 = vmatpush1.bf16.msra.mxu0 0
  %785 = vmatprep.subr.bf16.mxu0 0
  %786 = vmatpush1.bf16.msra.mxu0 %v769
  %787 = vmatprep.subr.bf16.mxu0 0
  %788 = vmatpush2.bf16.msra.mxu0 0
  %789 = vmatprep.subr.bf16.mxu0 0
  %790 = vmatpush2.bf16.msra.mxu0 0
  %791 = vmatprep.subr.bf16.mxu0 0
  %792 = vmatpush2.bf16.msra.mxu0 0
  %793 = vmatprep.subr.bf16.mxu0 0
  %794 = vmatpush2.bf16.msra.mxu0 0
  %795 = vmatprep.subr.bf16.mxu0 0
  %796 = vmatpush2.bf16.msra.mxu0 0
  %797 = vmatprep.subr.bf16.mxu0 0
  %798 = vmatpush2.bf16.msra.mxu0 0
  %799 = vmatprep.subr.bf16.mxu0 0
  %800 = vmatpush2.bf16.msra.mxu0 0
  %801 = vmatprep.subr.bf16.mxu0 0
  %802 = vmatpush2.bf16.msra.mxu0 0
  %803 = vmatprep.mubr.bf16.mxu0 0
  %804 = vmatmul.mubr.bf16.gmra.mxu0 %v766
  %v805 = vpop.f32.mrf.mxu0
  %v806 = vadd.f32 0.0, %v805
  %v807 = vpop.f32.mrf.mxu0
  %v808 = vpop.f32.mrf.mxu0
  %v809 = vpop.f32.mrf.mxu0
  %810 = vdwg.mxu0
  %811 = vrot.lane.b32.xlu0 %v172, 64
  %v812 = vpop.permute.xlu0 %811
  %v814 = vsel %vm180, %v661, 0
  %v817 = vsel %vm671, %v812, 0
  %819 = vmatprep.subr.bf16.mxu0 0
  %820 = vmatpush1.bf16.msra.mxu0 0
  %821 = vmatprep.subr.bf16.mxu0 0
  %822 = vmatpush1.bf16.msra.mxu0 0
  %823 = vmatprep.subr.bf16.mxu0 0
  %824 = vmatpush1.bf16.msra.mxu0 0
  %825 = vmatprep.subr.bf16.mxu0 0
  %826 = vmatpush1.bf16.msra.mxu0 0
  %827 = vmatprep.subr.bf16.mxu0 0
  %828 = vmatpush1.bf16.msra.mxu0 0
  %829 = vmatprep.subr.bf16.mxu0 0
  %830 = vmatpush1.bf16.msra.mxu0 0
  %831 = vmatprep.subr.bf16.mxu0 0
  %832 = vmatpush1.bf16.msra.mxu0 0
  %833 = vmatprep.subr.bf16.mxu0 0
  %834 = vmatpush1.bf16.msra.mxu0 %v817
  %835 = vmatprep.subr.bf16.mxu0 0
  %836 = vmatpush2.bf16.msra.mxu0 0
  %837 = vmatprep.subr.bf16.mxu0 0
  %838 = vmatpush2.bf16.msra.mxu0 0
  %839 = vmatprep.subr.bf16.mxu0 0
  %840 = vmatpush2.bf16.msra.mxu0 0
  %841 = vmatprep.subr.bf16.mxu0 0
  %842 = vmatpush2.bf16.msra.mxu0 0
  %843 = vmatprep.subr.bf16.mxu0 0
  %844 = vmatpush2.bf16.msra.mxu0 0
  %845 = vmatprep.subr.bf16.mxu0 0
  %846 = vmatpush2.bf16.msra.mxu0 0
  %847 = vmatprep.subr.bf16.mxu0 0
  %848 = vmatpush2.bf16.msra.mxu0 0
  %849 = vmatprep.subr.bf16.mxu0 0
  %850 = vmatpush2.bf16.msra.mxu0 0
  %851 = vmatprep.mubr.bf16.mxu0 0
  %852 = vmatmul.mubr.bf16.gmra.mxu0 %v814
  %v853 = vpop.f32.mrf.mxu0
  %v854 = vadd.f32 0.0, %v853
  %v855 = vpop.f32.mrf.mxu0
  %v856 = vpop.f32.mrf.mxu0
  %v857 = vpop.f32.mrf.mxu0
  %858 = vdwg.mxu0
  %859 = vrot.lane.b32.xlu0 %v173, 64
  %v860 = vpop.permute.xlu0 %859
  %v862 = vsel %vm180, %v662, 0
  %v865 = vsel %vm671, %v860, 0
  %867 = vmatprep.subr.bf16.mxu0 0
  %868 = vmatpush1.bf16.msra.mxu0 0
  %869 = vmatprep.subr.bf16.mxu0 0
  %870 = vmatpush1.bf16.msra.mxu0 0
  %871 = vmatprep.subr.bf16.mxu0 0
  %872 = vmatpush1.bf16.msra.mxu0 0
  %873 = vmatprep.subr.bf16.mxu0 0
  %874 = vmatpush1.bf16.msra.mxu0 0
  %875 = vmatprep.subr.bf16.mxu0 0
  %876 = vmatpush1.bf16.msra.mxu0 0
  %877 = vmatprep.subr.bf16.mxu0 0
  %878 = vmatpush1.bf16.msra.mxu0 0
  %879 = vmatprep.subr.bf16.mxu0 0
  %880 = vmatpush1.bf16.msra.mxu0 0
  %881 = vmatprep.subr.bf16.mxu0 0
  %882 = vmatpush1.bf16.msra.mxu0 %v865
  %883 = vmatprep.subr.bf16.mxu0 0
  %884 = vmatpush2.bf16.msra.mxu0 0
  %885 = vmatprep.subr.bf16.mxu0 0
  %886 = vmatpush2.bf16.msra.mxu0 0
  %887 = vmatprep.subr.bf16.mxu0 0
  %888 = vmatpush2.bf16.msra.mxu0 0
  %889 = vmatprep.subr.bf16.mxu0 0
  %890 = vmatpush2.bf16.msra.mxu0 0
  %891 = vmatprep.subr.bf16.mxu0 0
  %892 = vmatpush2.bf16.msra.mxu0 0
  %893 = vmatprep.subr.bf16.mxu0 0
  %894 = vmatpush2.bf16.msra.mxu0 0
  %895 = vmatprep.subr.bf16.mxu0 0
  %896 = vmatpush2.bf16.msra.mxu0 0
  %897 = vmatprep.subr.bf16.mxu0 0
  %898 = vmatpush2.bf16.msra.mxu0 0
  %899 = vmatprep.mubr.bf16.mxu0 0
  %900 = vmatmul.mubr.bf16.gmra.mxu0 %v862
  %v901 = vpop.f32.mrf.mxu0
  %v902 = vadd.f32 0.0, %v901
  %v903 = vpop.f32.mrf.mxu0
  %v904 = vpop.f32.mrf.mxu0
  %v905 = vpop.f32.mrf.mxu0
  %906 = vdwg.mxu0
  %907 = vrot.lane.b32.xlu0 %v174, 64
  %v908 = vpop.permute.xlu0 %907
  %v910 = vsel %vm180, %v663, 0
  %v913 = vsel %vm671, %v908, 0
  %915 = vmatprep.subr.bf16.mxu0 0
  %916 = vmatpush1.bf16.msra.mxu0 0
  %917 = vmatprep.subr.bf16.mxu0 0
  %918 = vmatpush1.bf16.msra.mxu0 0
  %919 = vmatprep.subr.bf16.mxu0 0
  %920 = vmatpush1.bf16.msra.mxu0 0
  %921 = vmatprep.subr.bf16.mxu0 0
  %922 = vmatpush1.bf16.msra.mxu0 0
  %923 = vmatprep.subr.bf16.mxu0 0
  %924 = vmatpush1.bf16.msra.mxu0 0
  %925 = vmatprep.subr.bf16.mxu0 0
  %926 = vmatpush1.bf16.msra.mxu0 0
  %927 = vmatprep.subr.bf16.mxu0 0
  %928 = vmatpush1.bf16.msra.mxu0 0
  %929 = vmatprep.subr.bf16.mxu0 0
  %930 = vmatpush1.bf16.msra.mxu0 %v913
  %931 = vmatprep.subr.bf16.mxu0 0
  %932 = vmatpush2.bf16.msra.mxu0 0
  %933 = vmatprep.subr.bf16.mxu0 0
  %934 = vmatpush2.bf16.msra.mxu0 0
  %935 = vmatprep.subr.bf16.mxu0 0
  %936 = vmatpush2.bf16.msra.mxu0 0
  %937 = vmatprep.subr.bf16.mxu0 0
  %938 = vmatpush2.bf16.msra.mxu0 0
  %939 = vmatprep.subr.bf16.mxu0 0
  %940 = vmatpush2.bf16.msra.mxu0 0
  %941 = vmatprep.subr.bf16.mxu0 0
  %942 = vmatpush2.bf16.msra.mxu0 0
  %943 = vmatprep.subr.bf16.mxu0 0
  %944 = vmatpush2.bf16.msra.mxu0 0
  %945 = vmatprep.subr.bf16.mxu0 0
  %946 = vmatpush2.bf16.msra.mxu0 0
  %947 = vmatprep.mubr.bf16.mxu0 0
  %948 = vmatmul.mubr.bf16.gmra.mxu0 %v910
  %v949 = vpop.f32.mrf.mxu0
  %v950 = vadd.f32 0.0, %v949
  %v951 = vpop.f32.mrf.mxu0
  %v952 = vpop.f32.mrf.mxu0
  %v953 = vpop.f32.mrf.mxu0
  %954 = vdwg.mxu0
  %955 = vrot.lane.b32.xlu0 %v175, 64
  %v956 = vpop.permute.xlu0 %955
  %v958 = vsel %vm180, %v664, 0
  %v961 = vsel %vm671, %v956, 0
  %963 = vmatprep.subr.bf16.mxu0 0
  %964 = vmatpush1.bf16.msra.mxu0 0
  %965 = vmatprep.subr.bf16.mxu0 0
  %966 = vmatpush1.bf16.msra.mxu0 0
  %967 = vmatprep.subr.bf16.mxu0 0
  %968 = vmatpush1.bf16.msra.mxu0 0
  %969 = vmatprep.subr.bf16.mxu0 0
  %970 = vmatpush1.bf16.msra.mxu0 0
  %971 = vmatprep.subr.bf16.mxu0 0
  %972 = vmatpush1.bf16.msra.mxu0 0
  %973 = vmatprep.subr.bf16.mxu0 0
  %974 = vmatpush1.bf16.msra.mxu0 0
  %975 = vmatprep.subr.bf16.mxu0 0
  %976 = vmatpush1.bf16.msra.mxu0 0
  %977 = vmatprep.subr.bf16.mxu0 0
  %978 = vmatpush1.bf16.msra.mxu0 %v961
  %979 = vmatprep.subr.bf16.mxu0 0
  %980 = vmatpush2.bf16.msra.mxu0 0
  %981 = vmatprep.subr.bf16.mxu0 0
  %982 = vmatpush2.bf16.msra.mxu0 0
  %983 = vmatprep.subr.bf16.mxu0 0
  %984 = vmatpush2.bf16.msra.mxu0 0
  %985 = vmatprep.subr.bf16.mxu0 0
  %986 = vmatpush2.bf16.msra.mxu0 0
  %987 = vmatprep.subr.bf16.mxu0 0
  %988 = vmatpush2.bf16.msra.mxu0 0
  %989 = vmatprep.subr.bf16.mxu0 0
  %990 = vmatpush2.bf16.msra.mxu0 0
  %991 = vmatprep.subr.bf16.mxu0 0
  %992 = vmatpush2.bf16.msra.mxu0 0
  %993 = vmatprep.subr.bf16.mxu0 0
  %994 = vmatpush2.bf16.msra.mxu0 0
  %995 = vmatprep.mubr.bf16.mxu0 0
  %996 = vmatmul.mubr.bf16.gmra.mxu0 %v958
  %v997 = vpop.f32.mrf.mxu0
  %v998 = vadd.f32 0.0, %v997
  %v999 = vpop.f32.mrf.mxu0
  %v1000 = vpop.f32.mrf.mxu0
  %v1001 = vpop.f32.mrf.mxu0
  %1002 = vdwg.mxu0
  %1003 = vrot.lane.b32.xlu0 %v176, 64
  %v1004 = vpop.permute.xlu0 %1003
  %v1006 = vsel %vm180, %v665, 0
  %v1009 = vsel %vm671, %v1004, 0
  %1011 = vmatprep.subr.bf16.mxu0 0
  %1012 = vmatpush1.bf16.msra.mxu0 0
  %1013 = vmatprep.subr.bf16.mxu0 0
  %1014 = vmatpush1.bf16.msra.mxu0 0
  %1015 = vmatprep.subr.bf16.mxu0 0
  %1016 = vmatpush1.bf16.msra.mxu0 0
  %1017 = vmatprep.subr.bf16.mxu0 0
  %1018 = vmatpush1.bf16.msra.mxu0 0
  %1019 = vmatprep.subr.bf16.mxu0 0
  %1020 = vmatpush1.bf16.msra.mxu0 0
  %1021 = vmatprep.subr.bf16.mxu0 0
  %1022 = vmatpush1.bf16.msra.mxu0 0
  %1023 = vmatprep.subr.bf16.mxu0 0
  %1024 = vmatpush1.bf16.msra.mxu0 0
  %1025 = vmatprep.subr.bf16.mxu0 0
  %1026 = vmatpush1.bf16.msra.mxu0 %v1009
  %1027 = vmatprep.subr.bf16.mxu0 0
  %1028 = vmatpush2.bf16.msra.mxu0 0
  %1029 = vmatprep.subr.bf16.mxu0 0
  %1030 = vmatpush2.bf16.msra.mxu0 0
  %1031 = vmatprep.subr.bf16.mxu0 0
  %1032 = vmatpush2.bf16.msra.mxu0 0
  %1033 = vmatprep.subr.bf16.mxu0 0
  %1034 = vmatpush2.bf16.msra.mxu0 0
  %1035 = vmatprep.subr.bf16.mxu0 0
  %1036 = vmatpush2.bf16.msra.mxu0 0
  %1037 = vmatprep.subr.bf16.mxu0 0
  %1038 = vmatpush2.bf16.msra.mxu0 0
  %1039 = vmatprep.subr.bf16.mxu0 0
  %1040 = vmatpush2.bf16.msra.mxu0 0
  %1041 = vmatprep.subr.bf16.mxu0 0
  %1042 = vmatpush2.bf16.msra.mxu0 0
  %1043 = vmatprep.mubr.bf16.mxu0 0
  %1044 = vmatmul.mubr.bf16.gmra.mxu0 %v1006
  %v1045 = vpop.f32.mrf.mxu0
  %v1046 = vadd.f32 0.0, %v1045
  %v1047 = vpop.f32.mrf.mxu0
  %v1048 = vpop.f32.mrf.mxu0
  %v1049 = vpop.f32.mrf.mxu0
  %1050 = vdwg.mxu0
  %1052 = vrot.lane.b32.xlu0 %v758, 8
  %v1053 = vpop.permute.xlu0 %1052
  %1056 = vrot.lane.b32.xlu0 %v806, 16
  %v1057 = vpop.permute.xlu0 %1056
  %1060 = vrot.lane.b32.xlu0 %v854, 24
  %v1061 = vpop.permute.xlu0 %1060
  %v1063 = vsel %vm180, %v710, %v1053
  %vm1064 = vcmask 130048
  %v1065 = vsel %vm1064, %v1063, %v1057
  %vm1066 = vcmask 195584
  %v1067 = vsel %vm1066, %v1065, %v1061
  %1069 = vrot.lane.b32.xlu0 %v950, 8
  %v1070 = vpop.permute.xlu0 %1069
  %1073 = vrot.lane.b32.xlu0 %v998, 16
  %v1074 = vpop.permute.xlu0 %1073
  %1077 = vrot.lane.b32.xlu0 %v1046, 24
  %v1078 = vpop.permute.xlu0 %1077
  %v1080 = vsel %vm180, %v902, %v1070
  %v1081 = vsel %vm1064, %v1080, %v1074
  %v1082 = vsel %vm1066, %v1081, %v1078
  %v1083 = vpack.c.bf16 %v1082, %v1067
  %v1084 = vld [vmem:[%s4] sm:$0xf]
  %v1085 = vld [vmem:[%s4 + $0x4] sm:$0xf]
  %v1086 = vld [vmem:[%s4 + $0x8] sm:$0xf]
  %v1087 = vld [vmem:[%s4 + $0xc] sm:$0xf]
  %v1092 = vunpack.c.l.b16 %v1084
  %v1093 = vunpack.c.l.b16 %v1085
  %v1094 = vunpack.c.l.b16 %v1086
  %v1095 = vunpack.c.l.b16 %v1087
  %v1096 = vpack.c.b16 %v1093, %v1092
  %v1097 = vpack.c.b16 %v1095, %v1094
  %v1101 = vsel %vm64, %v1083, 0
  %1103 = vmatprep.subr.bf16.mxu0 0
  %1104 = vmatpush1.bf16.msra.mxu0 0
  %1105 = vmatprep.subr.bf16.mxu0 0
  %1106 = vmatpush1.bf16.msra.mxu0 0
  %1107 = vmatprep.subr.bf16.mxu0 0
  %1108 = vmatpush1.bf16.msra.mxu0 0
  %1109 = vmatprep.subr.bf16.mxu0 0
  %1110 = vmatpush1.bf16.msra.mxu0 0
  %1111 = vmatprep.subr.bf16.mxu0 0
  %1112 = vmatpush1.bf16.msra.mxu0 0
  %1113 = vmatprep.subr.bf16.mxu0 0
  %1114 = vmatpush1.bf16.msra.mxu0 0
  %1115 = vmatprep.subr.bf16.mxu0 0
  %1116 = vmatpush1.bf16.msra.mxu0 %v1097
  %1117 = vmatprep.subr.bf16.mxu0 0
  %1118 = vmatpush1.bf16.msra.mxu0 %v1096
  %1119 = vmatprep.subr.bf16.mxu0 0
  %1120 = vmatpush2.bf16.msra.mxu0 0
  %1121 = vmatprep.subr.bf16.mxu0 0
  %1122 = vmatpush2.bf16.msra.mxu0 0
  %1123 = vmatprep.subr.bf16.mxu0 0
  %1124 = vmatpush2.bf16.msra.mxu0 0
  %1125 = vmatprep.subr.bf16.mxu0 0
  %1126 = vmatpush2.bf16.msra.mxu0 0
  %1127 = vmatprep.subr.bf16.mxu0 0
  %1128 = vmatpush2.bf16.msra.mxu0 0
  %1129 = vmatprep.subr.bf16.mxu0 0
  %1130 = vmatpush2.bf16.msra.mxu0 0
  %1131 = vmatprep.subr.bf16.mxu0 0
  %1132 = vmatpush2.bf16.msra.mxu0 0
  %1133 = vmatprep.subr.bf16.mxu0 0
  %1134 = vmatpush2.bf16.msra.mxu0 0
  %1135 = vmatprep.mubr.bf16.mxu0 0
  %1136 = vmatmul.mubr.bf16.gmra.mxu0 %v1101
  %v1137 = vpop.f32.mrf.mxu0
  %v1138 = vadd.f32 0.0, %v1137
  %v1139 = vpop.f32.mrf.mxu0
  %v1140 = vpop.f32.mrf.mxu0
  %v1141 = vadd.f32 0.0, %v1140
  %v1142 = vpop.f32.mrf.mxu0
  %1143 = vdwg.mxu0
  %v1144 = vadd.f32 %v51, %v1138
  %v1145 = vadd.f32 %v52, %v1141
  %v1146 = vld [vmem:[%s5] sm:$0x1]
  %v1147 = vmul.f32 %v1144, %v1144
  %v1148 = vmul.f32 %v1145, %v1145
  %v1149 = vsel %vm64, %v1147, 0.0
  %1150 = vadd.xlane.f32.xlu0 %v1149
  %v1151 = vpop.xlane.xlu0 %1150
  %v1152 = vsel %vm64, %v1148, 0.0
  %1153 = vadd.xlane.f32.xlu0 %v1152
  %v1154 = vpop.xlane.xlu0 %1153
  %v1155 = vmul.f32 %v1151, %v71
  %v1156 = vmul.f32 %v1154, %v71
  %v1157 = vadd.f32 %v1155, 1e-06
  %v1158 = vadd.f32 %v1156, 1e-06
  %v1159 = vrsqrt.pop %v1157
  %v1160 = vrsqrt.pop %v1158
  %v1161 = vmul.f32 %v1144, %v1159
  %v1162 = vmul.f32 %v1145, %v1160
  %v1164 = vlaneseq
  %v1165 = vshrl.u32 %v1164, 7
  %v1166 = vsub.s32 0, %v1165
  %v1167 = vrot.slane %v1146, %v1166
  %v1169 = vmul.f32 %v1161, %v1167
  %v1170 = vmul.f32 %v1162, %v1167
  %v1171 = vpack.c.bf16 %v1170, %v1169
  %v1172 = vld [vmem:[%s6] sm:$0xf]
  %v1173 = vld [vmem:[%s6 + $0x4] sm:$0xf]
  %v1174 = vld [vmem:[%s6 + $0x8] sm:$0xf]
  %v1175 = vld [vmem:[%s6 + $0xc] sm:$0xf]
  %v1180 = vunpack.c.l.b16 %v1172
  %v1181 = vunpack.c.l.b16 %v1173
  %v1182 = vunpack.c.l.b16 %v1174
  %v1183 = vunpack.c.l.b16 %v1175
  %v1184 = vpack.c.b16 %v1181, %v1180
  %v1185 = vpack.c.b16 %v1183, %v1182
  %v1189 = vsel %vm64, %v1171, 0
  %1191 = vmatprep.subr.bf16.mxu0 0
  %1192 = vmatpush1.bf16.msra.mxu0 0
  %1193 = vmatprep.subr.bf16.mxu0 0
  %1194 = vmatpush1.bf16.msra.mxu0 0
  %1195 = vmatprep.subr.bf16.mxu0 0
  %1196 = vmatpush1.bf16.msra.mxu0 0
  %1197 = vmatprep.subr.bf16.mxu0 0
  %1198 = vmatpush1.bf16.msra.mxu0 0
  %1199 = vmatprep.subr.bf16.mxu0 0
  %1200 = vmatpush1.bf16.msra.mxu0 0
  %1201 = vmatprep.subr.bf16.mxu0 0
  %1202 = vmatpush1.bf16.msra.mxu0 0
  %1203 = vmatprep.subr.bf16.mxu0 0
  %1204 = vmatpush1.bf16.msra.mxu0 %v1185
  %1205 = vmatprep.subr.bf16.mxu0 0
  %1206 = vmatpush1.bf16.msra.mxu0 %v1184
  %1207 = vmatprep.subr.bf16.mxu0 0
  %1208 = vmatpush2.bf16.msra.mxu0 0
  %1209 = vmatprep.subr.bf16.mxu0 0
  %1210 = vmatpush2.bf16.msra.mxu0 0
  %1211 = vmatprep.subr.bf16.mxu0 0
  %1212 = vmatpush2.bf16.msra.mxu0 0
  %1213 = vmatprep.subr.bf16.mxu0 0
  %1214 = vmatpush2.bf16.msra.mxu0 0
  %1215 = vmatprep.subr.bf16.mxu0 0
  %1216 = vmatpush2.bf16.msra.mxu0 0
  %1217 = vmatprep.subr.bf16.mxu0 0
  %1218 = vmatpush2.bf16.msra.mxu0 0
  %1219 = vmatprep.subr.bf16.mxu0 0
  %1220 = vmatpush2.bf16.msra.mxu0 0
  %1221 = vmatprep.subr.bf16.mxu0 0
  %1222 = vmatpush2.bf16.msra.mxu0 0
  %1223 = vmatprep.mubr.bf16.mxu0 0
  %1224 = vmatmul.mubr.bf16.gmra.mxu0 %v1189
  %v1225 = vpop.f32.mrf.mxu0
  %v1226 = vadd.f32 0.0, %v1225
  %v1227 = vpop.f32.mrf.mxu0
  %v1228 = vpop.f32.mrf.mxu0
  %v1229 = vadd.f32 0.0, %v1228
  %v1230 = vpop.f32.mrf.mxu0
  %1231 = vdwg.mxu0
  %v1232 = vmul.f32 %v1226, %v1226
  %v1233 = vmul.f32 %v1229, %v1229
  %v1234 = vmul.f32 %v1226, %v1232
  %v1235 = vmul.f32 %v1229, %v1233
  %v1236 = vmul.f32 %v1234, 0.044715
  %v1237 = vmul.f32 %v1235, 0.044715
  %v1238 = vadd.f32 %v1226, %v1236
  %v1239 = vadd.f32 %v1229, %v1237
  %v1240 = vmul.f32 %v1238, 0.7978846
  %v1241 = vmul.f32 %v1239, 0.7978846
  %v1242 = vtanh.pop %v1240
  %v1243 = vtanh.pop %v1241
  %v1244 = vadd.f32 %v1242, 1.0
  %v1245 = vadd.f32 %v1243, 1.0
  %v1246 = vmul.f32 %v1244, 0.5
  %v1247 = vmul.f32 %v1245, 0.5
  %v1248 = vmul.f32 %v1226, %v1246
  %v1249 = vmul.f32 %v1229, %v1247
  %1252 = vrot.lane.b32.xlu0 %v1226, 64
  %v1253 = vpop.permute.xlu0 %1252
  %1254 = vrot.lane.b32.xlu0 %v1229, 64
  %v1255 = vpop.permute.xlu0 %1254
  %v1258 = vmul.f32 %v1248, %v1253
  %v1259 = vmul.f32 %v1249, %v1255
  %v1260 = vpack.c.bf16 %v1259, %v1258
  %v1261 = vld [vmem:[%s7] sm:$0xf]
  %v1262 = vld [vmem:[%s7 + $0x4] sm:$0xf]
  %v1263 = vld [vmem:[%s7 + $0x8] sm:$0xf]
  %v1264 = vld [vmem:[%s7 + $0xc] sm:$0xf]
  %v1265 = vld [vmem:[%s7 + $0x10] sm:$0xf]
  %v1266 = vld [vmem:[%s7 + $0x14] sm:$0xf]
  %v1267 = vld [vmem:[%s7 + $0x18] sm:$0xf]
  %v1268 = vld [vmem:[%s7 + $0x1c] sm:$0xf]
  %v1277 = vunpack.c.l.b16 %v1261
  %v1278 = vunpack.c.l.b16 %v1262
  %v1279 = vunpack.c.l.b16 %v1263
  %v1280 = vunpack.c.l.b16 %v1264
  %v1281 = vunpack.c.l.b16 %v1265
  %v1282 = vunpack.c.l.b16 %v1266
  %v1283 = vunpack.c.l.b16 %v1267
  %v1284 = vunpack.c.l.b16 %v1268
  %v1285 = vpack.c.b16 %v1278, %v1277
  %v1286 = vpack.c.b16 %v1280, %v1279
  %v1287 = vpack.c.b16 %v1282, %v1281
  %v1288 = vpack.c.b16 %v1284, %v1283
  %vm1293 = vcmask 523264
  %v1295 = vsel %vm1293, %v1260, 0
  %1297 = vmatprep.subr.bf16.mxu0 0
  %1298 = vmatpush1.bf16.msra.mxu0 0
  %1299 = vmatprep.subr.bf16.mxu0 0
  %1300 = vmatpush1.bf16.msra.mxu0 0
  %1301 = vmatprep.subr.bf16.mxu0 0
  %1302 = vmatpush1.bf16.msra.mxu0 0
  %1303 = vmatprep.subr.bf16.mxu0 0
  %1304 = vmatpush1.bf16.msra.mxu0 0
  %1305 = vmatprep.subr.bf16.mxu0 0
  %1306 = vmatpush1.bf16.msra.mxu0 %v1288
  %1307 = vmatprep.subr.bf16.mxu0 0
  %1308 = vmatpush1.bf16.msra.mxu0 %v1287
  %1309 = vmatprep.subr.bf16.mxu0 0
  %1310 = vmatpush1.bf16.msra.mxu0 %v1286
  %1311 = vmatprep.subr.bf16.mxu0 0
  %1312 = vmatpush1.bf16.msra.mxu0 %v1285
  %1313 = vmatprep.subr.bf16.mxu0 0
  %1314 = vmatpush2.bf16.msra.mxu0 0
  %1315 = vmatprep.subr.bf16.mxu0 0
  %1316 = vmatpush2.bf16.msra.mxu0 0
  %1317 = vmatprep.subr.bf16.mxu0 0
  %1318 = vmatpush2.bf16.msra.mxu0 0
  %1319 = vmatprep.subr.bf16.mxu0 0
  %1320 = vmatpush2.bf16.msra.mxu0 0
  %1321 = vmatprep.subr.bf16.mxu0 0
  %1322 = vmatpush2.bf16.msra.mxu0 0
  %1323 = vmatprep.subr.bf16.mxu0 0
  %1324 = vmatpush2.bf16.msra.mxu0 0
  %1325 = vmatprep.subr.bf16.mxu0 0
  %1326 = vmatpush2.bf16.msra.mxu0 0
  %1327 = vmatprep.subr.bf16.mxu0 0
  %1328 = vmatpush2.bf16.msra.mxu0 0
  %1329 = vmatprep.mubr.bf16.mxu0 0
  %1330 = vmatmul.mubr.bf16.gmra.mxu0 %v1295
  %v1331 = vpop.f32.mrf.mxu0
  %v1332 = vadd.f32 0.0, %v1331
  %v1333 = vpop.f32.mrf.mxu0
  %v1334 = vpop.f32.mrf.mxu0
  %v1335 = vadd.f32 0.0, %v1334
  %v1336 = vpop.f32.mrf.mxu0
  %1337 = vdwg.mxu0
  %v1338 = vadd.f32 %v1144, %v1332
  %v1339 = vadd.f32 %v1145, %v1335
  %s1340 = scalar_lea.vmem %s2, 1
  %v1341 = vld [vmem:[%s1340] sm:$0x1]
  %v1342 = vmul.f32 %v1338, %v1338
  %v1343 = vmul.f32 %v1339, %v1339
  %v1344 = vsel %vm64, %v1342, 0.0
  %1345 = vadd.xlane.f32.xlu0 %v1344
  %v1346 = vpop.xlane.xlu0 %1345
  %v1347 = vsel %vm64, %v1343, 0.0
  %1348 = vadd.xlane.f32.xlu0 %v1347
  %v1349 = vpop.xlane.xlu0 %1348
  %v1350 = vmul.f32 %v1346, %v71
  %v1351 = vmul.f32 %v1349, %v71
  %v1352 = vadd.f32 %v1350, 1e-06
  %v1353 = vadd.f32 %v1351, 1e-06
  %v1354 = vrsqrt.pop %v1352
  %v1355 = vrsqrt.pop %v1353
  %v1356 = vmul.f32 %v1338, %v1354
  %v1357 = vmul.f32 %v1339, %v1355
  %v1359 = vlaneseq
  %v1360 = vshrl.u32 %v1359, 7
  %v1361 = vsub.s32 0, %v1360
  %v1362 = vrot.slane %v1341, %v1361
  %v1364 = vmul.f32 %v1356, %v1362
  %v1365 = vmul.f32 %v1357, %v1362
  %v1366 = vpack.c.bf16 %v1365, %v1364
  %s1367 = scalar_lea.vmem %s3, 16
  %v1368 = vld [vmem:[%s1367] sm:$0xf]
  %v1369 = vld [vmem:[%s1367 + $0x4] sm:$0xf]
  %v1370 = vld [vmem:[%s1367 + $0x8] sm:$0xf]
  %v1371 = vld [vmem:[%s1367 + $0xc] sm:$0xf]
  %v1376 = vunpack.c.l.b16 %v1368
  %v1377 = vunpack.c.l.b16 %v1369
  %v1378 = vunpack.c.l.b16 %v1370
  %v1379 = vunpack.c.l.b16 %v1371
  %v1380 = vpack.c.b16 %v1377, %v1376
  %v1381 = vpack.c.b16 %v1379, %v1378
  %v1385 = vsel %vm64, %v1366, 0
  %1387 = vmatprep.subr.bf16.mxu0 0
  %1388 = vmatpush1.bf16.msra.mxu0 0
  %1389 = vmatprep.subr.bf16.mxu0 0
  %1390 = vmatpush1.bf16.msra.mxu0 0
  %1391 = vmatprep.subr.bf16.mxu0 0
  %1392 = vmatpush1.bf16.msra.mxu0 0
  %1393 = vmatprep.subr.bf16.mxu0 0
  %1394 = vmatpush1.bf16.msra.mxu0 0
  %1395 = vmatprep.subr.bf16.mxu0 0
  %1396 = vmatpush1.bf16.msra.mxu0 0
  %1397 = vmatprep.subr.bf16.mxu0 0
  %1398 = vmatpush1.bf16.msra.mxu0 0
  %1399 = vmatprep.subr.bf16.mxu0 0
  %1400 = vmatpush1.bf16.msra.mxu0 %v1381
  %1401 = vmatprep.subr.bf16.mxu0 0
  %1402 = vmatpush1.bf16.msra.mxu0 %v1380
  %1403 = vmatprep.subr.bf16.mxu0 0
  %1404 = vmatpush2.bf16.msra.mxu0 0
  %1405 = vmatprep.subr.bf16.mxu0 0
  %1406 = vmatpush2.bf16.msra.mxu0 0
  %1407 = vmatprep.subr.bf16.mxu0 0
  %1408 = vmatpush2.bf16.msra.mxu0 0
  %1409 = vmatprep.subr.bf16.mxu0 0
  %1410 = vmatpush2.bf16.msra.mxu0 0
  %1411 = vmatprep.subr.bf16.mxu0 0
  %1412 = vmatpush2.bf16.msra.mxu0 0
  %1413 = vmatprep.subr.bf16.mxu0 0
  %1414 = vmatpush2.bf16.msra.mxu0 0
  %1415 = vmatprep.subr.bf16.mxu0 0
  %1416 = vmatpush2.bf16.msra.mxu0 0
  %1417 = vmatprep.subr.bf16.mxu0 0
  %1418 = vmatpush2.bf16.msra.mxu0 0
  %1419 = vmatprep.mubr.bf16.mxu0 0
  %1420 = vmatmul.mubr.bf16.gmra.mxu0 %v1385
  %v1421 = vpop.f32.mrf.mxu0
  %v1422 = vadd.f32 0.0, %v1421
  %v1423 = vpop.f32.mrf.mxu0
  %v1424 = vpop.f32.mrf.mxu0
  %v1425 = vadd.f32 0.0, %v1424
  %v1426 = vpop.f32.mrf.mxu0
  %1427 = vdwg.mxu0
  %1429 = vrot.lane.b32.xlu0 %v1422, 120
  %v1430 = vpop.permute.xlu0 %1429
  %1432 = vrot.lane.b32.xlu0 %v1422, 112
  %v1433 = vpop.permute.xlu0 %1432
  %1435 = vrot.lane.b32.xlu0 %v1422, 104
  %v1436 = vpop.permute.xlu0 %1435
  %1439 = vrot.lane.b32.xlu0 %v1425, 120
  %v1440 = vpop.permute.xlu0 %1439
  %1442 = vrot.lane.b32.xlu0 %v1425, 112
  %v1443 = vpop.permute.xlu0 %1442
  %1445 = vrot.lane.b32.xlu0 %v1425, 104
  %v1446 = vpop.permute.xlu0 %1445
  %v1448 = vpack.c.bf16 %v1422, %v1422
  %v1449 = vpack.c.bf16 %v1430, %v1430
  %v1450 = vpack.c.bf16 %v1433, %v1433
  %v1451 = vpack.c.bf16 %v1436, %v1436
  %v1452 = vpack.c.bf16 %v1425, %v1425
  %v1453 = vpack.c.bf16 %v1440, %v1440
  %v1454 = vpack.c.bf16 %v1443, %v1443
  %v1455 = vpack.c.bf16 %v1446, %v1446
  %1457 = vrot.lane.b32.xlu0 %v1448, 96
  %v1458 = vpop.permute.xlu0 %1457
  %v1460 = vsel %vm180, %v1448, 0
  %v1463 = vsel %vm180, %v1458, 0
  %1465 = vmatprep.subr.bf16.mxu0 0
  %1466 = vmatpush1.bf16.xpose.msra.mxu0 0
  %1467 = vmatprep.subr.bf16.mxu0 0
  %1468 = vmatpush1.bf16.xpose.msra.mxu0 0
  %1469 = vmatprep.subr.bf16.mxu0 0
  %1470 = vmatpush1.bf16.xpose.msra.mxu0 0
  %1471 = vmatprep.subr.bf16.mxu0 0
  %1472 = vmatpush1.bf16.xpose.msra.mxu0 0
  %1473 = vmatprep.subr.bf16.mxu0 0
  %1474 = vmatpush1.bf16.xpose.msra.mxu0 0
  %1475 = vmatprep.subr.bf16.mxu0 0
  %1476 = vmatpush1.bf16.xpose.msra.mxu0 0
  %1477 = vmatprep.subr.bf16.mxu0 0
  %1478 = vmatpush1.bf16.xpose.msra.mxu0 0
  %1479 = vmatprep.subr.bf16.mxu0 0
  %1480 = vmatpush1.bf16.xpose.msra.mxu0 %v1463
  %1481 = vmatprep.subr.bf16.mxu0 0
  %1482 = vmatpush2.bf16.xpose.msra.mxu0 0
  %1483 = vmatprep.subr.bf16.mxu0 0
  %1484 = vmatpush2.bf16.xpose.msra.mxu0 0
  %1485 = vmatprep.subr.bf16.mxu0 0
  %1486 = vmatpush2.bf16.xpose.msra.mxu0 0
  %1487 = vmatprep.subr.bf16.mxu0 0
  %1488 = vmatpush2.bf16.xpose.msra.mxu0 0
  %1489 = vmatprep.subr.bf16.mxu0 0
  %1490 = vmatpush2.bf16.xpose.msra.mxu0 0
  %1491 = vmatprep.subr.bf16.mxu0 0
  %1492 = vmatpush2.bf16.xpose.msra.mxu0 0
  %1493 = vmatprep.subr.bf16.mxu0 0
  %1494 = vmatpush2.bf16.xpose.msra.mxu0 0
  %1495 = vmatprep.subr.bf16.mxu0 0
  %1496 = vmatpush2.bf16.xpose.msra.mxu0 0
  %1497 = vmatprep.mubr.bf16.mxu0 0
  %1498 = vmatmul.mubr.bf16.gmra.mxu0 %v1460
  %v1499 = vpop.f32.mrf.mxu0
  %v1500 = vadd.f32 %v53, %v1499
  %v1501 = vpop.f32.mrf.mxu0
  %v1502 = vpop.f32.mrf.mxu0
  %v1503 = vpop.f32.mrf.mxu0
  %1504 = vdwg.mxu0
  %1506 = vrot.lane.b32.xlu0 %v1449, 96
  %v1507 = vpop.permute.xlu0 %1506
  %v1509 = vsel %vm180, %v1449, 0
  %v1512 = vsel %vm180, %v1507, 0
  %1514 = vmatprep.subr.bf16.mxu0 0
  %1515 = vmatpush1.bf16.xpose.msra.mxu0 0
  %1516 = vmatprep.subr.bf16.mxu0 0
  %1517 = vmatpush1.bf16.xpose.msra.mxu0 0
  %1518 = vmatprep.subr.bf16.mxu0 0
  %1519 = vmatpush1.bf16.xpose.msra.mxu0 0
  %1520 = vmatprep.subr.bf16.mxu0 0
  %1521 = vmatpush1.bf16.xpose.msra.mxu0 0
  %1522 = vmatprep.subr.bf16.mxu0 0
  %1523 = vmatpush1.bf16.xpose.msra.mxu0 0
  %1524 = vmatprep.subr.bf16.mxu0 0
  %1525 = vmatpush1.bf16.xpose.msra.mxu0 0
  %1526 = vmatprep.subr.bf16.mxu0 0
  %1527 = vmatpush1.bf16.xpose.msra.mxu0 0
  %1528 = vmatprep.subr.bf16.mxu0 0
  %1529 = vmatpush1.bf16.xpose.msra.mxu0 %v1512
  %1530 = vmatprep.subr.bf16.mxu0 0
  %1531 = vmatpush2.bf16.xpose.msra.mxu0 0
  %1532 = vmatprep.subr.bf16.mxu0 0
  %1533 = vmatpush2.bf16.xpose.msra.mxu0 0
  %1534 = vmatprep.subr.bf16.mxu0 0
  %1535 = vmatpush2.bf16.xpose.msra.mxu0 0
  %1536 = vmatprep.subr.bf16.mxu0 0
  %1537 = vmatpush2.bf16.xpose.msra.mxu0 0
  %1538 = vmatprep.subr.bf16.mxu0 0
  %1539 = vmatpush2.bf16.xpose.msra.mxu0 0
  %1540 = vmatprep.subr.bf16.mxu0 0
  %1541 = vmatpush2.bf16.xpose.msra.mxu0 0
  %1542 = vmatprep.subr.bf16.mxu0 0
  %1543 = vmatpush2.bf16.xpose.msra.mxu0 0
  %1544 = vmatprep.subr.bf16.mxu0 0
  %1545 = vmatpush2.bf16.xpose.msra.mxu0 0
  %1546 = vmatprep.mubr.bf16.mxu0 0
  %1547 = vmatmul.mubr.bf16.gmra.mxu0 %v1509
  %v1548 = vpop.f32.mrf.mxu0
  %v1549 = vadd.f32 %v54, %v1548
  %v1550 = vpop.f32.mrf.mxu0
  %v1551 = vpop.f32.mrf.mxu0
  %v1552 = vpop.f32.mrf.mxu0
  %1553 = vdwg.mxu0
  %1555 = vrot.lane.b32.xlu0 %v1450, 96
  %v1556 = vpop.permute.xlu0 %1555
  %v1558 = vsel %vm180, %v1450, 0
  %v1561 = vsel %vm180, %v1556, 0
  %1563 = vmatprep.subr.bf16.mxu0 0
  %1564 = vmatpush1.bf16.xpose.msra.mxu0 0
  %1565 = vmatprep.subr.bf16.mxu0 0
  %1566 = vmatpush1.bf16.xpose.msra.mxu0 0
  %1567 = vmatprep.subr.bf16.mxu0 0
  %1568 = vmatpush1.bf16.xpose.msra.mxu0 0
  %1569 = vmatprep.subr.bf16.mxu0 0
  %1570 = vmatpush1.bf16.xpose.msra.mxu0 0
  %1571 = vmatprep.subr.bf16.mxu0 0
  %1572 = vmatpush1.bf16.xpose.msra.mxu0 0
  %1573 = vmatprep.subr.bf16.mxu0 0
  %1574 = vmatpush1.bf16.xpose.msra.mxu0 0
  %1575 = vmatprep.subr.bf16.mxu0 0
  %1576 = vmatpush1.bf16.xpose.msra.mxu0 0
  %1577 = vmatprep.subr.bf16.mxu0 0
  %1578 = vmatpush1.bf16.xpose.msra.mxu0 %v1561
  %1579 = vmatprep.subr.bf16.mxu0 0
  %1580 = vmatpush2.bf16.xpose.msra.mxu0 0
  %1581 = vmatprep.subr.bf16.mxu0 0
  %1582 = vmatpush2.bf16.xpose.msra.mxu0 0
  %1583 = vmatprep.subr.bf16.mxu0 0
  %1584 = vmatpush2.bf16.xpose.msra.mxu0 0
  %1585 = vmatprep.subr.bf16.mxu0 0
  %1586 = vmatpush2.bf16.xpose.msra.mxu0 0
  %1587 = vmatprep.subr.bf16.mxu0 0
  %1588 = vmatpush2.bf16.xpose.msra.mxu0 0
  %1589 = vmatprep.subr.bf16.mxu0 0
  %1590 = vmatpush2.bf16.xpose.msra.mxu0 0
  %1591 = vmatprep.subr.bf16.mxu0 0
  %1592 = vmatpush2.bf16.xpose.msra.mxu0 0
  %1593 = vmatprep.subr.bf16.mxu0 0
  %1594 = vmatpush2.bf16.xpose.msra.mxu0 0
  %1595 = vmatprep.mubr.bf16.mxu0 0
  %1596 = vmatmul.mubr.bf16.gmra.mxu0 %v1558
  %v1597 = vpop.f32.mrf.mxu0
  %v1598 = vadd.f32 %v55, %v1597
  %v1599 = vpop.f32.mrf.mxu0
  %v1600 = vpop.f32.mrf.mxu0
  %v1601 = vpop.f32.mrf.mxu0
  %1602 = vdwg.mxu0
  %1604 = vrot.lane.b32.xlu0 %v1451, 96
  %v1605 = vpop.permute.xlu0 %1604
  %v1607 = vsel %vm180, %v1451, 0
  %v1610 = vsel %vm180, %v1605, 0
  %1612 = vmatprep.subr.bf16.mxu0 0
  %1613 = vmatpush1.bf16.xpose.msra.mxu0 0
  %1614 = vmatprep.subr.bf16.mxu0 0
  %1615 = vmatpush1.bf16.xpose.msra.mxu0 0
  %1616 = vmatprep.subr.bf16.mxu0 0
  %1617 = vmatpush1.bf16.xpose.msra.mxu0 0
  %1618 = vmatprep.subr.bf16.mxu0 0
  %1619 = vmatpush1.bf16.xpose.msra.mxu0 0
  %1620 = vmatprep.subr.bf16.mxu0 0
  %1621 = vmatpush1.bf16.xpose.msra.mxu0 0
  %1622 = vmatprep.subr.bf16.mxu0 0
  %1623 = vmatpush1.bf16.xpose.msra.mxu0 0
  %1624 = vmatprep.subr.bf16.mxu0 0
  %1625 = vmatpush1.bf16.xpose.msra.mxu0 0
  %1626 = vmatprep.subr.bf16.mxu0 0
  %1627 = vmatpush1.bf16.xpose.msra.mxu0 %v1610
  %1628 = vmatprep.subr.bf16.mxu0 0
  %1629 = vmatpush2.bf16.xpose.msra.mxu0 0
  %1630 = vmatprep.subr.bf16.mxu0 0
  %1631 = vmatpush2.bf16.xpose.msra.mxu0 0
  %1632 = vmatprep.subr.bf16.mxu0 0
  %1633 = vmatpush2.bf16.xpose.msra.mxu0 0
  %1634 = vmatprep.subr.bf16.mxu0 0
  %1635 = vmatpush2.bf16.xpose.msra.mxu0 0
  %1636 = vmatprep.subr.bf16.mxu0 0
  %1637 = vmatpush2.bf16.xpose.msra.mxu0 0
  %1638 = vmatprep.subr.bf16.mxu0 0
  %1639 = vmatpush2.bf16.xpose.msra.mxu0 0
  %1640 = vmatprep.subr.bf16.mxu0 0
  %1641 = vmatpush2.bf16.xpose.msra.mxu0 0
  %1642 = vmatprep.subr.bf16.mxu0 0
  %1643 = vmatpush2.bf16.xpose.msra.mxu0 0
  %1644 = vmatprep.mubr.bf16.mxu0 0
  %1645 = vmatmul.mubr.bf16.gmra.mxu0 %v1607
  %v1646 = vpop.f32.mrf.mxu0
  %v1647 = vadd.f32 %v56, %v1646
  %v1648 = vpop.f32.mrf.mxu0
  %v1649 = vpop.f32.mrf.mxu0
  %v1650 = vpop.f32.mrf.mxu0
  %1651 = vdwg.mxu0
  %1653 = vrot.lane.b32.xlu0 %v1452, 96
  %v1654 = vpop.permute.xlu0 %1653
  %v1656 = vsel %vm180, %v1452, 0
  %v1659 = vsel %vm180, %v1654, 0
  %1661 = vmatprep.subr.bf16.mxu0 0
  %1662 = vmatpush1.bf16.xpose.msra.mxu0 0
  %1663 = vmatprep.subr.bf16.mxu0 0
  %1664 = vmatpush1.bf16.xpose.msra.mxu0 0
  %1665 = vmatprep.subr.bf16.mxu0 0
  %1666 = vmatpush1.bf16.xpose.msra.mxu0 0
  %1667 = vmatprep.subr.bf16.mxu0 0
  %1668 = vmatpush1.bf16.xpose.msra.mxu0 0
  %1669 = vmatprep.subr.bf16.mxu0 0
  %1670 = vmatpush1.bf16.xpose.msra.mxu0 0
  %1671 = vmatprep.subr.bf16.mxu0 0
  %1672 = vmatpush1.bf16.xpose.msra.mxu0 0
  %1673 = vmatprep.subr.bf16.mxu0 0
  %1674 = vmatpush1.bf16.xpose.msra.mxu0 0
  %1675 = vmatprep.subr.bf16.mxu0 0
  %1676 = vmatpush1.bf16.xpose.msra.mxu0 %v1659
  %1677 = vmatprep.subr.bf16.mxu0 0
  %1678 = vmatpush2.bf16.xpose.msra.mxu0 0
  %1679 = vmatprep.subr.bf16.mxu0 0
  %1680 = vmatpush2.bf16.xpose.msra.mxu0 0
  %1681 = vmatprep.subr.bf16.mxu0 0
  %1682 = vmatpush2.bf16.xpose.msra.mxu0 0
  %1683 = vmatprep.subr.bf16.mxu0 0
  %1684 = vmatpush2.bf16.xpose.msra.mxu0 0
  %1685 = vmatprep.subr.bf16.mxu0 0
  %1686 = vmatpush2.bf16.xpose.msra.mxu0 0
  %1687 = vmatprep.subr.bf16.mxu0 0
  %1688 = vmatpush2.bf16.xpose.msra.mxu0 0
  %1689 = vmatprep.subr.bf16.mxu0 0
  %1690 = vmatpush2.bf16.xpose.msra.mxu0 0
  %1691 = vmatprep.subr.bf16.mxu0 0
  %1692 = vmatpush2.bf16.xpose.msra.mxu0 0
  %1693 = vmatprep.mubr.bf16.mxu0 0
  %1694 = vmatmul.mubr.bf16.gmra.mxu0 %v1656
  %v1695 = vpop.f32.mrf.mxu0
  %v1696 = vadd.f32 %v57, %v1695
  %v1697 = vpop.f32.mrf.mxu0
  %v1698 = vpop.f32.mrf.mxu0
  %v1699 = vpop.f32.mrf.mxu0
  %1700 = vdwg.mxu0
  %1702 = vrot.lane.b32.xlu0 %v1453, 96
  %v1703 = vpop.permute.xlu0 %1702
  %v1705 = vsel %vm180, %v1453, 0
  %v1708 = vsel %vm180, %v1703, 0
  %1710 = vmatprep.subr.bf16.mxu0 0
  %1711 = vmatpush1.bf16.xpose.msra.mxu0 0
  %1712 = vmatprep.subr.bf16.mxu0 0
  %1713 = vmatpush1.bf16.xpose.msra.mxu0 0
  %1714 = vmatprep.subr.bf16.mxu0 0
  %1715 = vmatpush1.bf16.xpose.msra.mxu0 0
  %1716 = vmatprep.subr.bf16.mxu0 0
  %1717 = vmatpush1.bf16.xpose.msra.mxu0 0
  %1718 = vmatprep.subr.bf16.mxu0 0
  %1719 = vmatpush1.bf16.xpose.msra.mxu0 0
  %1720 = vmatprep.subr.bf16.mxu0 0
  %1721 = vmatpush1.bf16.xpose.msra.mxu0 0
  %1722 = vmatprep.subr.bf16.mxu0 0
  %1723 = vmatpush1.bf16.xpose.msra.mxu0 0
  %1724 = vmatprep.subr.bf16.mxu0 0
  %1725 = vmatpush1.bf16.xpose.msra.mxu0 %v1708
  %1726 = vmatprep.subr.bf16.mxu0 0
  %1727 = vmatpush2.bf16.xpose.msra.mxu0 0
  %1728 = vmatprep.subr.bf16.mxu0 0
  %1729 = vmatpush2.bf16.xpose.msra.mxu0 0
  %1730 = vmatprep.subr.bf16.mxu0 0
  %1731 = vmatpush2.bf16.xpose.msra.mxu0 0
  %1732 = vmatprep.subr.bf16.mxu0 0
  %1733 = vmatpush2.bf16.xpose.msra.mxu0 0
  %1734 = vmatprep.subr.bf16.mxu0 0
  %1735 = vmatpush2.bf16.xpose.msra.mxu0 0
  %1736 = vmatprep.subr.bf16.mxu0 0
  %1737 = vmatpush2.bf16.xpose.msra.mxu0 0
  %1738 = vmatprep.subr.bf16.mxu0 0
  %1739 = vmatpush2.bf16.xpose.msra.mxu0 0
  %1740 = vmatprep.subr.bf16.mxu0 0
  %1741 = vmatpush2.bf16.xpose.msra.mxu0 0
  %1742 = vmatprep.mubr.bf16.mxu0 0
  %1743 = vmatmul.mubr.bf16.gmra.mxu0 %v1705
  %v1744 = vpop.f32.mrf.mxu0
  %v1745 = vadd.f32 %v58, %v1744
  %v1746 = vpop.f32.mrf.mxu0
  %v1747 = vpop.f32.mrf.mxu0
  %v1748 = vpop.f32.mrf.mxu0
  %1749 = vdwg.mxu0
  %1751 = vrot.lane.b32.xlu0 %v1454, 96
  %v1752 = vpop.permute.xlu0 %1751
  %v1754 = vsel %vm180, %v1454, 0
  %v1757 = vsel %vm180, %v1752, 0
  %1759 = vmatprep.subr.bf16.mxu0 0
  %1760 = vmatpush1.bf16.xpose.msra.mxu0 0
  %1761 = vmatprep.subr.bf16.mxu0 0
  %1762 = vmatpush1.bf16.xpose.msra.mxu0 0
  %1763 = vmatprep.subr.bf16.mxu0 0
  %1764 = vmatpush1.bf16.xpose.msra.mxu0 0
  %1765 = vmatprep.subr.bf16.mxu0 0
  %1766 = vmatpush1.bf16.xpose.msra.mxu0 0
  %1767 = vmatprep.subr.bf16.mxu0 0
  %1768 = vmatpush1.bf16.xpose.msra.mxu0 0
  %1769 = vmatprep.subr.bf16.mxu0 0
  %1770 = vmatpush1.bf16.xpose.msra.mxu0 0
  %1771 = vmatprep.subr.bf16.mxu0 0
  %1772 = vmatpush1.bf16.xpose.msra.mxu0 0
  %1773 = vmatprep.subr.bf16.mxu0 0
  %1774 = vmatpush1.bf16.xpose.msra.mxu0 %v1757
  %1775 = vmatprep.subr.bf16.mxu0 0
  %1776 = vmatpush2.bf16.xpose.msra.mxu0 0
  %1777 = vmatprep.subr.bf16.mxu0 0
  %1778 = vmatpush2.bf16.xpose.msra.mxu0 0
  %1779 = vmatprep.subr.bf16.mxu0 0
  %1780 = vmatpush2.bf16.xpose.msra.mxu0 0
  %1781 = vmatprep.subr.bf16.mxu0 0
  %1782 = vmatpush2.bf16.xpose.msra.mxu0 0
  %1783 = vmatprep.subr.bf16.mxu0 0
  %1784 = vmatpush2.bf16.xpose.msra.mxu0 0
  %1785 = vmatprep.subr.bf16.mxu0 0
  %1786 = vmatpush2.bf16.xpose.msra.mxu0 0
  %1787 = vmatprep.subr.bf16.mxu0 0
  %1788 = vmatpush2.bf16.xpose.msra.mxu0 0
  %1789 = vmatprep.subr.bf16.mxu0 0
  %1790 = vmatpush2.bf16.xpose.msra.mxu0 0
  %1791 = vmatprep.mubr.bf16.mxu0 0
  %1792 = vmatmul.mubr.bf16.gmra.mxu0 %v1754
  %v1793 = vpop.f32.mrf.mxu0
  %v1794 = vadd.f32 %v59, %v1793
  %v1795 = vpop.f32.mrf.mxu0
  %v1796 = vpop.f32.mrf.mxu0
  %v1797 = vpop.f32.mrf.mxu0
  %1798 = vdwg.mxu0
  %1800 = vrot.lane.b32.xlu0 %v1455, 96
  %v1801 = vpop.permute.xlu0 %1800
  %v1803 = vsel %vm180, %v1455, 0
  %v1806 = vsel %vm180, %v1801, 0
  %1808 = vmatprep.subr.bf16.mxu0 0
  %1809 = vmatpush1.bf16.xpose.msra.mxu0 0
  %1810 = vmatprep.subr.bf16.mxu0 0
  %1811 = vmatpush1.bf16.xpose.msra.mxu0 0
  %1812 = vmatprep.subr.bf16.mxu0 0
  %1813 = vmatpush1.bf16.xpose.msra.mxu0 0
  %1814 = vmatprep.subr.bf16.mxu0 0
  %1815 = vmatpush1.bf16.xpose.msra.mxu0 0
  %1816 = vmatprep.subr.bf16.mxu0 0
  %1817 = vmatpush1.bf16.xpose.msra.mxu0 0
  %1818 = vmatprep.subr.bf16.mxu0 0
  %1819 = vmatpush1.bf16.xpose.msra.mxu0 0
  %1820 = vmatprep.subr.bf16.mxu0 0
  %1821 = vmatpush1.bf16.xpose.msra.mxu0 0
  %1822 = vmatprep.subr.bf16.mxu0 0
  %1823 = vmatpush1.bf16.xpose.msra.mxu0 %v1806
  %1824 = vmatprep.subr.bf16.mxu0 0
  %1825 = vmatpush2.bf16.xpose.msra.mxu0 0
  %1826 = vmatprep.subr.bf16.mxu0 0
  %1827 = vmatpush2.bf16.xpose.msra.mxu0 0
  %1828 = vmatprep.subr.bf16.mxu0 0
  %1829 = vmatpush2.bf16.xpose.msra.mxu0 0
  %1830 = vmatprep.subr.bf16.mxu0 0
  %1831 = vmatpush2.bf16.xpose.msra.mxu0 0
  %1832 = vmatprep.subr.bf16.mxu0 0
  %1833 = vmatpush2.bf16.xpose.msra.mxu0 0
  %1834 = vmatprep.subr.bf16.mxu0 0
  %1835 = vmatpush2.bf16.xpose.msra.mxu0 0
  %1836 = vmatprep.subr.bf16.mxu0 0
  %1837 = vmatpush2.bf16.xpose.msra.mxu0 0
  %1838 = vmatprep.subr.bf16.mxu0 0
  %1839 = vmatpush2.bf16.xpose.msra.mxu0 0
  %1840 = vmatprep.mubr.bf16.mxu0 0
  %1841 = vmatmul.mubr.bf16.gmra.mxu0 %v1803
  %v1842 = vpop.f32.mrf.mxu0
  %v1843 = vadd.f32 %v60, %v1842
  %v1844 = vpop.f32.mrf.mxu0
  %v1845 = vpop.f32.mrf.mxu0
  %v1846 = vpop.f32.mrf.mxu0
  %1847 = vdwg.mxu0
  %v1848 = vsel %vm180, %v1500, -inf
  %1849 = vmax.xlane.f32.xlu0 %v1848
  %v1850 = vpop.xlane.xlu0 %1849
  %v1851 = vsel %vm180, %v1549, -inf
  %1852 = vmax.xlane.f32.xlu0 %v1851
  %v1853 = vpop.xlane.xlu0 %1852
  %v1854 = vsel %vm180, %v1598, -inf
  %1855 = vmax.xlane.f32.xlu0 %v1854
  %v1856 = vpop.xlane.xlu0 %1855
  %v1857 = vsel %vm180, %v1647, -inf
  %1858 = vmax.xlane.f32.xlu0 %v1857
  %v1859 = vpop.xlane.xlu0 %1858
  %v1860 = vsel %vm180, %v1696, -inf
  %1861 = vmax.xlane.f32.xlu0 %v1860
  %v1862 = vpop.xlane.xlu0 %1861
  %v1863 = vsel %vm180, %v1745, -inf
  %1864 = vmax.xlane.f32.xlu0 %v1863
  %v1865 = vpop.xlane.xlu0 %1864
  %v1866 = vsel %vm180, %v1794, -inf
  %1867 = vmax.xlane.f32.xlu0 %v1866
  %v1868 = vpop.xlane.xlu0 %1867
  %v1869 = vsel %vm180, %v1843, -inf
  %1870 = vmax.xlane.f32.xlu0 %v1869
  %v1871 = vpop.xlane.xlu0 %1870
  %v1872 = vsub.f32 %v1500, %v1850
  %v1873 = vsub.f32 %v1549, %v1853
  %v1874 = vsub.f32 %v1598, %v1856
  %v1875 = vsub.f32 %v1647, %v1859
  %v1876 = vsub.f32 %v1696, %v1862
  %v1877 = vsub.f32 %v1745, %v1865
  %v1878 = vsub.f32 %v1794, %v1868
  %v1879 = vsub.f32 %v1843, %v1871
  %v1880 = vmul.f32 %v1872, 1.442695
  %v1881 = vpow.pop %v1880
  %v1882 = vmul.f32 %v1873, 1.442695
  %v1883 = vpow.pop %v1882
  %v1884 = vmul.f32 %v1874, 1.442695
  %v1885 = vpow.pop %v1884
  %v1886 = vmul.f32 %v1875, 1.442695
  %v1887 = vpow.pop %v1886
  %v1888 = vmul.f32 %v1876, 1.442695
  %v1889 = vpow.pop %v1888
  %v1890 = vmul.f32 %v1877, 1.442695
  %v1891 = vpow.pop %v1890
  %v1892 = vmul.f32 %v1878, 1.442695
  %v1893 = vpow.pop %v1892
  %v1894 = vmul.f32 %v1879, 1.442695
  %v1895 = vpow.pop %v1894
  %v1896 = vsel %vm180, %v1881, 0.0
  %1897 = vadd.xlane.f32.xlu0 %v1896
  %v1898 = vpop.xlane.xlu0 %1897
  %v1899 = vsel %vm180, %v1883, 0.0
  %1900 = vadd.xlane.f32.xlu0 %v1899
  %v1901 = vpop.xlane.xlu0 %1900
  %v1902 = vsel %vm180, %v1885, 0.0
  %1903 = vadd.xlane.f32.xlu0 %v1902
  %v1904 = vpop.xlane.xlu0 %1903
  %v1905 = vsel %vm180, %v1887, 0.0
  %1906 = vadd.xlane.f32.xlu0 %v1905
  %v1907 = vpop.xlane.xlu0 %1906
  %v1908 = vsel %vm180, %v1889, 0.0
  %1909 = vadd.xlane.f32.xlu0 %v1908
  %v1910 = vpop.xlane.xlu0 %1909
  %v1911 = vsel %vm180, %v1891, 0.0
  %1912 = vadd.xlane.f32.xlu0 %v1911
  %v1913 = vpop.xlane.xlu0 %1912
  %v1914 = vsel %vm180, %v1893, 0.0
  %1915 = vadd.xlane.f32.xlu0 %v1914
  %v1916 = vpop.xlane.xlu0 %1915
  %v1917 = vsel %vm180, %v1895, 0.0
  %1918 = vadd.xlane.f32.xlu0 %v1917
  %v1919 = vpop.xlane.xlu0 %1918
  %v1920 = vrcp.pop %v1898
  %v1921 = vrcp.pop %v1901
  %v1922 = vrcp.pop %v1904
  %v1923 = vrcp.pop %v1907
  %v1924 = vrcp.pop %v1910
  %v1925 = vrcp.pop %v1913
  %v1926 = vrcp.pop %v1916
  %v1927 = vrcp.pop %v1919
  %v1928 = vmul.f32 %v1881, %v1920
  %v1929 = vmul.f32 %v1883, %v1921
  %v1930 = vmul.f32 %v1885, %v1922
  %v1931 = vmul.f32 %v1887, %v1923
  %v1932 = vmul.f32 %v1889, %v1924
  %v1933 = vmul.f32 %v1891, %v1925
  %v1934 = vmul.f32 %v1893, %v1926
  %v1935 = vmul.f32 %v1895, %v1927
  %v1936 = vpack.c.bf16 %v1928, %v1928
  %v1937 = vpack.c.bf16 %v1929, %v1929
  %v1938 = vpack.c.bf16 %v1930, %v1930
  %v1939 = vpack.c.bf16 %v1931, %v1931
  %v1940 = vpack.c.bf16 %v1932, %v1932
  %v1941 = vpack.c.bf16 %v1933, %v1933
  %v1942 = vpack.c.bf16 %v1934, %v1934
  %v1943 = vpack.c.bf16 %v1935, %v1935
  %1944 = vrot.lane.b32.xlu0 %v1448, 64
  %v1945 = vpop.permute.xlu0 %1944
  %v1947 = vsel %vm180, %v1936, 0
  %v1950 = vsel %vm671, %v1945, 0
  %1952 = vmatprep.subr.bf16.mxu0 0
  %1953 = vmatpush1.bf16.msra.mxu0 0
  %1954 = vmatprep.subr.bf16.mxu0 0
  %1955 = vmatpush1.bf16.msra.mxu0 0
  %1956 = vmatprep.subr.bf16.mxu0 0
  %1957 = vmatpush1.bf16.msra.mxu0 0
  %1958 = vmatprep.subr.bf16.mxu0 0
  %1959 = vmatpush1.bf16.msra.mxu0 0
  %1960 = vmatprep.subr.bf16.mxu0 0
  %1961 = vmatpush1.bf16.msra.mxu0 0
  %1962 = vmatprep.subr.bf16.mxu0 0
  %1963 = vmatpush1.bf16.msra.mxu0 0
  %1964 = vmatprep.subr.bf16.mxu0 0
  %1965 = vmatpush1.bf16.msra.mxu0 0
  %1966 = vmatprep.subr.bf16.mxu0 0
  %1967 = vmatpush1.bf16.msra.mxu0 %v1950
  %1968 = vmatprep.subr.bf16.mxu0 0
  %1969 = vmatpush2.bf16.msra.mxu0 0
  %1970 = vmatprep.subr.bf16.mxu0 0
  %1971 = vmatpush2.bf16.msra.mxu0 0
  %1972 = vmatprep.subr.bf16.mxu0 0
  %1973 = vmatpush2.bf16.msra.mxu0 0
  %1974 = vmatprep.subr.bf16.mxu0 0
  %1975 = vmatpush2.bf16.msra.mxu0 0
  %1976 = vmatprep.subr.bf16.mxu0 0
  %1977 = vmatpush2.bf16.msra.mxu0 0
  %1978 = vmatprep.subr.bf16.mxu0 0
  %1979 = vmatpush2.bf16.msra.mxu0 0
  %1980 = vmatprep.subr.bf16.mxu0 0
  %1981 = vmatpush2.bf16.msra.mxu0 0
  %1982 = vmatprep.subr.bf16.mxu0 0
  %1983 = vmatpush2.bf16.msra.mxu0 0
  %1984 = vmatprep.mubr.bf16.mxu0 0
  %1985 = vmatmul.mubr.bf16.gmra.mxu0 %v1947
  %v1986 = vpop.f32.mrf.mxu0
  %v1987 = vadd.f32 0.0, %v1986
  %v1988 = vpop.f32.mrf.mxu0
  %v1989 = vpop.f32.mrf.mxu0
  %v1990 = vpop.f32.mrf.mxu0
  %1991 = vdwg.mxu0
  %1992 = vrot.lane.b32.xlu0 %v1449, 64
  %v1993 = vpop.permute.xlu0 %1992
  %v1995 = vsel %vm180, %v1937, 0
  %v1998 = vsel %vm671, %v1993, 0
  %2000 = vmatprep.subr.bf16.mxu0 0
  %2001 = vmatpush1.bf16.msra.mxu0 0
  %2002 = vmatprep.subr.bf16.mxu0 0
  %2003 = vmatpush1.bf16.msra.mxu0 0
  %2004 = vmatprep.subr.bf16.mxu0 0
  %2005 = vmatpush1.bf16.msra.mxu0 0
  %2006 = vmatprep.subr.bf16.mxu0 0
  %2007 = vmatpush1.bf16.msra.mxu0 0
  %2008 = vmatprep.subr.bf16.mxu0 0
  %2009 = vmatpush1.bf16.msra.mxu0 0
  %2010 = vmatprep.subr.bf16.mxu0 0
  %2011 = vmatpush1.bf16.msra.mxu0 0
  %2012 = vmatprep.subr.bf16.mxu0 0
  %2013 = vmatpush1.bf16.msra.mxu0 0
  %2014 = vmatprep.subr.bf16.mxu0 0
  %2015 = vmatpush1.bf16.msra.mxu0 %v1998
  %2016 = vmatprep.subr.bf16.mxu0 0
  %2017 = vmatpush2.bf16.msra.mxu0 0
  %2018 = vmatprep.subr.bf16.mxu0 0
  %2019 = vmatpush2.bf16.msra.mxu0 0
  %2020 = vmatprep.subr.bf16.mxu0 0
  %2021 = vmatpush2.bf16.msra.mxu0 0
  %2022 = vmatprep.subr.bf16.mxu0 0
  %2023 = vmatpush2.bf16.msra.mxu0 0
  %2024 = vmatprep.subr.bf16.mxu0 0
  %2025 = vmatpush2.bf16.msra.mxu0 0
  %2026 = vmatprep.subr.bf16.mxu0 0
  %2027 = vmatpush2.bf16.msra.mxu0 0
  %2028 = vmatprep.subr.bf16.mxu0 0
  %2029 = vmatpush2.bf16.msra.mxu0 0
  %2030 = vmatprep.subr.bf16.mxu0 0
  %2031 = vmatpush2.bf16.msra.mxu0 0
  %2032 = vmatprep.mubr.bf16.mxu0 0
  %2033 = vmatmul.mubr.bf16.gmra.mxu0 %v1995
  %v2034 = vpop.f32.mrf.mxu0
  %v2035 = vadd.f32 0.0, %v2034
  %v2036 = vpop.f32.mrf.mxu0
  %v2037 = vpop.f32.mrf.mxu0
  %v2038 = vpop.f32.mrf.mxu0
  %2039 = vdwg.mxu0
  %2040 = vrot.lane.b32.xlu0 %v1450, 64
  %v2041 = vpop.permute.xlu0 %2040
  %v2043 = vsel %vm180, %v1938, 0
  %v2046 = vsel %vm671, %v2041, 0
  %2048 = vmatprep.subr.bf16.mxu0 0
  %2049 = vmatpush1.bf16.msra.mxu0 0
  %2050 = vmatprep.subr.bf16.mxu0 0
  %2051 = vmatpush1.bf16.msra.mxu0 0
  %2052 = vmatprep.subr.bf16.mxu0 0
  %2053 = vmatpush1.bf16.msra.mxu0 0
  %2054 = vmatprep.subr.bf16.mxu0 0
  %2055 = vmatpush1.bf16.msra.mxu0 0
  %2056 = vmatprep.subr.bf16.mxu0 0
  %2057 = vmatpush1.bf16.msra.mxu0 0
  %2058 = vmatprep.subr.bf16.mxu0 0
  %2059 = vmatpush1.bf16.msra.mxu0 0
  %2060 = vmatprep.subr.bf16.mxu0 0
  %2061 = vmatpush1.bf16.msra.mxu0 0
  %2062 = vmatprep.subr.bf16.mxu0 0
  %2063 = vmatpush1.bf16.msra.mxu0 %v2046
  %2064 = vmatprep.subr.bf16.mxu0 0
  %2065 = vmatpush2.bf16.msra.mxu0 0
  %2066 = vmatprep.subr.bf16.mxu0 0
  %2067 = vmatpush2.bf16.msra.mxu0 0
  %2068 = vmatprep.subr.bf16.mxu0 0
  %2069 = vmatpush2.bf16.msra.mxu0 0
  %2070 = vmatprep.subr.bf16.mxu0 0
  %2071 = vmatpush2.bf16.msra.mxu0 0
  %2072 = vmatprep.subr.bf16.mxu0 0
  %2073 = vmatpush2.bf16.msra.mxu0 0
  %2074 = vmatprep.subr.bf16.mxu0 0
  %2075 = vmatpush2.bf16.msra.mxu0 0
  %2076 = vmatprep.subr.bf16.mxu0 0
  %2077 = vmatpush2.bf16.msra.mxu0 0
  %2078 = vmatprep.subr.bf16.mxu0 0
  %2079 = vmatpush2.bf16.msra.mxu0 0
  %2080 = vmatprep.mubr.bf16.mxu0 0
  %2081 = vmatmul.mubr.bf16.gmra.mxu0 %v2043
  %v2082 = vpop.f32.mrf.mxu0
  %v2083 = vadd.f32 0.0, %v2082
  %v2084 = vpop.f32.mrf.mxu0
  %v2085 = vpop.f32.mrf.mxu0
  %v2086 = vpop.f32.mrf.mxu0
  %2087 = vdwg.mxu0
  %2088 = vrot.lane.b32.xlu0 %v1451, 64
  %v2089 = vpop.permute.xlu0 %2088
  %v2091 = vsel %vm180, %v1939, 0
  %v2094 = vsel %vm671, %v2089, 0
  %2096 = vmatprep.subr.bf16.mxu0 0
  %2097 = vmatpush1.bf16.msra.mxu0 0
  %2098 = vmatprep.subr.bf16.mxu0 0
  %2099 = vmatpush1.bf16.msra.mxu0 0
  %2100 = vmatprep.subr.bf16.mxu0 0
  %2101 = vmatpush1.bf16.msra.mxu0 0
  %2102 = vmatprep.subr.bf16.mxu0 0
  %2103 = vmatpush1.bf16.msra.mxu0 0
  %2104 = vmatprep.subr.bf16.mxu0 0
  %2105 = vmatpush1.bf16.msra.mxu0 0
  %2106 = vmatprep.subr.bf16.mxu0 0
  %2107 = vmatpush1.bf16.msra.mxu0 0
  %2108 = vmatprep.subr.bf16.mxu0 0
  %2109 = vmatpush1.bf16.msra.mxu0 0
  %2110 = vmatprep.subr.bf16.mxu0 0
  %2111 = vmatpush1.bf16.msra.mxu0 %v2094
  %2112 = vmatprep.subr.bf16.mxu0 0
  %2113 = vmatpush2.bf16.msra.mxu0 0
  %2114 = vmatprep.subr.bf16.mxu0 0
  %2115 = vmatpush2.bf16.msra.mxu0 0
  %2116 = vmatprep.subr.bf16.mxu0 0
  %2117 = vmatpush2.bf16.msra.mxu0 0
  %2118 = vmatprep.subr.bf16.mxu0 0
  %2119 = vmatpush2.bf16.msra.mxu0 0
  %2120 = vmatprep.subr.bf16.mxu0 0
  %2121 = vmatpush2.bf16.msra.mxu0 0
  %2122 = vmatprep.subr.bf16.mxu0 0
  %2123 = vmatpush2.bf16.msra.mxu0 0
  %2124 = vmatprep.subr.bf16.mxu0 0
  %2125 = vmatpush2.bf16.msra.mxu0 0
  %2126 = vmatprep.subr.bf16.mxu0 0
  %2127 = vmatpush2.bf16.msra.mxu0 0
  %2128 = vmatprep.mubr.bf16.mxu0 0
  %2129 = vmatmul.mubr.bf16.gmra.mxu0 %v2091
  %v2130 = vpop.f32.mrf.mxu0
  %v2131 = vadd.f32 0.0, %v2130
  %v2132 = vpop.f32.mrf.mxu0
  %v2133 = vpop.f32.mrf.mxu0
  %v2134 = vpop.f32.mrf.mxu0
  %2135 = vdwg.mxu0
  %2136 = vrot.lane.b32.xlu0 %v1452, 64
  %v2137 = vpop.permute.xlu0 %2136
  %v2139 = vsel %vm180, %v1940, 0
  %v2142 = vsel %vm671, %v2137, 0
  %2144 = vmatprep.subr.bf16.mxu0 0
  %2145 = vmatpush1.bf16.msra.mxu0 0
  %2146 = vmatprep.subr.bf16.mxu0 0
  %2147 = vmatpush1.bf16.msra.mxu0 0
  %2148 = vmatprep.subr.bf16.mxu0 0
  %2149 = vmatpush1.bf16.msra.mxu0 0
  %2150 = vmatprep.subr.bf16.mxu0 0
  %2151 = vmatpush1.bf16.msra.mxu0 0
  %2152 = vmatprep.subr.bf16.mxu0 0
  %2153 = vmatpush1.bf16.msra.mxu0 0
  %2154 = vmatprep.subr.bf16.mxu0 0
  %2155 = vmatpush1.bf16.msra.mxu0 0
  %2156 = vmatprep.subr.bf16.mxu0 0
  %2157 = vmatpush1.bf16.msra.mxu0 0
  %2158 = vmatprep.subr.bf16.mxu0 0
  %2159 = vmatpush1.bf16.msra.mxu0 %v2142
  %2160 = vmatprep.subr.bf16.mxu0 0
  %2161 = vmatpush2.bf16.msra.mxu0 0
  %2162 = vmatprep.subr.bf16.mxu0 0
  %2163 = vmatpush2.bf16.msra.mxu0 0
  %2164 = vmatprep.subr.bf16.mxu0 0
  %2165 = vmatpush2.bf16.msra.mxu0 0
  %2166 = vmatprep.subr.bf16.mxu0 0
  %2167 = vmatpush2.bf16.msra.mxu0 0
  %2168 = vmatprep.subr.bf16.mxu0 0
  %2169 = vmatpush2.bf16.msra.mxu0 0
  %2170 = vmatprep.subr.bf16.mxu0 0
  %2171 = vmatpush2.bf16.msra.mxu0 0
  %2172 = vmatprep.subr.bf16.mxu0 0
  %2173 = vmatpush2.bf16.msra.mxu0 0
  %2174 = vmatprep.subr.bf16.mxu0 0
  %2175 = vmatpush2.bf16.msra.mxu0 0
  %2176 = vmatprep.mubr.bf16.mxu0 0
  %2177 = vmatmul.mubr.bf16.gmra.mxu0 %v2139
  %v2178 = vpop.f32.mrf.mxu0
  %v2179 = vadd.f32 0.0, %v2178
  %v2180 = vpop.f32.mrf.mxu0
  %v2181 = vpop.f32.mrf.mxu0
  %v2182 = vpop.f32.mrf.mxu0
  %2183 = vdwg.mxu0
  %2184 = vrot.lane.b32.xlu0 %v1453, 64
  %v2185 = vpop.permute.xlu0 %2184
  %v2187 = vsel %vm180, %v1941, 0
  %v2190 = vsel %vm671, %v2185, 0
  %2192 = vmatprep.subr.bf16.mxu0 0
  %2193 = vmatpush1.bf16.msra.mxu0 0
  %2194 = vmatprep.subr.bf16.mxu0 0
  %2195 = vmatpush1.bf16.msra.mxu0 0
  %2196 = vmatprep.subr.bf16.mxu0 0
  %2197 = vmatpush1.bf16.msra.mxu0 0
  %2198 = vmatprep.subr.bf16.mxu0 0
  %2199 = vmatpush1.bf16.msra.mxu0 0
  %2200 = vmatprep.subr.bf16.mxu0 0
  %2201 = vmatpush1.bf16.msra.mxu0 0
  %2202 = vmatprep.subr.bf16.mxu0 0
  %2203 = vmatpush1.bf16.msra.mxu0 0
  %2204 = vmatprep.subr.bf16.mxu0 0
  %2205 = vmatpush1.bf16.msra.mxu0 0
  %2206 = vmatprep.subr.bf16.mxu0 0
  %2207 = vmatpush1.bf16.msra.mxu0 %v2190
  %2208 = vmatprep.subr.bf16.mxu0 0
  %2209 = vmatpush2.bf16.msra.mxu0 0
  %2210 = vmatprep.subr.bf16.mxu0 0
  %2211 = vmatpush2.bf16.msra.mxu0 0
  %2212 = vmatprep.subr.bf16.mxu0 0
  %2213 = vmatpush2.bf16.msra.mxu0 0
  %2214 = vmatprep.subr.bf16.mxu0 0
  %2215 = vmatpush2.bf16.msra.mxu0 0
  %2216 = vmatprep.subr.bf16.mxu0 0
  %2217 = vmatpush2.bf16.msra.mxu0 0
  %2218 = vmatprep.subr.bf16.mxu0 0
  %2219 = vmatpush2.bf16.msra.mxu0 0
  %2220 = vmatprep.subr.bf16.mxu0 0
  %2221 = vmatpush2.bf16.msra.mxu0 0
  %2222 = vmatprep.subr.bf16.mxu0 0
  %2223 = vmatpush2.bf16.msra.mxu0 0
  %2224 = vmatprep.mubr.bf16.mxu0 0
  %2225 = vmatmul.mubr.bf16.gmra.mxu0 %v2187
  %v2226 = vpop.f32.mrf.mxu0
  %v2227 = vadd.f32 0.0, %v2226
  %v2228 = vpop.f32.mrf.mxu0
  %v2229 = vpop.f32.mrf.mxu0
  %v2230 = vpop.f32.mrf.mxu0
  %2231 = vdwg.mxu0
  %2232 = vrot.lane.b32.xlu0 %v1454, 64
  %v2233 = vpop.permute.xlu0 %2232
  %v2235 = vsel %vm180, %v1942, 0
  %v2238 = vsel %vm671, %v2233, 0
  %2240 = vmatprep.subr.bf16.mxu0 0
  %2241 = vmatpush1.bf16.msra.mxu0 0
  %2242 = vmatprep.subr.bf16.mxu0 0
  %2243 = vmatpush1.bf16.msra.mxu0 0
  %2244 = vmatprep.subr.bf16.mxu0 0
  %2245 = vmatpush1.bf16.msra.mxu0 0
  %2246 = vmatprep.subr.bf16.mxu0 0
  %2247 = vmatpush1.bf16.msra.mxu0 0
  %2248 = vmatprep.subr.bf16.mxu0 0
  %2249 = vmatpush1.bf16.msra.mxu0 0
  %2250 = vmatprep.subr.bf16.mxu0 0
  %2251 = vmatpush1.bf16.msra.mxu0 0
  %2252 = vmatprep.subr.bf16.mxu0 0
  %2253 = vmatpush1.bf16.msra.mxu0 0
  %2254 = vmatprep.subr.bf16.mxu0 0
  %2255 = vmatpush1.bf16.msra.mxu0 %v2238
  %2256 = vmatprep.subr.bf16.mxu0 0
  %2257 = vmatpush2.bf16.msra.mxu0 0
  %2258 = vmatprep.subr.bf16.mxu0 0
  %2259 = vmatpush2.bf16.msra.mxu0 0
  %2260 = vmatprep.subr.bf16.mxu0 0
  %2261 = vmatpush2.bf16.msra.mxu0 0
  %2262 = vmatprep.subr.bf16.mxu0 0
  %2263 = vmatpush2.bf16.msra.mxu0 0
  %2264 = vmatprep.subr.bf16.mxu0 0
  %2265 = vmatpush2.bf16.msra.mxu0 0
  %2266 = vmatprep.subr.bf16.mxu0 0
  %2267 = vmatpush2.bf16.msra.mxu0 0
  %2268 = vmatprep.subr.bf16.mxu0 0
  %2269 = vmatpush2.bf16.msra.mxu0 0
  %2270 = vmatprep.subr.bf16.mxu0 0
  %2271 = vmatpush2.bf16.msra.mxu0 0
  %2272 = vmatprep.mubr.bf16.mxu0 0
  %2273 = vmatmul.mubr.bf16.gmra.mxu0 %v2235
  %v2274 = vpop.f32.mrf.mxu0
  %v2275 = vadd.f32 0.0, %v2274
  %v2276 = vpop.f32.mrf.mxu0
  %v2277 = vpop.f32.mrf.mxu0
  %v2278 = vpop.f32.mrf.mxu0
  %2279 = vdwg.mxu0
  %2280 = vrot.lane.b32.xlu0 %v1455, 64
  %v2281 = vpop.permute.xlu0 %2280
  %v2283 = vsel %vm180, %v1943, 0
  %v2286 = vsel %vm671, %v2281, 0
  %2288 = vmatprep.subr.bf16.mxu0 0
  %2289 = vmatpush1.bf16.msra.mxu0 0
  %2290 = vmatprep.subr.bf16.mxu0 0
  %2291 = vmatpush1.bf16.msra.mxu0 0
  %2292 = vmatprep.subr.bf16.mxu0 0
  %2293 = vmatpush1.bf16.msra.mxu0 0
  %2294 = vmatprep.subr.bf16.mxu0 0
  %2295 = vmatpush1.bf16.msra.mxu0 0
  %2296 = vmatprep.subr.bf16.mxu0 0
  %2297 = vmatpush1.bf16.msra.mxu0 0
  %2298 = vmatprep.subr.bf16.mxu0 0
  %2299 = vmatpush1.bf16.msra.mxu0 0
  %2300 = vmatprep.subr.bf16.mxu0 0
  %2301 = vmatpush1.bf16.msra.mxu0 0
  %2302 = vmatprep.subr.bf16.mxu0 0
  %2303 = vmatpush1.bf16.msra.mxu0 %v2286
  %2304 = vmatprep.subr.bf16.mxu0 0
  %2305 = vmatpush2.bf16.msra.mxu0 0
  %2306 = vmatprep.subr.bf16.mxu0 0
  %2307 = vmatpush2.bf16.msra.mxu0 0
  %2308 = vmatprep.subr.bf16.mxu0 0
  %2309 = vmatpush2.bf16.msra.mxu0 0
  %2310 = vmatprep.subr.bf16.mxu0 0
  %2311 = vmatpush2.bf16.msra.mxu0 0
  %2312 = vmatprep.subr.bf16.mxu0 0
  %2313 = vmatpush2.bf16.msra.mxu0 0
  %2314 = vmatprep.subr.bf16.mxu0 0
  %2315 = vmatpush2.bf16.msra.mxu0 0
  %2316 = vmatprep.subr.bf16.mxu0 0
  %2317 = vmatpush2.bf16.msra.mxu0 0
  %2318 = vmatprep.subr.bf16.mxu0 0
  %2319 = vmatpush2.bf16.msra.mxu0 0
  %2320 = vmatprep.mubr.bf16.mxu0 0
  %2321 = vmatmul.mubr.bf16.gmra.mxu0 %v2283
  %v2322 = vpop.f32.mrf.mxu0
  %v2323 = vadd.f32 0.0, %v2322
  %v2324 = vpop.f32.mrf.mxu0
  %v2325 = vpop.f32.mrf.mxu0
  %v2326 = vpop.f32.mrf.mxu0
  %2327 = vdwg.mxu0
  %2329 = vrot.lane.b32.xlu0 %v2035, 8
  %v2330 = vpop.permute.xlu0 %2329
  %2333 = vrot.lane.b32.xlu0 %v2083, 16
  %v2334 = vpop.permute.xlu0 %2333
  %2337 = vrot.lane.b32.xlu0 %v2131, 24
  %v2338 = vpop.permute.xlu0 %2337
  %v2340 = vsel %vm180, %v1987, %v2330
  %v2341 = vsel %vm1064, %v2340, %v2334
  %v2342 = vsel %vm1066, %v2341, %v2338
  %2344 = vrot.lane.b32.xlu0 %v2227, 8
  %v2345 = vpop.permute.xlu0 %2344
  %2348 = vrot.lane.b32.xlu0 %v2275, 16
  %v2349 = vpop.permute.xlu0 %2348
  %2352 = vrot.lane.b32.xlu0 %v2323, 24
  %v2353 = vpop.permute.xlu0 %2352
  %v2355 = vsel %vm180, %v2179, %v2345
  %v2356 = vsel %vm1064, %v2355, %v2349
  %v2357 = vsel %vm1066, %v2356, %v2353
  %v2358 = vpack.c.bf16 %v2357, %v2342
  %s2359 = scalar_lea.vmem %s4, 16
  %v2360 = vld [vmem:[%s2359] sm:$0xf]
  %v2361 = vld [vmem:[%s2359 + $0x4] sm:$0xf]
  %v2362 = vld [vmem:[%s2359 + $0x8] sm:$0xf]
  %v2363 = vld [vmem:[%s2359 + $0xc] sm:$0xf]
  %v2368 = vunpack.c.l.b16 %v2360
  %v2369 = vunpack.c.l.b16 %v2361
  %v2370 = vunpack.c.l.b16 %v2362
  %v2371 = vunpack.c.l.b16 %v2363
  %v2372 = vpack.c.b16 %v2369, %v2368
  %v2373 = vpack.c.b16 %v2371, %v2370
  %v2377 = vsel %vm64, %v2358, 0
  %2379 = vmatprep.subr.bf16.mxu0 0
  %2380 = vmatpush1.bf16.msra.mxu0 0
  %2381 = vmatprep.subr.bf16.mxu0 0
  %2382 = vmatpush1.bf16.msra.mxu0 0
  %2383 = vmatprep.subr.bf16.mxu0 0
  %2384 = vmatpush1.bf16.msra.mxu0 0
  %2385 = vmatprep.subr.bf16.mxu0 0
  %2386 = vmatpush1.bf16.msra.mxu0 0
  %2387 = vmatprep.subr.bf16.mxu0 0
  %2388 = vmatpush1.bf16.msra.mxu0 0
  %2389 = vmatprep.subr.bf16.mxu0 0
  %2390 = vmatpush1.bf16.msra.mxu0 0
  %2391 = vmatprep.subr.bf16.mxu0 0
  %2392 = vmatpush1.bf16.msra.mxu0 %v2373
  %2393 = vmatprep.subr.bf16.mxu0 0
  %2394 = vmatpush1.bf16.msra.mxu0 %v2372
  %2395 = vmatprep.subr.bf16.mxu0 0
  %2396 = vmatpush2.bf16.msra.mxu0 0
  %2397 = vmatprep.subr.bf16.mxu0 0
  %2398 = vmatpush2.bf16.msra.mxu0 0
  %2399 = vmatprep.subr.bf16.mxu0 0
  %2400 = vmatpush2.bf16.msra.mxu0 0
  %2401 = vmatprep.subr.bf16.mxu0 0
  %2402 = vmatpush2.bf16.msra.mxu0 0
  %2403 = vmatprep.subr.bf16.mxu0 0
  %2404 = vmatpush2.bf16.msra.mxu0 0
  %2405 = vmatprep.subr.bf16.mxu0 0
  %2406 = vmatpush2.bf16.msra.mxu0 0
  %2407 = vmatprep.subr.bf16.mxu0 0
  %2408 = vmatpush2.bf16.msra.mxu0 0
  %2409 = vmatprep.subr.bf16.mxu0 0
  %2410 = vmatpush2.bf16.msra.mxu0 0
  %2411 = vmatprep.mubr.bf16.mxu0 0
  %2412 = vmatmul.mubr.bf16.gmra.mxu0 %v2377
  %v2413 = vpop.f32.mrf.mxu0
  %v2414 = vadd.f32 0.0, %v2413
  %v2415 = vpop.f32.mrf.mxu0
  %v2416 = vpop.f32.mrf.mxu0
  %v2417 = vadd.f32 0.0, %v2416
  %v2418 = vpop.f32.mrf.mxu0
  %2419 = vdwg.mxu0
  %v2420 = vadd.f32 %v1338, %v2414
  %v2421 = vadd.f32 %v1339, %v2417
  %s2422 = scalar_lea.vmem %s5, 1
  %v2423 = vld [vmem:[%s2422] sm:$0x1]
  %v2424 = vmul.f32 %v2420, %v2420
  %v2425 = vmul.f32 %v2421, %v2421
  %v2426 = vsel %vm64, %v2424, 0.0
  %2427 = vadd.xlane.f32.xlu0 %v2426
  %v2428 = vpop.xlane.xlu0 %2427
  %v2429 = vsel %vm64, %v2425, 0.0
  %2430 = vadd.xlane.f32.xlu0 %v2429
  %v2431 = vpop.xlane.xlu0 %2430
  %v2432 = vmul.f32 %v2428, %v71
  %v2433 = vmul.f32 %v2431, %v71
  %v2434 = vadd.f32 %v2432, 1e-06
  %v2435 = vadd.f32 %v2433, 1e-06
  %v2436 = vrsqrt.pop %v2434
  %v2437 = vrsqrt.pop %v2435
  %v2438 = vmul.f32 %v2420, %v2436
  %v2439 = vmul.f32 %v2421, %v2437
  %v2441 = vlaneseq
  %v2442 = vshrl.u32 %v2441, 7
  %v2443 = vsub.s32 0, %v2442
  %v2444 = vrot.slane %v2423, %v2443
  %v2446 = vmul.f32 %v2438, %v2444
  %v2447 = vmul.f32 %v2439, %v2444
  %v2448 = vpack.c.bf16 %v2447, %v2446
  %s2449 = scalar_lea.vmem %s6, 16
  %v2450 = vld [vmem:[%s2449] sm:$0xf]
  %v2451 = vld [vmem:[%s2449 + $0x4] sm:$0xf]
  %v2452 = vld [vmem:[%s2449 + $0x8] sm:$0xf]
  %v2453 = vld [vmem:[%s2449 + $0xc] sm:$0xf]
  %v2458 = vunpack.c.l.b16 %v2450
  %v2459 = vunpack.c.l.b16 %v2451
  %v2460 = vunpack.c.l.b16 %v2452
  %v2461 = vunpack.c.l.b16 %v2453
  %v2462 = vpack.c.b16 %v2459, %v2458
  %v2463 = vpack.c.b16 %v2461, %v2460
  %v2467 = vsel %vm64, %v2448, 0
  %2469 = vmatprep.subr.bf16.mxu0 0
  %2470 = vmatpush1.bf16.msra.mxu0 0
  %2471 = vmatprep.subr.bf16.mxu0 0
  %2472 = vmatpush1.bf16.msra.mxu0 0
  %2473 = vmatprep.subr.bf16.mxu0 0
  %2474 = vmatpush1.bf16.msra.mxu0 0
  %2475 = vmatprep.subr.bf16.mxu0 0
  %2476 = vmatpush1.bf16.msra.mxu0 0
  %2477 = vmatprep.subr.bf16.mxu0 0
  %2478 = vmatpush1.bf16.msra.mxu0 0
  %2479 = vmatprep.subr.bf16.mxu0 0
  %2480 = vmatpush1.bf16.msra.mxu0 0
  %2481 = vmatprep.subr.bf16.mxu0 0
  %2482 = vmatpush1.bf16.msra.mxu0 %v2463
  %2483 = vmatprep.subr.bf16.mxu0 0
  %2484 = vmatpush1.bf16.msra.mxu0 %v2462
  %2485 = vmatprep.subr.bf16.mxu0 0
  %2486 = vmatpush2.bf16.msra.mxu0 0
  %2487 = vmatprep.subr.bf16.mxu0 0
  %2488 = vmatpush2.bf16.msra.mxu0 0
  %2489 = vmatprep.subr.bf16.mxu0 0
  %2490 = vmatpush2.bf16.msra.mxu0 0
  %2491 = vmatprep.subr.bf16.mxu0 0
  %2492 = vmatpush2.bf16.msra.mxu0 0
  %2493 = vmatprep.subr.bf16.mxu0 0
  %2494 = vmatpush2.bf16.msra.mxu0 0
  %2495 = vmatprep.subr.bf16.mxu0 0
  %2496 = vmatpush2.bf16.msra.mxu0 0
  %2497 = vmatprep.subr.bf16.mxu0 0
  %2498 = vmatpush2.bf16.msra.mxu0 0
  %2499 = vmatprep.subr.bf16.mxu0 0
  %2500 = vmatpush2.bf16.msra.mxu0 0
  %2501 = vmatprep.mubr.bf16.mxu0 0
  %2502 = vmatmul.mubr.bf16.gmra.mxu0 %v2467
  %v2503 = vpop.f32.mrf.mxu0
  %v2504 = vadd.f32 0.0, %v2503
  %v2505 = vpop.f32.mrf.mxu0
  %v2506 = vpop.f32.mrf.mxu0
  %v2507 = vadd.f32 0.0, %v2506
  %v2508 = vpop.f32.mrf.mxu0
  %2509 = vdwg.mxu0
  %v2510 = vmul.f32 %v2504, %v2504
  %v2511 = vmul.f32 %v2507, %v2507
  %v2512 = vmul.f32 %v2504, %v2510
  %v2513 = vmul.f32 %v2507, %v2511
  %v2514 = vmul.f32 %v2512, 0.044715
  %v2515 = vmul.f32 %v2513, 0.044715
  %v2516 = vadd.f32 %v2504, %v2514
  %v2517 = vadd.f32 %v2507, %v2515
  %v2518 = vmul.f32 %v2516, 0.7978846
  %v2519 = vmul.f32 %v2517, 0.7978846
  %v2520 = vtanh.pop %v2518
  %v2521 = vtanh.pop %v2519
  %v2522 = vadd.f32 %v2520, 1.0
  %v2523 = vadd.f32 %v2521, 1.0
  %v2524 = vmul.f32 %v2522, 0.5
  %v2525 = vmul.f32 %v2523, 0.5
  %v2526 = vmul.f32 %v2504, %v2524
  %v2527 = vmul.f32 %v2507, %v2525
  %2530 = vrot.lane.b32.xlu0 %v2504, 64
  %v2531 = vpop.permute.xlu0 %2530
  %2532 = vrot.lane.b32.xlu0 %v2507, 64
  %v2533 = vpop.permute.xlu0 %2532
  %v2536 = vmul.f32 %v2526, %v2531
  %v2537 = vmul.f32 %v2527, %v2533
  %v2538 = vpack.c.bf16 %v2537, %v2536
  %s2539 = scalar_lea.vmem %s7, 32
  %v2540 = vld [vmem:[%s2539] sm:$0xf]
  %v2541 = vld [vmem:[%s2539 + $0x4] sm:$0xf]
  %v2542 = vld [vmem:[%s2539 + $0x8] sm:$0xf]
  %v2543 = vld [vmem:[%s2539 + $0xc] sm:$0xf]
  %v2544 = vld [vmem:[%s2539 + $0x10] sm:$0xf]
  %v2545 = vld [vmem:[%s2539 + $0x14] sm:$0xf]
  %v2546 = vld [vmem:[%s2539 + $0x18] sm:$0xf]
  %v2547 = vld [vmem:[%s2539 + $0x1c] sm:$0xf]
  %v2556 = vunpack.c.l.b16 %v2540
  %v2557 = vunpack.c.l.b16 %v2541
  %v2558 = vunpack.c.l.b16 %v2542
  %v2559 = vunpack.c.l.b16 %v2543
  %v2560 = vunpack.c.l.b16 %v2544
  %v2561 = vunpack.c.l.b16 %v2545
  %v2562 = vunpack.c.l.b16 %v2546
  %v2563 = vunpack.c.l.b16 %v2547
  %v2564 = vpack.c.b16 %v2557, %v2556
  %v2565 = vpack.c.b16 %v2559, %v2558
  %v2566 = vpack.c.b16 %v2561, %v2560
  %v2567 = vpack.c.b16 %v2563, %v2562
  %v2573 = vsel %vm1293, %v2538, 0
  %2575 = vmatprep.subr.bf16.mxu0 0
  %2576 = vmatpush1.bf16.msra.mxu0 0
  %2577 = vmatprep.subr.bf16.mxu0 0
  %2578 = vmatpush1.bf16.msra.mxu0 0
  %2579 = vmatprep.subr.bf16.mxu0 0
  %2580 = vmatpush1.bf16.msra.mxu0 0
  %2581 = vmatprep.subr.bf16.mxu0 0
  %2582 = vmatpush1.bf16.msra.mxu0 0
  %2583 = vmatprep.subr.bf16.mxu0 0
  %2584 = vmatpush1.bf16.msra.mxu0 %v2567
  %2585 = vmatprep.subr.bf16.mxu0 0
  %2586 = vmatpush1.bf16.msra.mxu0 %v2566
  %2587 = vmatprep.subr.bf16.mxu0 0
  %2588 = vmatpush1.bf16.msra.mxu0 %v2565
  %2589 = vmatprep.subr.bf16.mxu0 0
  %2590 = vmatpush1.bf16.msra.mxu0 %v2564
  %2591 = vmatprep.subr.bf16.mxu0 0
  %2592 = vmatpush2.bf16.msra.mxu0 0
  %2593 = vmatprep.subr.bf16.mxu0 0
  %2594 = vmatpush2.bf16.msra.mxu0 0
  %2595 = vmatprep.subr.bf16.mxu0 0
  %2596 = vmatpush2.bf16.msra.mxu0 0
  %2597 = vmatprep.subr.bf16.mxu0 0
  %2598 = vmatpush2.bf16.msra.mxu0 0
  %2599 = vmatprep.subr.bf16.mxu0 0
  %2600 = vmatpush2.bf16.msra.mxu0 0
  %2601 = vmatprep.subr.bf16.mxu0 0
  %2602 = vmatpush2.bf16.msra.mxu0 0
  %2603 = vmatprep.subr.bf16.mxu0 0
  %2604 = vmatpush2.bf16.msra.mxu0 0
  %2605 = vmatprep.subr.bf16.mxu0 0
  %2606 = vmatpush2.bf16.msra.mxu0 0
  %2607 = vmatprep.mubr.bf16.mxu0 0
  %2608 = vmatmul.mubr.bf16.gmra.mxu0 %v2573
  %v2609 = vpop.f32.mrf.mxu0
  %v2610 = vadd.f32 0.0, %v2609
  %v2611 = vpop.f32.mrf.mxu0
  %v2612 = vpop.f32.mrf.mxu0
  %v2613 = vadd.f32 0.0, %v2612
  %v2614 = vpop.f32.mrf.mxu0
  %2615 = vdwg.mxu0
  %v2616 = vadd.f32 %v2420, %v2610
  %v2617 = vadd.f32 %v2421, %v2613
  %v2618 = vld [vmem:[%s8] sm:$0x1]
  %v2619 = vmul.f32 %v2616, %v2616
  %v2620 = vmul.f32 %v2617, %v2617
  %v2621 = vsel %vm64, %v2619, 0.0
  %2622 = vadd.xlane.f32.xlu0 %v2621
  %v2623 = vpop.xlane.xlu0 %2622
  %v2624 = vsel %vm64, %v2620, 0.0
  %2625 = vadd.xlane.f32.xlu0 %v2624
  %v2626 = vpop.xlane.xlu0 %2625
  %v2627 = vmul.f32 %v2623, %v71
  %v2628 = vmul.f32 %v2626, %v71
  %v2629 = vadd.f32 %v2627, 1e-06
  %v2630 = vadd.f32 %v2628, 1e-06
  %v2631 = vrsqrt.pop %v2629
  %v2632 = vrsqrt.pop %v2630
  %v2633 = vmul.f32 %v2616, %v2631
  %v2634 = vmul.f32 %v2617, %v2632
  %v2636 = vlaneseq
  %v2637 = vshrl.u32 %v2636, 7
  %v2638 = vsub.s32 0, %v2637
  %v2639 = vrot.slane %v2618, %v2638
  %v2641 = vmul.f32 %v2633, %v2639
  %v2642 = vmul.f32 %v2634, %v2639
  %v2643 = vsel %vm64, %v2641, 0.0
  %v2644 = vrot.slane %v2643, 4
  %v2645 = vadd.f32 %v2643, %v2644
  %v2646 = vrot.slane %v2645, 2
  %v2647 = vadd.f32 %v2645, %v2646
  %v2648 = vrot.slane %v2647, 1
  %v2649 = vadd.f32 %v2647, %v2648
  %v2650 = vsel %vm64, %v2642, 0.0
  %v2651 = vrot.slane %v2650, 4
  %v2652 = vadd.f32 %v2650, %v2651
  %v2653 = vrot.slane %v2652, 2
  %v2654 = vadd.f32 %v2652, %v2653
  %v2655 = vrot.slane %v2654, 1
  %v2656 = vadd.f32 %v2654, %v2655
  %vm2657 = vcmask 1040384
  %v2658 = vsel %vm2657, %v2649, %v2656
  %v2659 = vld [vmem:[%s9] sm:$0xff]
  %v2660 = vld [vmem:[%s9 + $0x8] sm:$0xff]
  %v2661 = vld [vmem:[%s9 + $0x10] sm:$0xff]
  %v2662 = vld [vmem:[%s9 + $0x18] sm:$0xff]
  %v2663 = vld [vmem:[%s10] sm:$0x1]
  %v2665 = vlaneseq
  %v2666 = vshrl.u32 %v2665, 7
  %v2667 = vsub.s32 0, %v2666
  %v2668 = vrot.slane %v2663, %v2667
  %v2671 = vsel %vm64, %v2658, 0
  %2673 = vmatprep.subr.mxu0 0.0
  %2674 = vmatpush1.msra.mxu0 0.0
  %2675 = vmatprep.subr.mxu0 0.0
  %2676 = vmatpush1.msra.mxu0 0.0
  %2677 = vmatprep.subr.mxu0 0.0
  %2678 = vmatpush1.msra.mxu0 0.0
  %2679 = vmatprep.subr.mxu0 0.0
  %2680 = vmatpush1.msra.mxu0 0.0
  %2681 = vmatprep.subr.mxu0 0.0
  %2682 = vmatpush1.msra.mxu0 0.0
  %2683 = vmatprep.subr.mxu0 0.0
  %2684 = vmatpush1.msra.mxu0 0.0
  %2685 = vmatprep.subr.mxu0 0.0
  %2686 = vmatpush1.msra.mxu0 0.0
  %2687 = vmatprep.subr.mxu0 0.0
  %2688 = vmatpush1.msra.mxu0 0.0
  %2689 = vmatprep.subr.mxu0 0.0
  %2690 = vmatpush1.msra.mxu0 0.0
  %2691 = vmatprep.subr.mxu0 0.0
  %2692 = vmatpush1.msra.mxu0 0.0
  %2693 = vmatprep.subr.mxu0 0.0
  %2694 = vmatpush1.msra.mxu0 0.0
  %2695 = vmatprep.subr.mxu0 0.0
  %2696 = vmatpush1.msra.mxu0 0.0
  %2697 = vmatprep.subr.mxu0 0.0
  %2698 = vmatpush1.msra.mxu0 %v2662
  %2699 = vmatprep.subr.mxu0 0.0
  %2700 = vmatpush1.msra.mxu0 %v2661
  %2701 = vmatprep.subr.mxu0 0.0
  %2702 = vmatpush1.msra.mxu0 %v2660
  %2703 = vmatprep.subr.mxu0 0.0
  %2704 = vmatpush1.msra.mxu0 %v2659
  %2705 = vmatprep.subr.mxu0 0.0
  %2706 = vmatpush2.msra.mxu0 0.0
  %2707 = vmatprep.subr.mxu0 0.0
  %2708 = vmatpush2.msra.mxu0 0.0
  %2709 = vmatprep.subr.mxu0 0.0
  %2710 = vmatpush2.msra.mxu0 0.0
  %2711 = vmatprep.subr.mxu0 0.0
  %2712 = vmatpush2.msra.mxu0 0.0
  %2713 = vmatprep.subr.mxu0 0.0
  %2714 = vmatpush2.msra.mxu0 0.0
  %2715 = vmatprep.subr.mxu0 0.0
  %2716 = vmatpush2.msra.mxu0 0.0
  %2717 = vmatprep.subr.mxu0 0.0
  %2718 = vmatpush2.msra.mxu0 0.0
  %2719 = vmatprep.subr.mxu0 0.0
  %2720 = vmatpush2.msra.mxu0 0.0
  %2721 = vmatprep.subr.mxu0 0.0
  %2722 = vmatpush2.msra.mxu0 0.0
  %2723 = vmatprep.subr.mxu0 0.0
  %2724 = vmatpush2.msra.mxu0 0.0
  %2725 = vmatprep.subr.mxu0 0.0
  %2726 = vmatpush2.msra.mxu0 0.0
  %2727 = vmatprep.subr.mxu0 0.0
  %2728 = vmatpush2.msra.mxu0 0.0
  %2729 = vmatprep.subr.mxu0 0.0
  %2730 = vmatpush2.msra.mxu0 0.0
  %2731 = vmatprep.subr.mxu0 0.0
  %2732 = vmatpush2.msra.mxu0 0.0
  %2733 = vmatprep.subr.mxu0 0.0
  %2734 = vmatpush2.msra.mxu0 0.0
  %2735 = vmatprep.subr.mxu0 0.0
  %2736 = vmatpush2.msra.mxu0 0.0
  %2737 = vmatprep.mubr.f32.mxu0 0.0
  %2738 = vmatmul.mubr.f32.gmra.mxu0 %v2671
  %v2739 = vpop.f32.mrf.mxu0
  %v2740 = vadd.f32 %v2668, %v2739
  %v2741 = vpop.f32.mrf.mxu0
  %2742 = vdwg.mxu0
  %v2743 = vmax.f32 %v2740, 0.0
  %v2744 = vld [vmem:[%s11] sm:$0xff]
  %v2745 = vld [vmem:[%s11 + $0x8] sm:$0xff]
  %v2746 = vld [vmem:[%s11 + $0x10] sm:$0xff]
  %v2747 = vld [vmem:[%s11 + $0x18] sm:$0xff]
  %v2748 = vld [vmem:[%s11 + $0x20] sm:$0xff]
  %v2749 = vld [vmem:[%s11 + $0x28] sm:$0xff]
  %v2750 = vld [vmem:[%s11 + $0x30] sm:$0xff]
  %v2751 = vld [vmem:[%s11 + $0x38] sm:$0xff]
  %v2752 = vld [vmem:[%s12] sm:$0x1]
  %v2754 = vlaneseq
  %v2755 = vshrl.u32 %v2754, 7
  %v2756 = vsub.s32 0, %v2755
  %v2757 = vrot.slane %v2752, %v2756
  %v2760 = vsel %vm1293, %v2743, 0
  %2762 = vmatprep.subr.mxu0 0.0
  %2763 = vmatpush1.msra.mxu0 0.0
  %2764 = vmatprep.subr.mxu0 0.0
  %2765 = vmatpush1.msra.mxu0 0.0
  %2766 = vmatprep.subr.mxu0 0.0
  %2767 = vmatpush1.msra.mxu0 0.0
  %2768 = vmatprep.subr.mxu0 0.0
  %2769 = vmatpush1.msra.mxu0 0.0
  %2770 = vmatprep.subr.mxu0 0.0
  %2771 = vmatpush1.msra.mxu0 0.0
  %2772 = vmatprep.subr.mxu0 0.0
  %2773 = vmatpush1.msra.mxu0 0.0
  %2774 = vmatprep.subr.mxu0 0.0
  %2775 = vmatpush1.msra.mxu0 0.0
  %2776 = vmatprep.subr.mxu0 0.0
  %2777 = vmatpush1.msra.mxu0 0.0
  %2778 = vmatprep.subr.mxu0 0.0
  %2779 = vmatpush1.msra.mxu0 %v2751
  %2780 = vmatprep.subr.mxu0 0.0
  %2781 = vmatpush1.msra.mxu0 %v2750
  %2782 = vmatprep.subr.mxu0 0.0
  %2783 = vmatpush1.msra.mxu0 %v2749
  %2784 = vmatprep.subr.mxu0 0.0
  %2785 = vmatpush1.msra.mxu0 %v2748
  %2786 = vmatprep.subr.mxu0 0.0
  %2787 = vmatpush1.msra.mxu0 %v2747
  %2788 = vmatprep.subr.mxu0 0.0
  %2789 = vmatpush1.msra.mxu0 %v2746
  %2790 = vmatprep.subr.mxu0 0.0
  %2791 = vmatpush1.msra.mxu0 %v2745
  %2792 = vmatprep.subr.mxu0 0.0
  %2793 = vmatpush1.msra.mxu0 %v2744
  %2794 = vmatprep.subr.mxu0 0.0
  %2795 = vmatpush2.msra.mxu0 0.0
  %2796 = vmatprep.subr.mxu0 0.0
  %2797 = vmatpush2.msra.mxu0 0.0
  %2798 = vmatprep.subr.mxu0 0.0
  %2799 = vmatpush2.msra.mxu0 0.0
  %2800 = vmatprep.subr.mxu0 0.0
  %2801 = vmatpush2.msra.mxu0 0.0
  %2802 = vmatprep.subr.mxu0 0.0
  %2803 = vmatpush2.msra.mxu0 0.0
  %2804 = vmatprep.subr.mxu0 0.0
  %2805 = vmatpush2.msra.mxu0 0.0
  %2806 = vmatprep.subr.mxu0 0.0
  %2807 = vmatpush2.msra.mxu0 0.0
  %2808 = vmatprep.subr.mxu0 0.0
  %2809 = vmatpush2.msra.mxu0 0.0
  %2810 = vmatprep.subr.mxu0 0.0
  %2811 = vmatpush2.msra.mxu0 0.0
  %2812 = vmatprep.subr.mxu0 0.0
  %2813 = vmatpush2.msra.mxu0 0.0
  %2814 = vmatprep.subr.mxu0 0.0
  %2815 = vmatpush2.msra.mxu0 0.0
  %2816 = vmatprep.subr.mxu0 0.0
  %2817 = vmatpush2.msra.mxu0 0.0
  %2818 = vmatprep.subr.mxu0 0.0
  %2819 = vmatpush2.msra.mxu0 0.0
  %2820 = vmatprep.subr.mxu0 0.0
  %2821 = vmatpush2.msra.mxu0 0.0
  %2822 = vmatprep.subr.mxu0 0.0
  %2823 = vmatpush2.msra.mxu0 0.0
  %2824 = vmatprep.subr.mxu0 0.0
  %2825 = vmatpush2.msra.mxu0 0.0
  %2826 = vmatprep.mubr.f32.mxu0 0.0
  %2827 = vmatmul.mubr.f32.gmra.mxu0 %v2760
  %v2828 = vpop.f32.mrf.mxu0
  %v2829 = vadd.f32 %v2757, %v2828
  %v2830 = vpop.f32.mrf.mxu0
  %2831 = vdwg.mxu0
  %v2832 = vmax.f32 %v2829, 0.0
  %v2833 = vld [vmem:[%s13] sm:$0xff]
  %v2834 = vld [vmem:[%s13 + $0x8] sm:$0xff]
  %v2835 = vld [vmem:[%s13 + $0x10] sm:$0xff]
  %v2836 = vld [vmem:[%s13 + $0x18] sm:$0xff]
  %v2837 = vld [vmem:[%s14] sm:$0x1]
  %v2839 = vlaneseq
  %v2840 = vshrl.u32 %v2839, 7
  %v2841 = vsub.s32 0, %v2840
  %v2842 = vrot.slane %v2837, %v2841
  %v2845 = vsel %vm64, %v2832, 0
  %2847 = vmatprep.subr.mxu0 0.0
  %2848 = vmatpush1.msra.mxu0 0.0
  %2849 = vmatprep.subr.mxu0 0.0
  %2850 = vmatpush1.msra.mxu0 0.0
  %2851 = vmatprep.subr.mxu0 0.0
  %2852 = vmatpush1.msra.mxu0 0.0
  %2853 = vmatprep.subr.mxu0 0.0
  %2854 = vmatpush1.msra.mxu0 0.0
  %2855 = vmatprep.subr.mxu0 0.0
  %2856 = vmatpush1.msra.mxu0 0.0
  %2857 = vmatprep.subr.mxu0 0.0
  %2858 = vmatpush1.msra.mxu0 0.0
  %2859 = vmatprep.subr.mxu0 0.0
  %2860 = vmatpush1.msra.mxu0 0.0
  %2861 = vmatprep.subr.mxu0 0.0
  %2862 = vmatpush1.msra.mxu0 0.0
  %2863 = vmatprep.subr.mxu0 0.0
  %2864 = vmatpush1.msra.mxu0 0.0
  %2865 = vmatprep.subr.mxu0 0.0
  %2866 = vmatpush1.msra.mxu0 0.0
  %2867 = vmatprep.subr.mxu0 0.0
  %2868 = vmatpush1.msra.mxu0 0.0
  %2869 = vmatprep.subr.mxu0 0.0
  %2870 = vmatpush1.msra.mxu0 0.0
  %2871 = vmatprep.subr.mxu0 0.0
  %2872 = vmatpush1.msra.mxu0 %v2836
  %2873 = vmatprep.subr.mxu0 0.0
  %2874 = vmatpush1.msra.mxu0 %v2835
  %2875 = vmatprep.subr.mxu0 0.0
  %2876 = vmatpush1.msra.mxu0 %v2834
  %2877 = vmatprep.subr.mxu0 0.0
  %2878 = vmatpush1.msra.mxu0 %v2833
  %2879 = vmatprep.subr.mxu0 0.0
  %2880 = vmatpush2.msra.mxu0 0.0
  %2881 = vmatprep.subr.mxu0 0.0
  %2882 = vmatpush2.msra.mxu0 0.0
  %2883 = vmatprep.subr.mxu0 0.0
  %2884 = vmatpush2.msra.mxu0 0.0
  %2885 = vmatprep.subr.mxu0 0.0
  %2886 = vmatpush2.msra.mxu0 0.0
  %2887 = vmatprep.subr.mxu0 0.0
  %2888 = vmatpush2.msra.mxu0 0.0
  %2889 = vmatprep.subr.mxu0 0.0
  %2890 = vmatpush2.msra.mxu0 0.0
  %2891 = vmatprep.subr.mxu0 0.0
  %2892 = vmatpush2.msra.mxu0 0.0
  %2893 = vmatprep.subr.mxu0 0.0
  %2894 = vmatpush2.msra.mxu0 0.0
  %2895 = vmatprep.subr.mxu0 0.0
  %2896 = vmatpush2.msra.mxu0 0.0
  %2897 = vmatprep.subr.mxu0 0.0
  %2898 = vmatpush2.msra.mxu0 0.0
  %2899 = vmatprep.subr.mxu0 0.0
  %2900 = vmatpush2.msra.mxu0 0.0
  %2901 = vmatprep.subr.mxu0 0.0
  %2902 = vmatpush2.msra.mxu0 0.0
  %2903 = vmatprep.subr.mxu0 0.0
  %2904 = vmatpush2.msra.mxu0 0.0
  %2905 = vmatprep.subr.mxu0 0.0
  %2906 = vmatpush2.msra.mxu0 0.0
  %2907 = vmatprep.subr.mxu0 0.0
  %2908 = vmatpush2.msra.mxu0 0.0
  %2909 = vmatprep.subr.mxu0 0.0
  %2910 = vmatpush2.msra.mxu0 0.0
  %2911 = vmatprep.mubr.f32.mxu0 0.0
  %2912 = vmatmul.mubr.f32.gmra.mxu0 %v2845
  %v2913 = vpop.f32.mrf.mxu0
  %v2914 = vadd.f32 %v2842, %v2913
  %v2915 = vpop.f32.mrf.mxu0
  %2916 = vdwg.mxu0
  %v2917 = vxor.u32 %v2914, 2147483648
  %v2918 = vmul.f32 %v2917, 1.442695
  %v2919 = vpow.pop %v2918
  %v2920 = vadd.f32 %v2919, 1.0
  %v2921 = vrcp.pop %v2920
  %v2922 = vmul.f32 1.0, %v2921
  %2923 = vst [vmem:[%s15] sm:$0x3] %v2922
  // Predicated region
  $region62: #{t5_model_forward.1} parent=0 // pred_check
    _
  $region63: #{t5_model_forward.1} parent=0 // pred_check_branch
    %2925 = sbr.rel (0) target = $region65
  $region64: #{t5_model_forward.1} parent=0 // pred_region
    _
  $region65: #{t5_model_forward.1} parent=0 // pred_fallthru
    _
  // Predicated region
  $region66: #{t5_model_forward.1} parent=0 // pred_check
    _
  $region67: #{t5_model_forward.1} parent=0 // pred_check_branch
    %2927 = sbr.rel (0) target = $region69
  $region68: #{t5_model_forward.1} parent=0 // pred_region
    _
  $region69: #{t5_model_forward.1} parent=0 // pred_fallthru
    _

</llo_original>
